<compile_context>
chip_gen: v6e
topology: v6e:2x2x1
jax: 0.10.0
libtpu: 0.0.40
codegen_flags: <defaults>
</compile_context>

<pallas_src>
import functools

import jax
import jax.numpy as jnp
from jax import lax
from jax.experimental import pallas as pl
from jax.experimental.pallas import tpu as pltpu


def _round_up(n, m):
    return (n + m - 1) // m * m


# ---------------------------------------------------------------------------
# Fused kernel: Sinkhorn soft permutation + reparameterized MLP forward
# ---------------------------------------------------------------------------
def _rebasin_fused_kernel(p_ref, w0t_ref, b0_ref, w1t_ref, b1_ref, x_ref,
                          p_out_ref, y_ref, *, l, tau, n_iter, use_reassoc,
                          mxu_dtype):
    f32 = jnp.float32

    # --- Phase 1: Sinkhorn in the log domain (all f32) -----------------------
    log_p = p_ref[...].astype(f32) * (l / tau)

    def _col_norm(lp):   # logsumexp over dim -2, log_b == 0 (unstabilized)
        return lp - jnp.log(jnp.sum(jnp.exp(lp), axis=-2, keepdims=True))

    def _row_norm(lp):   # logsumexp over dim -1, log_a == 0 (unstabilized)
        return lp - jnp.log(jnp.sum(jnp.exp(lp), axis=-1, keepdims=True))

    # First column normalization is stabilized (raw P*l/tau may be large for
    # small tau). After any normalization all entries are <= 0, so exp cannot
    # overflow and the max-shift is dropped (halves XLU/VPU reduction work).
    m0 = jnp.max(log_p, axis=-2, keepdims=True)
    log_p = log_p - (m0 + jnp.log(jnp.sum(jnp.exp(log_p - m0),
                                          axis=-2, keepdims=True)))
    if n_iter >= 2:
        log_p = _row_norm(log_p)                      # finish iteration 0
        n_mid = n_iter - 2
        hidden_dim = log_p.shape[0]
        if hidden_dim <= 512:
            # Tiny P: static unroll gives the LLO scheduler cross-iteration view.
            for _ in range(n_mid):
                log_p = _row_norm(_col_norm(log_p))
        else:
            # Large P: rolled loop bounds vreg live ranges / compile time.
            log_p = lax.fori_loop(
                0, n_mid, lambda _, lp: _row_norm(_col_norm(lp)), log_p,
                unroll=2)
        log_p = _col_norm(log_p)                      # last column pass
    # Final row normalization reusing the exp: P = exp(log_p) / rowsum.
    e = jnp.exp(log_p)
    row_sum = jnp.sum(e, axis=-1, keepdims=True)
    P = e * pl.reciprocal(row_sum, approx=True)

    # Lane-dense P_soft store (padding branch only traced if hidden % 128 != 0).
    h_dim = P.shape[0]
    h_out = p_out_ref.shape[-1]
    if h_out == h_dim:
        p_out_ref[...] = P.astype(p_out_ref.dtype)
    else:
        zpad = jnp.zeros((h_dim, h_out - h_dim), dtype=P.dtype)
        p_out_ref[...] = jnp.concatenate([P, zpad], axis=-1).astype(p_out_ref.dtype)

    # One amortized transpose; both orientations of P are consumed below and
    # every matmul stays a plain contraction (no hidden per-matmul vxpose).
    Pt = P.T

    # --- Phase 2: reparameterized MLP forward (bf16 MXU, f32 accumulate) -----
    md = mxu_dtype
    x = x_ref[...].astype(md)              # (B, d_in)
    w0t = w0t_ref[...].astype(md)          # (d_in, h)       == W0^T
    w1t = w1t_ref[...].astype(md)          # (h, d_out_pad)  == W1^T zero-padded
    b0 = b0_ref[...].astype(f32)           # (1, h)
    b1 = b1_ref[...].astype(f32)           # (1, d_out_pad), zero-padded
    P_m = P.astype(md)
    Pt_m = Pt.astype(md)

    if use_reassoc:
        # (x W0^T + b0) P^T == x W0'^T + b0'   and   (h P) W1^T == h W1'^T
        z0 = jnp.dot(x, w0t, preferred_element_type=f32) + b0              # (B, h)
        act = jnp.maximum(
            jnp.dot(z0.astype(md), Pt_m, preferred_element_type=f32), 0.0)  # (B, h)
        hp = jnp.dot(act.astype(md), P_m, preferred_element_type=f32)       # (B, h)
        y = jnp.dot(hp.astype(md), w1t, preferred_element_type=f32) + b1
    else:
        # Materialize reparameterized weights once, reuse across the batch.
        w0pt = jnp.dot(w0t, Pt_m, preferred_element_type=f32).astype(md)    # W0'^T (d_in, h)
        b0p = jnp.dot(b0.astype(md), Pt_m, preferred_element_type=f32)      # b0'   (1, h)
        w1pt = jnp.dot(P_m, w1t, preferred_element_type=f32).astype(md)     # W1'^T (h, d_out_pad)
        act = jnp.maximum(
            jnp.dot(x, w0pt, preferred_element_type=f32) + b0p, 0.0)        # (B, h)
        y = jnp.dot(act.astype(md), w1pt, preferred_element_type=f32) + b1

    y_ref[...] = y.astype(y_ref.dtype)


def rebasin_forward(P_param, params, x, *, l=1.0, tau=1.0, n_iter=20,
                    mxu_dtype=jnp.bfloat16):
    """Full RebasinNet.forward(x) in training mode: Sinkhorn -> reparam -> m(x).

    Returns (P_soft, y) from a single fused pallas_call (P never leaves VMEM
    between the Sinkhorn phase and the MLP phase).
    """
    w0, b0, w1, b1 = params
    if x.ndim == 1:                                   # x.unsqueeze_(0) semantics
        x = x[None, :]
    hidden = P_param.shape[0]
    batch, d_in = x.shape
    d_out = w1.shape[0]
    d_out_pad = max(_round_up(d_out, 128), 128)
    h_pad = max(_round_up(hidden, 128), 128)

    # Layout plumbing in the wrapper (cheap XLA ops): pre-transposed weights so
    # all in-kernel matmuls are plain contractions, and zero-padded W1/b1 so the
    # y store is a full lane-dense slab.
    w0t = w0.T                                                        # (d_in, h)
    w1t_pad = jnp.zeros((hidden, d_out_pad), w1.dtype).at[:, :d_out].set(w1.T)
    b1_pad = jnp.zeros((1, d_out_pad), b1.dtype).at[0, :d_out].set(b1)

    # Reassociated form costs ~2*B*h^2 MXU FLOPs vs ~h^2*(d_in+d_out) for the
    # materialized-weight form; pick statically by shape.
    use_reassoc = (2 * batch) < (d_in + d_out)

    kernel = functools.partial(
        _rebasin_fused_kernel, l=float(l), tau=float(tau), n_iter=int(n_iter),
        use_reassoc=bool(use_reassoc), mxu_dtype=mxu_dtype)

    # Explicit scoped-VMEM budget: ~6 live h^2 f32/bf16 slabs (log_p, exp temp,
    # P, P^T, bf16 copies) + MLP operands, clamped to the smallest per-TC VMEM.
    est = 6 * h_pad * h_pad * 4 + 4 * batch * (d_in + 3 * hidden + d_out_pad)
    vmem_limit = int(min(64 * 2 ** 20, max(32 * 2 ** 20, est)))

    vmem = pl.BlockSpec(memory_space=pltpu.MemorySpace.VMEM)
    P_pad, y_pad = pl.pallas_call(
        kernel,
        out_shape=(jax.ShapeDtypeStruct((hidden, h_pad), P_param.dtype),
                   jax.ShapeDtypeStruct((batch, d_out_pad), x.dtype)),
        in_specs=[vmem] * 6,
        out_specs=(vmem, vmem),
        compiler_params=pltpu.CompilerParams(vmem_limit_bytes=vmem_limit),
    )(P_param, w0t, b0.reshape(1, -1), w1t_pad, b1_pad, x)

    return P_pad[:, :hidden], y_pad[:, :d_out]


# ---------------------------------------------------------------------------
# Pure-JAX reference (materialized-weight path, f32) for correctness checking
# ---------------------------------------------------------------------------
def _reference(P_param, params, x, *, l=1.0, tau=1.0, n_iter=20):
    w0, b0, w1, b1 = params
    lp = P_param * (l / tau)
    for _ in range(n_iter):
        lp = lp - jax.scipy.special.logsumexp(lp, axis=-2, keepdims=True)
        lp = lp - jax.scipy.special.logsumexp(lp, axis=-1, keepdims=True)
    P = jnp.exp(lp)
    w0p = P @ w0
    b0p = P @ b0
    w1p = w1 @ P.T
    h = jnp.maximum(x @ w0p.T + b0p, 0.0)
    return P, h @ w1p.T + b1


if __name__ == "__main__":
    key = jax.random.PRNGKey(0)
    k1, k2, k3, k4, k5, k6 = jax.random.split(key, 6)

    d_in, hidden, d_out = 16, 128, 8
    n_iter, l, tau = 20, 1.0, 1.0

    # RebasinNet.__init__ : P = eye + 0.1 * randn  (deterministic synthetic init)
    P_param = jnp.eye(hidden, dtype=jnp.float32) + 0.1 * jax.random.normal(
        k1, (hidden, hidden), jnp.float32)
    # Synthetic MLP params (PyTorch Linear convention: (out_features, in_features))
    w0 = 0.1 * jax.random.normal(k2, (hidden, d_in), jnp.float32)
    b0 = 0.1 * jax.random.normal(k3, (hidden,), jnp.float32)
    w1 = 0.1 * jax.random.normal(k4, (d_out, hidden), jnp.float32)
    b1 = 0.1 * jax.random.normal(k5, (d_out,), jnp.float32)
    params = (w0, b0, w1, b1)

    # Small batch -> reassociated MLP path (2*B < d_in + d_out).
    x_small = jax.random.normal(k6, (4, d_in), jnp.float32)
    P_soft, y_small = rebasin_forward(P_param, params, x_small,
                                      l=l, tau=tau, n_iter=n_iter)
    jax.block_until_ready(y_small)

    # Larger batch -> materialized-weight MLP path.
    x_big = jax.random.normal(k6, (32, d_in), jnp.float32)
    P_soft2, y_big = rebasin_forward(P_param, params, x_big,
                                     l=l, tau=tau, n_iter=n_iter)
    jax.block_until_ready(y_big)

    P_ref, y_small_ref = _reference(P_param, params, x_small,
                                    l=l, tau=tau, n_iter=n_iter)
    _, y_big_ref = _reference(P_param, params, x_big,
                              l=l, tau=tau, n_iter=n_iter)

    # Sinkhorn stays f32 (approx reciprocal + dropped max-shift -> tiny drift).
    assert jnp.allclose(P_soft, P_ref, rtol=2e-3, atol=2e-3), "Sinkhorn mismatch"
    assert jnp.allclose(P_soft2, P_ref, rtol=2e-3, atol=2e-3), "Sinkhorn mismatch (2)"
    # bf16 MXU operands with f32 accumulation -> relaxed tolerance for y.
    assert jnp.allclose(y_small, y_small_ref, rtol=3e-2, atol=3e-2), \
        "Forward mismatch (reassociated path)"
    assert jnp.allclose(y_big, y_big_ref, rtol=3e-2, atol=3e-2), \
        "Forward mismatch (materialized path)"

    print("KERNEL_OK")
</pallas_src>

<mosaic_0001>
module attributes {stable_mosaic.version = 11 : i64} {
  func.func @_rebasin_fused_kernel(%arg0: memref<128x128xf32, #tpu.memory_space<vmem>>, %arg1: memref<16x128xf32, #tpu.memory_space<vmem>>, %arg2: memref<1x128xf32, #tpu.memory_space<vmem>>, %arg3: memref<128x128xf32, #tpu.memory_space<vmem>>, %arg4: memref<1x128xf32, #tpu.memory_space<vmem>>, %arg5: memref<4x16xf32, #tpu.memory_space<vmem>>, %arg6: memref<128x128xf32, #tpu.memory_space<vmem>>, %arg7: memref<4x128xf32, #tpu.memory_space<vmem>>) attributes {dimension_semantics = [], scalar_prefetch = 0 : i64, scratch_operands = 0 : i64, tpu.core_type = #tpu.core_type<tc>} {
    %c0 = arith.constant 0 : index
    %c0_0 = arith.constant 0 : index
    %0 = vector.load %arg0[%c0, %c0_0] : memref<128x128xf32, #tpu.memory_space<vmem>>, vector<128x128xf32>
    %cst = arith.constant 1.000000e+00 : f32
    %1 = vector.broadcast %cst : f32 to vector<128x128xf32>
    %2 = arith.mulf %0, %1 : vector<128x128xf32>
    %cst_1 = arith.constant dense<0xFF800000> : vector<128xf32>
    %3 = vector.multi_reduction <maximumf>, %2, %cst_1 [0] : vector<128x128xf32> to vector<128xf32>
    %4 = vector.shape_cast %3 : vector<128xf32> to vector<1x128xf32>
    %5 = vector.broadcast %4 : vector<1x128xf32> to vector<128x128xf32>
    %6 = arith.subf %2, %5 : vector<128x128xf32>
    %7 = math.exp %6 : vector<128x128xf32>
    %cst_2 = arith.constant dense<0.000000e+00> : vector<128xf32>
    %8 = vector.multi_reduction <add>, %7, %cst_2 [0] : vector<128x128xf32> to vector<128xf32>
    %9 = vector.shape_cast %8 : vector<128xf32> to vector<1x128xf32>
    %10 = math.log %9 : vector<1x128xf32>
    %11 = arith.addf %4, %10 : vector<1x128xf32>
    %12 = vector.broadcast %11 : vector<1x128xf32> to vector<128x128xf32>
    %13 = arith.subf %2, %12 : vector<128x128xf32>
    %14 = math.exp %13 : vector<128x128xf32>
    %cst_3 = arith.constant dense<0.000000e+00> : vector<128xf32>
    %15 = vector.multi_reduction <add>, %14, %cst_3 [1] : vector<128x128xf32> to vector<128xf32>
    %16 = vector.shape_cast %15 : vector<128xf32> to vector<128x1xf32>
    %17 = math.log %16 : vector<128x1xf32>
    %18 = vector.broadcast %17 : vector<128x1xf32> to vector<128x128xf32>
    %19 = arith.subf %13, %18 : vector<128x128xf32>
    %20 = math.exp %19 : vector<128x128xf32>
    %cst_4 = arith.constant dense<0.000000e+00> : vector<128xf32>
    %21 = vector.multi_reduction <add>, %20, %cst_4 [0] : vector<128x128xf32> to vector<128xf32>
    %22 = vector.shape_cast %21 : vector<128xf32> to vector<1x128xf32>
    %23 = math.log %22 : vector<1x128xf32>
    %24 = vector.broadcast %23 : vector<1x128xf32> to vector<128x128xf32>
    %25 = arith.subf %19, %24 : vector<128x128xf32>
    %26 = math.exp %25 : vector<128x128xf32>
    %cst_5 = arith.constant dense<0.000000e+00> : vector<128xf32>
    %27 = vector.multi_reduction <add>, %26, %cst_5 [1] : vector<128x128xf32> to vector<128xf32>
    %28 = vector.shape_cast %27 : vector<128xf32> to vector<128x1xf32>
    %29 = math.log %28 : vector<128x1xf32>
    %30 = vector.broadcast %29 : vector<128x1xf32> to vector<128x128xf32>
    %31 = arith.subf %25, %30 : vector<128x128xf32>
    %32 = math.exp %31 : vector<128x128xf32>
    %cst_6 = arith.constant dense<0.000000e+00> : vector<128xf32>
    %33 = vector.multi_reduction <add>, %32, %cst_6 [0] : vector<128x128xf32> to vector<128xf32>
    %34 = vector.shape_cast %33 : vector<128xf32> to vector<1x128xf32>
    %35 = math.log %34 : vector<1x128xf32>
    %36 = vector.broadcast %35 : vector<1x128xf32> to vector<128x128xf32>
    %37 = arith.subf %31, %36 : vector<128x128xf32>
    %38 = math.exp %37 : vector<128x128xf32>
    %cst_7 = arith.constant dense<0.000000e+00> : vector<128xf32>
    %39 = vector.multi_reduction <add>, %38, %cst_7 [1] : vector<128x128xf32> to vector<128xf32>
    %40 = vector.shape_cast %39 : vector<128xf32> to vector<128x1xf32>
    %41 = math.log %40 : vector<128x1xf32>
    %42 = vector.broadcast %41 : vector<128x1xf32> to vector<128x128xf32>
    %43 = arith.subf %37, %42 : vector<128x128xf32>
    %44 = math.exp %43 : vector<128x128xf32>
    %cst_8 = arith.constant dense<0.000000e+00> : vector<128xf32>
    %45 = vector.multi_reduction <add>, %44, %cst_8 [0] : vector<128x128xf32> to vector<128xf32>
    %46 = vector.shape_cast %45 : vector<128xf32> to vector<1x128xf32>
    %47 = math.log %46 : vector<1x128xf32>
    %48 = vector.broadcast %47 : vector<1x128xf32> to vector<128x128xf32>
    %49 = arith.subf %43, %48 : vector<128x128xf32>
    %50 = math.exp %49 : vector<128x128xf32>
    %cst_9 = arith.constant dense<0.000000e+00> : vector<128xf32>
    %51 = vector.multi_reduction <add>, %50, %cst_9 [1] : vector<128x128xf32> to vector<128xf32>
    %52 = vector.shape_cast %51 : vector<128xf32> to vector<128x1xf32>
    %53 = math.log %52 : vector<128x1xf32>
    %54 = vector.broadcast %53 : vector<128x1xf32> to vector<128x128xf32>
    %55 = arith.subf %49, %54 : vector<128x128xf32>
    %56 = math.exp %55 : vector<128x128xf32>
    %cst_10 = arith.constant dense<0.000000e+00> : vector<128xf32>
    %57 = vector.multi_reduction <add>, %56, %cst_10 [0] : vector<128x128xf32> to vector<128xf32>
    %58 = vector.shape_cast %57 : vector<128xf32> to vector<1x128xf32>
    %59 = math.log %58 : vector<1x128xf32>
    %60 = vector.broadcast %59 : vector<1x128xf32> to vector<128x128xf32>
    %61 = arith.subf %55, %60 : vector<128x128xf32>
    %62 = math.exp %61 : vector<128x128xf32>
    %cst_11 = arith.constant dense<0.000000e+00> : vector<128xf32>
    %63 = vector.multi_reduction <add>, %62, %cst_11 [1] : vector<128x128xf32> to vector<128xf32>
    %64 = vector.shape_cast %63 : vector<128xf32> to vector<128x1xf32>
    %65 = math.log %64 : vector<128x1xf32>
    %66 = vector.broadcast %65 : vector<128x1xf32> to vector<128x128xf32>
    %67 = arith.subf %61, %66 : vector<128x128xf32>
    %68 = math.exp %67 : vector<128x128xf32>
    %cst_12 = arith.constant dense<0.000000e+00> : vector<128xf32>
    %69 = vector.multi_reduction <add>, %68, %cst_12 [0] : vector<128x128xf32> to vector<128xf32>
    %70 = vector.shape_cast %69 : vector<128xf32> to vector<1x128xf32>
    %71 = math.log %70 : vector<1x128xf32>
    %72 = vector.broadcast %71 : vector<1x128xf32> to vector<128x128xf32>
    %73 = arith.subf %67, %72 : vector<128x128xf32>
    %74 = math.exp %73 : vector<128x128xf32>
    %cst_13 = arith.constant dense<0.000000e+00> : vector<128xf32>
    %75 = vector.multi_reduction <add>, %74, %cst_13 [1] : vector<128x128xf32> to vector<128xf32>
    %76 = vector.shape_cast %75 : vector<128xf32> to vector<128x1xf32>
    %77 = math.log %76 : vector<128x1xf32>
    %78 = vector.broadcast %77 : vector<128x1xf32> to vector<128x128xf32>
    %79 = arith.subf %73, %78 : vector<128x128xf32>
    %80 = math.exp %79 : vector<128x128xf32>
    %cst_14 = arith.constant dense<0.000000e+00> : vector<128xf32>
    %81 = vector.multi_reduction <add>, %80, %cst_14 [0] : vector<128x128xf32> to vector<128xf32>
    %82 = vector.shape_cast %81 : vector<128xf32> to vector<1x128xf32>
    %83 = math.log %82 : vector<1x128xf32>
    %84 = vector.broadcast %83 : vector<1x128xf32> to vector<128x128xf32>
    %85 = arith.subf %79, %84 : vector<128x128xf32>
    %86 = math.exp %85 : vector<128x128xf32>
    %cst_15 = arith.constant dense<0.000000e+00> : vector<128xf32>
    %87 = vector.multi_reduction <add>, %86, %cst_15 [1] : vector<128x128xf32> to vector<128xf32>
    %88 = vector.shape_cast %87 : vector<128xf32> to vector<128x1xf32>
    %89 = math.log %88 : vector<128x1xf32>
    %90 = vector.broadcast %89 : vector<128x1xf32> to vector<128x128xf32>
    %91 = arith.subf %85, %90 : vector<128x128xf32>
    %92 = math.exp %91 : vector<128x128xf32>
    %cst_16 = arith.constant dense<0.000000e+00> : vector<128xf32>
    %93 = vector.multi_reduction <add>, %92, %cst_16 [0] : vector<128x128xf32> to vector<128xf32>
    %94 = vector.shape_cast %93 : vector<128xf32> to vector<1x128xf32>
    %95 = math.log %94 : vector<1x128xf32>
    %96 = vector.broadcast %95 : vector<1x128xf32> to vector<128x128xf32>
    %97 = arith.subf %91, %96 : vector<128x128xf32>
    %98 = math.exp %97 : vector<128x128xf32>
    %cst_17 = arith.constant dense<0.000000e+00> : vector<128xf32>
    %99 = vector.multi_reduction <add>, %98, %cst_17 [1] : vector<128x128xf32> to vector<128xf32>
    %100 = vector.shape_cast %99 : vector<128xf32> to vector<128x1xf32>
    %101 = math.log %100 : vector<128x1xf32>
    %102 = vector.broadcast %101 : vector<128x1xf32> to vector<128x128xf32>
    %103 = arith.subf %97, %102 : vector<128x128xf32>
    %104 = math.exp %103 : vector<128x128xf32>
    %cst_18 = arith.constant dense<0.000000e+00> : vector<128xf32>
    %105 = vector.multi_reduction <add>, %104, %cst_18 [0] : vector<128x128xf32> to vector<128xf32>
    %106 = vector.shape_cast %105 : vector<128xf32> to vector<1x128xf32>
    %107 = math.log %106 : vector<1x128xf32>
    %108 = vector.broadcast %107 : vector<1x128xf32> to vector<128x128xf32>
    %109 = arith.subf %103, %108 : vector<128x128xf32>
    %110 = math.exp %109 : vector<128x128xf32>
    %cst_19 = arith.constant dense<0.000000e+00> : vector<128xf32>
    %111 = vector.multi_reduction <add>, %110, %cst_19 [1] : vector<128x128xf32> to vector<128xf32>
    %112 = vector.shape_cast %111 : vector<128xf32> to vector<128x1xf32>
    %113 = math.log %112 : vector<128x1xf32>
    %114 = vector.broadcast %113 : vector<128x1xf32> to vector<128x128xf32>
    %115 = arith.subf %109, %114 : vector<128x128xf32>
    %116 = math.exp %115 : vector<128x128xf32>
    %cst_20 = arith.constant dense<0.000000e+00> : vector<128xf32>
    %117 = vector.multi_reduction <add>, %116, %cst_20 [0] : vector<128x128xf32> to vector<128xf32>
    %118 = vector.shape_cast %117 : vector<128xf32> to vector<1x128xf32>
    %119 = math.log %118 : vector<1x128xf32>
    %120 = vector.broadcast %119 : vector<1x128xf32> to vector<128x128xf32>
    %121 = arith.subf %115, %120 : vector<128x128xf32>
    %122 = math.exp %121 : vector<128x128xf32>
    %cst_21 = arith.constant dense<0.000000e+00> : vector<128xf32>
    %123 = vector.multi_reduction <add>, %122, %cst_21 [1] : vector<128x128xf32> to vector<128xf32>
    %124 = vector.shape_cast %123 : vector<128xf32> to vector<128x1xf32>
    %125 = math.log %124 : vector<128x1xf32>
    %126 = vector.broadcast %125 : vector<128x1xf32> to vector<128x128xf32>
    %127 = arith.subf %121, %126 : vector<128x128xf32>
    %128 = math.exp %127 : vector<128x128xf32>
    %cst_22 = arith.constant dense<0.000000e+00> : vector<128xf32>
    %129 = vector.multi_reduction <add>, %128, %cst_22 [0] : vector<128x128xf32> to vector<128xf32>
    %130 = vector.shape_cast %129 : vector<128xf32> to vector<1x128xf32>
    %131 = math.log %130 : vector<1x128xf32>
    %132 = vector.broadcast %131 : vector<1x128xf32> to vector<128x128xf32>
    %133 = arith.subf %127, %132 : vector<128x128xf32>
    %134 = math.exp %133 : vector<128x128xf32>
    %cst_23 = arith.constant dense<0.000000e+00> : vector<128xf32>
    %135 = vector.multi_reduction <add>, %134, %cst_23 [1] : vector<128x128xf32> to vector<128xf32>
    %136 = vector.shape_cast %135 : vector<128xf32> to vector<128x1xf32>
    %137 = math.log %136 : vector<128x1xf32>
    %138 = vector.broadcast %137 : vector<128x1xf32> to vector<128x128xf32>
    %139 = arith.subf %133, %138 : vector<128x128xf32>
    %140 = math.exp %139 : vector<128x128xf32>
    %cst_24 = arith.constant dense<0.000000e+00> : vector<128xf32>
    %141 = vector.multi_reduction <add>, %140, %cst_24 [0] : vector<128x128xf32> to vector<128xf32>
    %142 = vector.shape_cast %141 : vector<128xf32> to vector<1x128xf32>
    %143 = math.log %142 : vector<1x128xf32>
    %144 = vector.broadcast %143 : vector<1x128xf32> to vector<128x128xf32>
    %145 = arith.subf %139, %144 : vector<128x128xf32>
    %146 = math.exp %145 : vector<128x128xf32>
    %cst_25 = arith.constant dense<0.000000e+00> : vector<128xf32>
    %147 = vector.multi_reduction <add>, %146, %cst_25 [1] : vector<128x128xf32> to vector<128xf32>
    %148 = vector.shape_cast %147 : vector<128xf32> to vector<128x1xf32>
    %149 = math.log %148 : vector<128x1xf32>
    %150 = vector.broadcast %149 : vector<128x1xf32> to vector<128x128xf32>
    %151 = arith.subf %145, %150 : vector<128x128xf32>
    %152 = math.exp %151 : vector<128x128xf32>
    %cst_26 = arith.constant dense<0.000000e+00> : vector<128xf32>
    %153 = vector.multi_reduction <add>, %152, %cst_26 [0] : vector<128x128xf32> to vector<128xf32>
    %154 = vector.shape_cast %153 : vector<128xf32> to vector<1x128xf32>
    %155 = math.log %154 : vector<1x128xf32>
    %156 = vector.broadcast %155 : vector<1x128xf32> to vector<128x128xf32>
    %157 = arith.subf %151, %156 : vector<128x128xf32>
    %158 = math.exp %157 : vector<128x128xf32>
    %cst_27 = arith.constant dense<0.000000e+00> : vector<128xf32>
    %159 = vector.multi_reduction <add>, %158, %cst_27 [1] : vector<128x128xf32> to vector<128xf32>
    %160 = vector.shape_cast %159 : vector<128xf32> to vector<128x1xf32>
    %161 = math.log %160 : vector<128x1xf32>
    %162 = vector.broadcast %161 : vector<128x1xf32> to vector<128x128xf32>
    %163 = arith.subf %157, %162 : vector<128x128xf32>
    %164 = math.exp %163 : vector<128x128xf32>
    %cst_28 = arith.constant dense<0.000000e+00> : vector<128xf32>
    %165 = vector.multi_reduction <add>, %164, %cst_28 [0] : vector<128x128xf32> to vector<128xf32>
    %166 = vector.shape_cast %165 : vector<128xf32> to vector<1x128xf32>
    %167 = math.log %166 : vector<1x128xf32>
    %168 = vector.broadcast %167 : vector<1x128xf32> to vector<128x128xf32>
    %169 = arith.subf %163, %168 : vector<128x128xf32>
    %170 = math.exp %169 : vector<128x128xf32>
    %cst_29 = arith.constant dense<0.000000e+00> : vector<128xf32>
    %171 = vector.multi_reduction <add>, %170, %cst_29 [1] : vector<128x128xf32> to vector<128xf32>
    %172 = vector.shape_cast %171 : vector<128xf32> to vector<128x1xf32>
    %173 = math.log %172 : vector<128x1xf32>
    %174 = vector.broadcast %173 : vector<128x1xf32> to vector<128x128xf32>
    %175 = arith.subf %169, %174 : vector<128x128xf32>
    %176 = math.exp %175 : vector<128x128xf32>
    %cst_30 = arith.constant dense<0.000000e+00> : vector<128xf32>
    %177 = vector.multi_reduction <add>, %176, %cst_30 [0] : vector<128x128xf32> to vector<128xf32>
    %178 = vector.shape_cast %177 : vector<128xf32> to vector<1x128xf32>
    %179 = math.log %178 : vector<1x128xf32>
    %180 = vector.broadcast %179 : vector<1x128xf32> to vector<128x128xf32>
    %181 = arith.subf %175, %180 : vector<128x128xf32>
    %182 = math.exp %181 : vector<128x128xf32>
    %cst_31 = arith.constant dense<0.000000e+00> : vector<128xf32>
    %183 = vector.multi_reduction <add>, %182, %cst_31 [1] : vector<128x128xf32> to vector<128xf32>
    %184 = vector.shape_cast %183 : vector<128xf32> to vector<128x1xf32>
    %185 = math.log %184 : vector<128x1xf32>
    %186 = vector.broadcast %185 : vector<128x1xf32> to vector<128x128xf32>
    %187 = arith.subf %181, %186 : vector<128x128xf32>
    %188 = math.exp %187 : vector<128x128xf32>
    %cst_32 = arith.constant dense<0.000000e+00> : vector<128xf32>
    %189 = vector.multi_reduction <add>, %188, %cst_32 [0] : vector<128x128xf32> to vector<128xf32>
    %190 = vector.shape_cast %189 : vector<128xf32> to vector<1x128xf32>
    %191 = math.log %190 : vector<1x128xf32>
    %192 = vector.broadcast %191 : vector<1x128xf32> to vector<128x128xf32>
    %193 = arith.subf %187, %192 : vector<128x128xf32>
    %194 = math.exp %193 : vector<128x128xf32>
    %cst_33 = arith.constant dense<0.000000e+00> : vector<128xf32>
    %195 = vector.multi_reduction <add>, %194, %cst_33 [1] : vector<128x128xf32> to vector<128xf32>
    %196 = vector.shape_cast %195 : vector<128xf32> to vector<128x1xf32>
    %197 = math.log %196 : vector<128x1xf32>
    %198 = vector.broadcast %197 : vector<128x1xf32> to vector<128x128xf32>
    %199 = arith.subf %193, %198 : vector<128x128xf32>
    %200 = math.exp %199 : vector<128x128xf32>
    %cst_34 = arith.constant dense<0.000000e+00> : vector<128xf32>
    %201 = vector.multi_reduction <add>, %200, %cst_34 [0] : vector<128x128xf32> to vector<128xf32>
    %202 = vector.shape_cast %201 : vector<128xf32> to vector<1x128xf32>
    %203 = math.log %202 : vector<1x128xf32>
    %204 = vector.broadcast %203 : vector<1x128xf32> to vector<128x128xf32>
    %205 = arith.subf %199, %204 : vector<128x128xf32>
    %206 = math.exp %205 : vector<128x128xf32>
    %cst_35 = arith.constant dense<0.000000e+00> : vector<128xf32>
    %207 = vector.multi_reduction <add>, %206, %cst_35 [1] : vector<128x128xf32> to vector<128xf32>
    %208 = vector.shape_cast %207 : vector<128xf32> to vector<128x1xf32>
    %209 = math.log %208 : vector<128x1xf32>
    %210 = vector.broadcast %209 : vector<128x1xf32> to vector<128x128xf32>
    %211 = arith.subf %205, %210 : vector<128x128xf32>
    %212 = math.exp %211 : vector<128x128xf32>
    %cst_36 = arith.constant dense<0.000000e+00> : vector<128xf32>
    %213 = vector.multi_reduction <add>, %212, %cst_36 [0] : vector<128x128xf32> to vector<128xf32>
    %214 = vector.shape_cast %213 : vector<128xf32> to vector<1x128xf32>
    %215 = math.log %214 : vector<1x128xf32>
    %216 = vector.broadcast %215 : vector<1x128xf32> to vector<128x128xf32>
    %217 = arith.subf %211, %216 : vector<128x128xf32>
    %218 = math.exp %217 : vector<128x128xf32>
    %cst_37 = arith.constant dense<0.000000e+00> : vector<128xf32>
    %219 = vector.multi_reduction <add>, %218, %cst_37 [1] : vector<128x128xf32> to vector<128xf32>
    %220 = vector.shape_cast %219 : vector<128xf32> to vector<128x1xf32>
    %221 = math.log %220 : vector<128x1xf32>
    %222 = vector.broadcast %221 : vector<128x1xf32> to vector<128x128xf32>
    %223 = arith.subf %217, %222 : vector<128x128xf32>
    %224 = math.exp %223 : vector<128x128xf32>
    %cst_38 = arith.constant dense<0.000000e+00> : vector<128xf32>
    %225 = vector.multi_reduction <add>, %224, %cst_38 [0] : vector<128x128xf32> to vector<128xf32>
    %226 = vector.shape_cast %225 : vector<128xf32> to vector<1x128xf32>
    %227 = math.log %226 : vector<1x128xf32>
    %228 = vector.broadcast %227 : vector<1x128xf32> to vector<128x128xf32>
    %229 = arith.subf %223, %228 : vector<128x128xf32>
    %230 = math.exp %229 : vector<128x128xf32>
    %cst_39 = arith.constant dense<0.000000e+00> : vector<128xf32>
    %231 = vector.multi_reduction <add>, %230, %cst_39 [1] : vector<128x128xf32> to vector<128xf32>
    %232 = vector.shape_cast %231 : vector<128xf32> to vector<128x1xf32>
    %233 = math.log %232 : vector<128x1xf32>
    %234 = vector.broadcast %233 : vector<128x1xf32> to vector<128x128xf32>
    %235 = arith.subf %229, %234 : vector<128x128xf32>
    %236 = math.exp %235 : vector<128x128xf32>
    %cst_40 = arith.constant dense<0.000000e+00> : vector<128xf32>
    %237 = vector.multi_reduction <add>, %236, %cst_40 [0] : vector<128x128xf32> to vector<128xf32>
    %238 = vector.shape_cast %237 : vector<128xf32> to vector<1x128xf32>
    %239 = math.log %238 : vector<1x128xf32>
    %240 = vector.broadcast %239 : vector<1x128xf32> to vector<128x128xf32>
    %241 = arith.subf %235, %240 : vector<128x128xf32>
    %242 = math.exp %241 : vector<128x128xf32>
    %cst_41 = arith.constant dense<0.000000e+00> : vector<128xf32>
    %243 = vector.multi_reduction <add>, %242, %cst_41 [1] : vector<128x128xf32> to vector<128xf32>
    %244 = vector.shape_cast %243 : vector<128xf32> to vector<128x1xf32>
    %245 = tpu.reciprocal %244 {approx = true} : vector<128x1xf32> -> vector<128x1xf32>
    %246 = vector.broadcast %245 : vector<128x1xf32> to vector<128x128xf32>
    %247 = arith.mulf %242, %246 : vector<128x128xf32>
    %c0_42 = arith.constant 0 : index
    %c0_43 = arith.constant 0 : index
    %248 = vector.load %arg6[%c0_42, %c0_43] : memref<128x128xf32, #tpu.memory_space<vmem>>, vector<128x128xf32>
    tpu.vector_store %arg6[%c0_42, %c0_43], %247 {strides = array<i32>} : memref<128x128xf32, #tpu.memory_space<vmem>>, vector<128x128xf32>,
    %249 = tpu.transpose %247, [1, 0] : vector<128x128xf32> -> vector<128x128xf32>
    %c0_44 = arith.constant 0 : index
    %c0_45 = arith.constant 0 : index
    %250 = vector.load %arg5[%c0_44, %c0_45] : memref<4x16xf32, #tpu.memory_space<vmem>>, vector<4x16xf32>
    %251 = arith.truncf %250 : vector<4x16xf32> to vector<4x16xbf16>
    %c0_46 = arith.constant 0 : index
    %c0_47 = arith.constant 0 : index
    %252 = vector.load %arg1[%c0_46, %c0_47] : memref<16x128xf32, #tpu.memory_space<vmem>>, vector<16x128xf32>
    %253 = arith.truncf %252 : vector<16x128xf32> to vector<16x128xbf16>
    %c0_48 = arith.constant 0 : index
    %c0_49 = arith.constant 0 : index
    %254 = vector.load %arg3[%c0_48, %c0_49] : memref<128x128xf32, #tpu.memory_space<vmem>>, vector<128x128xf32>
    %255 = arith.truncf %254 : vector<128x128xf32> to vector<128x128xbf16>
    %c0_50 = arith.constant 0 : index
    %c0_51 = arith.constant 0 : index
    %256 = vector.load %arg2[%c0_50, %c0_51] : memref<1x128xf32, #tpu.memory_space<vmem>>, vector<1x128xf32>
    %c0_52 = arith.constant 0 : index
    %c0_53 = arith.constant 0 : index
    %257 = vector.load %arg4[%c0_52, %c0_53] : memref<1x128xf32, #tpu.memory_space<vmem>>, vector<1x128xf32>
    %258 = arith.truncf %247 : vector<128x128xf32> to vector<128x128xbf16>
    %259 = arith.truncf %249 : vector<128x128xf32> to vector<128x128xbf16>
    %cst_54 = arith.constant dense<0.000000e+00> : vector<4x128xf32>
    %260 = tpu.matmul %251, %253, %cst_54 {dimension_numbers = #tpu.dot_dimension_numbers<[1], [0], [0], [1], [0, 0, 1, 1], [], []>} : vector<4x16xbf16>, vector<16x128xbf16>, vector<4x128xf32> -> vector<4x128xf32>
    %261 = vector.broadcast %256 : vector<1x128xf32> to vector<4x128xf32>
    %262 = arith.addf %260, %261 : vector<4x128xf32>
    %263 = arith.truncf %262 : vector<4x128xf32> to vector<4x128xbf16>
    %cst_55 = arith.constant dense<0.000000e+00> : vector<4x128xf32>
    %264 = tpu.matmul %263, %259, %cst_55 {dimension_numbers = #tpu.dot_dimension_numbers<[1], [0], [0], [1], [0, 0, 1, 1], [], []>} : vector<4x128xbf16>, vector<128x128xbf16>, vector<4x128xf32> -> vector<4x128xf32>
    %cst_56 = arith.constant 0.000000e+00 : f32
    %265 = vector.broadcast %cst_56 : f32 to vector<4x128xf32>
    %266 = arith.maximumf %264, %265 : vector<4x128xf32>
    %267 = arith.truncf %266 : vector<4x128xf32> to vector<4x128xbf16>
    %cst_57 = arith.constant dense<0.000000e+00> : vector<4x128xf32>
    %268 = tpu.matmul %267, %258, %cst_57 {dimension_numbers = #tpu.dot_dimension_numbers<[1], [0], [0], [1], [0, 0, 1, 1], [], []>} : vector<4x128xbf16>, vector<128x128xbf16>, vector<4x128xf32> -> vector<4x128xf32>
    %269 = arith.truncf %268 : vector<4x128xf32> to vector<4x128xbf16>
    %cst_58 = arith.constant dense<0.000000e+00> : vector<4x128xf32>
    %270 = tpu.matmul %269, %255, %cst_58 {dimension_numbers = #tpu.dot_dimension_numbers<[1], [0], [0], [1], [0, 0, 1, 1], [], []>} : vector<4x128xbf16>, vector<128x128xbf16>, vector<4x128xf32> -> vector<4x128xf32>
    %271 = vector.broadcast %257 : vector<1x128xf32> to vector<4x128xf32>
    %272 = arith.addf %270, %271 : vector<4x128xf32>
    %c0_59 = arith.constant 0 : index
    %c0_60 = arith.constant 0 : index
    %273 = vector.load %arg7[%c0_59, %c0_60] : memref<4x128xf32, #tpu.memory_space<vmem>>, vector<4x128xf32>
    tpu.vector_store %arg7[%c0_59, %c0_60], %272 {strides = array<i32>} : memref<4x128xf32, #tpu.memory_space<vmem>>, vector<4x128xf32>,
    return
  }
}

</mosaic_0001>

<llo_original>
// kernel: tpu_custom_call.1
$region0: #{tpu_custom_call.1}
  #allocation0 [shape = 'u32[]', space=smem, size = 0x4, offset = 0x4, fixed_abs, tag = 'smem constant byte address 0x4 - core index']
  #allocation1 [shape = 'u32[144,128]{1,0:T(1,128)}', space=vmem, size = 0x12000, scoped, tag = 'internal scratch']
  %s0 = inlined_call_operand.hbm [shape: f32[128,128], index: 0, kind: input, shape index: {}]
  %s1 = inlined_call_operand.hbm [shape: f32[16,128], index: 1, kind: input, shape index: {}]
  %s2 = inlined_call_operand.vmem [shape: f32[1,128], index: 2, kind: input, shape index: {}]
  %s3 = inlined_call_operand.hbm [shape: f32[128,128], index: 3, kind: input, shape index: {}]
  %s4 = inlined_call_operand.vmem [shape: f32[1,128], index: 4, kind: input, shape index: {}]
  %s5 = inlined_call_operand.vmem [shape: f32[4,16], index: 5, kind: input, shape index: {}]
  %s6 = inlined_call_operand.hbm [shape: f32[128,128], index: 6, kind: output, shape index: {0}]
  %s7 = inlined_call_operand.hbm [shape: f32[4,128], index: 7, kind: output, shape index: {1}]
  %8 = xla_tuple %s6, %s7
  %s9 = sld [smem:[#allocation0]]
  $region54: #{tpu_custom_call.1} parent=0
    _
  %s11 = ssub.s32 1, %s9
  %s12 = scalar_select 0, %s11, %s9
  $region1: #{tpu_custom_call.1} parent=0
    #allocation2 [shape = 'u8[65536]{0}', space=vmem, size = 0x10000, scoped, tag = 'input window, operand 0, single buffered']
    #allocation3 [shape = 's32[1]{0}', space=sflag, size = 0x4, scoped, tag = 'scoped memory for tpu_custom_call.1']
    #allocation4 [shape = 's32[1]{0}', space=sflag, size = 0x4, scoped, tag = 'scoped memory for tpu_custom_call.1']
    #allocation5 [shape = 'u8[8192]{0}', space=vmem, size = 0x2000, scoped, tag = 'input window, operand 1, single buffered']
    #allocation6 [shape = 's32[1]{0}', space=sflag, size = 0x4, scoped, tag = 'scoped memory for tpu_custom_call.1']
    #allocation7 [shape = 'u8[65536]{0}', space=vmem, size = 0x10000, scoped, tag = 'input window, operand 3, single buffered']
    #allocation8 [shape = 'u8[65536]{0}', space=vmem, size = 0x10000, scoped, tag = 'output window, operand 0, single buffered']
    #allocation9 [shape = 'u8[2048]{0}', space=vmem, size = 0x800, scoped, tag = 'output window, operand 1, single buffered']
    #allocation10 [shape = 's32[1]{0}', space=sflag, size = 0x4, scoped, tag = 'scoped memory for tpu_custom_call.1']
    %13 = vsyncpa [#allocation3], 0
    %14 = vsyncpa [#allocation6], 0
    %15 = vsyncpa [#allocation4], 0
    %16 = vsyncpa [#allocation10], 0
    // Predicated region
    $region2: #{tpu_custom_call.1} parent=1 // pred_check
      _
    $region3: #{tpu_custom_call.1} parent=1 // pred_check_branch
      %18 = sbr.rel (0) target = $region5
    $region4: #{tpu_custom_call.1} parent=1 // pred_region
      %s20 = ssub.s32 2048, 2048
      %21 = vsyncadd [#allocation3], %s20
      %s22 = sshll.u32 [#allocation2], 4
      %s23 = int_to_ptr.vmem [resolvable:$true] %s22
      %28 = dma.hbm_to_vmem [thread:$0]  %s0, 2048, %s23, [#allocation3], 128, 128, 8
    $region5: #{tpu_custom_call.1} parent=1 // pred_fallthru
      _
    // Predicated region
    $region6: #{tpu_custom_call.1} parent=1 // pred_check
      _
    $region7: #{tpu_custom_call.1} parent=1 // pred_check_branch
      %30 = sbr.rel (0) target = $region9
    $region8: #{tpu_custom_call.1} parent=1 // pred_region
      %s32 = ssub.s32 256, 256
      %33 = vsyncadd [#allocation6], %s32
      %s34 = sshll.u32 [#allocation5], 4
      %s35 = int_to_ptr.vmem [resolvable:$true] %s34
      %40 = dma.hbm_to_vmem [thread:$0]  %s1, 256, %s35, [#allocation6], 128, 128, 8
    $region9: #{tpu_custom_call.1} parent=1 // pred_fallthru
      _
    // Predicated region
    $region10: #{tpu_custom_call.1} parent=1 // pred_check
      _
    $region11: #{tpu_custom_call.1} parent=1 // pred_check_branch
      %42 = sbr.rel (0) target = $region13
    $region12: #{tpu_custom_call.1} parent=1 // pred_region
      _
    $region13: #{tpu_custom_call.1} parent=1 // pred_fallthru
      _
    // Predicated region
    $region14: #{tpu_custom_call.1} parent=1 // pred_check
      _
    $region15: #{tpu_custom_call.1} parent=1 // pred_check_branch
      %44 = sbr.rel (0) target = $region17
    $region16: #{tpu_custom_call.1} parent=1 // pred_region
      %s46 = ssub.s32 2048, 2048
      %47 = vsyncadd [#allocation6], %s46
      %s48 = sshll.u32 [#allocation7], 4
      %s49 = int_to_ptr.vmem [resolvable:$true] %s48
      %54 = dma.hbm_to_vmem [thread:$0]  %s3, 2048, %s49, [#allocation6], 128, 128, 8
    $region17: #{tpu_custom_call.1} parent=1 // pred_fallthru
      _
    // Predicated region
    $region18: #{tpu_custom_call.1} parent=1 // pred_check
      _
    $region19: #{tpu_custom_call.1} parent=1 // pred_check_branch
      %56 = sbr.rel (0) target = $region21
    $region20: #{tpu_custom_call.1} parent=1 // pred_region
      _
    $region21: #{tpu_custom_call.1} parent=1 // pred_fallthru
      _
    // Predicated region
    $region22: #{tpu_custom_call.1} parent=1 // pred_check
      _
    $region23: #{tpu_custom_call.1} parent=1 // pred_check_branch
      %58 = sbr.rel (0) target = $region25
    $region24: #{tpu_custom_call.1} parent=1 // pred_region
      _
    $region25: #{tpu_custom_call.1} parent=1 // pred_fallthru
      _
    // Predicated region
    $region26: #{tpu_custom_call.1} parent=1 // pred_check
      _
    $region27: #{tpu_custom_call.1} parent=1 // pred_check_branch
      %60 = sbr.rel (0) target = $region29
    $region28: #{tpu_custom_call.1} parent=1 // pred_region
      %61 = dma.done [#allocation3], 2048
    $region29: #{tpu_custom_call.1} parent=1 // pred_fallthru
      _
    // Predicated region
    $region30: #{tpu_custom_call.1} parent=1 // pred_check
      _
    $region31: #{tpu_custom_call.1} parent=1 // pred_check_branch
      %63 = sbr.rel (0) target = $region33
    $region32: #{tpu_custom_call.1} parent=1 // pred_region
      %64 = dma.done [#allocation6], 256
    $region33: #{tpu_custom_call.1} parent=1 // pred_fallthru
      _
    // Predicated region
    $region34: #{tpu_custom_call.1} parent=1 // pred_check
      _
    $region35: #{tpu_custom_call.1} parent=1 // pred_check_branch
      %66 = sbr.rel (0) target = $region37
    $region36: #{tpu_custom_call.1} parent=1 // pred_region
      %67 = dma.done [#allocation6], 2048
    $region37: #{tpu_custom_call.1} parent=1 // pred_fallthru
      _
    %v69 = vld [vmem:[#allocation2] sm:$0xff]
    %v70 = vld [vmem:[#allocation2 + $0x8] sm:$0xff]
    %v71 = vld [vmem:[#allocation2 + $0x10] sm:$0xff]
    %v72 = vld [vmem:[#allocation2 + $0x18] sm:$0xff]
    %v73 = vld [vmem:[#allocation2 + $0x20] sm:$0xff]
    %v74 = vld [vmem:[#allocation2 + $0x28] sm:$0xff]
    %v75 = vld [vmem:[#allocation2 + $0x30] sm:$0xff]
    %v76 = vld [vmem:[#allocation2 + $0x38] sm:$0xff]
    %v77 = vld [vmem:[#allocation2 + $0x40] sm:$0xff]
    %v78 = vld [vmem:[#allocation2 + $0x48] sm:$0xff]
    %v79 = vld [vmem:[#allocation2 + $0x50] sm:$0xff]
    %v80 = vld [vmem:[#allocation2 + $0x58] sm:$0xff]
    %v81 = vld [vmem:[#allocation2 + $0x60] sm:$0xff]
    %v82 = vld [vmem:[#allocation2 + $0x68] sm:$0xff]
    %v83 = vld [vmem:[#allocation2 + $0x70] sm:$0xff]
    %v84 = vld [vmem:[#allocation2 + $0x78] sm:$0xff]
    %v85 = vmax.f32 %v69, %v73
    %v86 = vmax.f32 %v70, %v74
    %v87 = vmax.f32 %v71, %v75
    %v88 = vmax.f32 %v72, %v76
    %v89 = vmax.f32 %v85, %v77
    %v90 = vmax.f32 %v86, %v78
    %v91 = vmax.f32 %v87, %v79
    %v92 = vmax.f32 %v88, %v80
    %v93 = vmax.f32 %v89, %v81
    %v94 = vmax.f32 %v90, %v82
    %v95 = vmax.f32 %v91, %v83
    %v96 = vmax.f32 %v92, %v84
    %v97 = vmax.f32 %v93, %v94
    %v98 = vmax.f32 %v95, %v96
    %v99 = vmax.f32 %v97, %v98
    %v100 = vrot.slane %v99, 4
    %v101 = vmax.f32 %v99, %v100
    %v102 = vrot.slane %v101, 2
    %v103 = vmax.f32 %v101, %v102
    %v104 = vrot.slane %v103, 1
    %v105 = vmax.f32 %v103, %v104
    %v106 = vsub.f32 %v69, %v105
    %v107 = vsub.f32 %v70, %v105
    %v108 = vsub.f32 %v71, %v105
    %v109 = vsub.f32 %v72, %v105
    %v110 = vsub.f32 %v73, %v105
    %v111 = vsub.f32 %v74, %v105
    %v112 = vsub.f32 %v75, %v105
    %v113 = vsub.f32 %v76, %v105
    %v114 = vsub.f32 %v77, %v105
    %v115 = vsub.f32 %v78, %v105
    %v116 = vsub.f32 %v79, %v105
    %v117 = vsub.f32 %v80, %v105
    %v118 = vsub.f32 %v81, %v105
    %v119 = vsub.f32 %v82, %v105
    %v120 = vsub.f32 %v83, %v105
    %v121 = vsub.f32 %v84, %v105
    %v122 = vmul.f32 %v106, 1.442695
    %v123 = vpow.pop %v122
    %v124 = vmul.f32 %v107, 1.442695
    %v125 = vpow.pop %v124
    %v126 = vmul.f32 %v108, 1.442695
    %v127 = vpow.pop %v126
    %v128 = vmul.f32 %v109, 1.442695
    %v129 = vpow.pop %v128
    %v130 = vmul.f32 %v110, 1.442695
    %v131 = vpow.pop %v130
    %v132 = vmul.f32 %v111, 1.442695
    %v133 = vpow.pop %v132
    %v134 = vmul.f32 %v112, 1.442695
    %v135 = vpow.pop %v134
    %v136 = vmul.f32 %v113, 1.442695
    %v137 = vpow.pop %v136
    %v138 = vmul.f32 %v114, 1.442695
    %v139 = vpow.pop %v138
    %v140 = vmul.f32 %v115, 1.442695
    %v141 = vpow.pop %v140
    %v142 = vmul.f32 %v116, 1.442695
    %v143 = vpow.pop %v142
    %v144 = vmul.f32 %v117, 1.442695
    %v145 = vpow.pop %v144
    %v146 = vmul.f32 %v118, 1.442695
    %v147 = vpow.pop %v146
    %v148 = vmul.f32 %v119, 1.442695
    %v149 = vpow.pop %v148
    %v150 = vmul.f32 %v120, 1.442695
    %v151 = vpow.pop %v150
    %v152 = vmul.f32 %v121, 1.442695
    %v153 = vpow.pop %v152
    %v154 = vadd.f32 %v123, %v125
    %v155 = vadd.f32 %v154, %v127
    %v156 = vadd.f32 %v155, %v129
    %v157 = vadd.f32 %v156, %v131
    %v158 = vadd.f32 %v157, %v133
    %v159 = vadd.f32 %v158, %v135
    %v160 = vadd.f32 %v159, %v137
    %v161 = vadd.f32 %v160, %v139
    %v162 = vadd.f32 %v161, %v141
    %v163 = vadd.f32 %v162, %v143
    %v164 = vadd.f32 %v163, %v145
    %v165 = vadd.f32 %v164, %v147
    %v166 = vadd.f32 %v165, %v149
    %v167 = vadd.f32 %v166, %v151
    %v168 = vadd.f32 %v167, %v153
    %v169 = vrot.slane %v168, 4
    %v170 = vadd.f32 %v168, %v169
    %v171 = vrot.slane %v170, 2
    %v172 = vadd.f32 %v170, %v171
    %v173 = vrot.slane %v172, 1
    %v174 = vadd.f32 %v172, %v173
    %v175 = vlog2.pop %v174
    %v176 = vmul.f32 %v175, 0.6931472
    %v177 = vadd.f32 %v105, %v176
    %v178 = vsub.f32 %v69, %v177
    %v179 = vsub.f32 %v70, %v177
    %v180 = vsub.f32 %v71, %v177
    %v181 = vsub.f32 %v72, %v177
    %v182 = vsub.f32 %v73, %v177
    %v183 = vsub.f32 %v74, %v177
    %v184 = vsub.f32 %v75, %v177
    %v185 = vsub.f32 %v76, %v177
    %v186 = vsub.f32 %v77, %v177
    %v187 = vsub.f32 %v78, %v177
    %v188 = vsub.f32 %v79, %v177
    %v189 = vsub.f32 %v80, %v177
    %v190 = vsub.f32 %v81, %v177
    %v191 = vsub.f32 %v82, %v177
    %v192 = vsub.f32 %v83, %v177
    %v193 = vsub.f32 %v84, %v177
    %v194 = vmul.f32 %v178, 1.442695
    %v195 = vpow.pop %v194
    %v196 = vmul.f32 %v179, 1.442695
    %v197 = vpow.pop %v196
    %v198 = vmul.f32 %v180, 1.442695
    %v199 = vpow.pop %v198
    %v200 = vmul.f32 %v181, 1.442695
    %v201 = vpow.pop %v200
    %v202 = vmul.f32 %v182, 1.442695
    %v203 = vpow.pop %v202
    %v204 = vmul.f32 %v183, 1.442695
    %v205 = vpow.pop %v204
    %v206 = vmul.f32 %v184, 1.442695
    %v207 = vpow.pop %v206
    %v208 = vmul.f32 %v185, 1.442695
    %v209 = vpow.pop %v208
    %v210 = vmul.f32 %v186, 1.442695
    %v211 = vpow.pop %v210
    %v212 = vmul.f32 %v187, 1.442695
    %v213 = vpow.pop %v212
    %v214 = vmul.f32 %v188, 1.442695
    %v215 = vpow.pop %v214
    %v216 = vmul.f32 %v189, 1.442695
    %v217 = vpow.pop %v216
    %v218 = vmul.f32 %v190, 1.442695
    %v219 = vpow.pop %v218
    %v220 = vmul.f32 %v191, 1.442695
    %v221 = vpow.pop %v220
    %v222 = vmul.f32 %v192, 1.442695
    %v223 = vpow.pop %v222
    %v224 = vmul.f32 %v193, 1.442695
    %v225 = vpow.pop %v224
    %226 = vadd.xlane.f32.xlu0 %v195
    %v227 = vpop.xlane.xlu0 %226
    %228 = vadd.xlane.f32.xlu0 %v197
    %v229 = vpop.xlane.xlu0 %228
    %230 = vadd.xlane.f32.xlu0 %v199
    %v231 = vpop.xlane.xlu0 %230
    %232 = vadd.xlane.f32.xlu0 %v201
    %v233 = vpop.xlane.xlu0 %232
    %234 = vadd.xlane.f32.xlu0 %v203
    %v235 = vpop.xlane.xlu0 %234
    %236 = vadd.xlane.f32.xlu0 %v205
    %v237 = vpop.xlane.xlu0 %236
    %238 = vadd.xlane.f32.xlu0 %v207
    %v239 = vpop.xlane.xlu0 %238
    %240 = vadd.xlane.f32.xlu0 %v209
    %v241 = vpop.xlane.xlu0 %240
    %242 = vadd.xlane.f32.xlu0 %v211
    %v243 = vpop.xlane.xlu0 %242
    %244 = vadd.xlane.f32.xlu0 %v213
    %v245 = vpop.xlane.xlu0 %244
    %246 = vadd.xlane.f32.xlu0 %v215
    %v247 = vpop.xlane.xlu0 %246
    %248 = vadd.xlane.f32.xlu0 %v217
    %v249 = vpop.xlane.xlu0 %248
    %250 = vadd.xlane.f32.xlu0 %v219
    %v251 = vpop.xlane.xlu0 %250
    %252 = vadd.xlane.f32.xlu0 %v221
    %v253 = vpop.xlane.xlu0 %252
    %254 = vadd.xlane.f32.xlu0 %v223
    %v255 = vpop.xlane.xlu0 %254
    %256 = vadd.xlane.f32.xlu0 %v225
    %v257 = vpop.xlane.xlu0 %256
    %v258 = vlog2.pop %v227
    %v259 = vmul.f32 %v258, 0.6931472
    %v260 = vlog2.pop %v229
    %v261 = vmul.f32 %v260, 0.6931472
    %v262 = vlog2.pop %v231
    %v263 = vmul.f32 %v262, 0.6931472
    %v264 = vlog2.pop %v233
    %v265 = vmul.f32 %v264, 0.6931472
    %v266 = vlog2.pop %v235
    %v267 = vmul.f32 %v266, 0.6931472
    %v268 = vlog2.pop %v237
    %v269 = vmul.f32 %v268, 0.6931472
    %v270 = vlog2.pop %v239
    %v271 = vmul.f32 %v270, 0.6931472
    %v272 = vlog2.pop %v241
    %v273 = vmul.f32 %v272, 0.6931472
    %v274 = vlog2.pop %v243
    %v275 = vmul.f32 %v274, 0.6931472
    %v276 = vlog2.pop %v245
    %v277 = vmul.f32 %v276, 0.6931472
    %v278 = vlog2.pop %v247
    %v279 = vmul.f32 %v278, 0.6931472
    %v280 = vlog2.pop %v249
    %v281 = vmul.f32 %v280, 0.6931472
    %v282 = vlog2.pop %v251
    %v283 = vmul.f32 %v282, 0.6931472
    %v284 = vlog2.pop %v253
    %v285 = vmul.f32 %v284, 0.6931472
    %v286 = vlog2.pop %v255
    %v287 = vmul.f32 %v286, 0.6931472
    %v288 = vlog2.pop %v257
    %v289 = vmul.f32 %v288, 0.6931472
    %v290 = vsub.f32 %v178, %v259
    %v291 = vsub.f32 %v179, %v261
    %v292 = vsub.f32 %v180, %v263
    %v293 = vsub.f32 %v181, %v265
    %v294 = vsub.f32 %v182, %v267
    %v295 = vsub.f32 %v183, %v269
    %v296 = vsub.f32 %v184, %v271
    %v297 = vsub.f32 %v185, %v273
    %v298 = vsub.f32 %v186, %v275
    %v299 = vsub.f32 %v187, %v277
    %v300 = vsub.f32 %v188, %v279
    %v301 = vsub.f32 %v189, %v281
    %v302 = vsub.f32 %v190, %v283
    %v303 = vsub.f32 %v191, %v285
    %v304 = vsub.f32 %v192, %v287
    %v305 = vsub.f32 %v193, %v289
    %v306 = vmul.f32 %v290, 1.442695
    %v307 = vpow.pop %v306
    %v308 = vmul.f32 %v291, 1.442695
    %v309 = vpow.pop %v308
    %v310 = vmul.f32 %v292, 1.442695
    %v311 = vpow.pop %v310
    %v312 = vmul.f32 %v293, 1.442695
    %v313 = vpow.pop %v312
    %v314 = vmul.f32 %v294, 1.442695
    %v315 = vpow.pop %v314
    %v316 = vmul.f32 %v295, 1.442695
    %v317 = vpow.pop %v316
    %v318 = vmul.f32 %v296, 1.442695
    %v319 = vpow.pop %v318
    %v320 = vmul.f32 %v297, 1.442695
    %v321 = vpow.pop %v320
    %v322 = vmul.f32 %v298, 1.442695
    %v323 = vpow.pop %v322
    %v324 = vmul.f32 %v299, 1.442695
    %v325 = vpow.pop %v324
    %v326 = vmul.f32 %v300, 1.442695
    %v327 = vpow.pop %v326
    %v328 = vmul.f32 %v301, 1.442695
    %v329 = vpow.pop %v328
    %v330 = vmul.f32 %v302, 1.442695
    %v331 = vpow.pop %v330
    %v332 = vmul.f32 %v303, 1.442695
    %v333 = vpow.pop %v332
    %v334 = vmul.f32 %v304, 1.442695
    %v335 = vpow.pop %v334
    %v336 = vmul.f32 %v305, 1.442695
    %v337 = vpow.pop %v336
    %v338 = vadd.f32 %v307, %v309
    %v339 = vadd.f32 %v338, %v311
    %v340 = vadd.f32 %v339, %v313
    %v341 = vadd.f32 %v340, %v315
    %v342 = vadd.f32 %v341, %v317
    %v343 = vadd.f32 %v342, %v319
    %v344 = vadd.f32 %v343, %v321
    %v345 = vadd.f32 %v344, %v323
    %v346 = vadd.f32 %v345, %v325
    %v347 = vadd.f32 %v346, %v327
    %v348 = vadd.f32 %v347, %v329
    %v349 = vadd.f32 %v348, %v331
    %v350 = vadd.f32 %v349, %v333
    %v351 = vadd.f32 %v350, %v335
    %v352 = vadd.f32 %v351, %v337
    %v353 = vrot.slane %v352, 4
    %v354 = vadd.f32 %v352, %v353
    %v355 = vrot.slane %v354, 2
    %v356 = vadd.f32 %v354, %v355
    %v357 = vrot.slane %v356, 1
    %v358 = vadd.f32 %v356, %v357
    %v359 = vlog2.pop %v358
    %v360 = vmul.f32 %v359, 0.6931472
    %v361 = vsub.f32 %v290, %v360
    %v362 = vsub.f32 %v291, %v360
    %v363 = vsub.f32 %v292, %v360
    %v364 = vsub.f32 %v293, %v360
    %v365 = vsub.f32 %v294, %v360
    %v366 = vsub.f32 %v295, %v360
    %v367 = vsub.f32 %v296, %v360
    %v368 = vsub.f32 %v297, %v360
    %v369 = vsub.f32 %v298, %v360
    %v370 = vsub.f32 %v299, %v360
    %v371 = vsub.f32 %v300, %v360
    %v372 = vsub.f32 %v301, %v360
    %v373 = vsub.f32 %v302, %v360
    %v374 = vsub.f32 %v303, %v360
    %v375 = vsub.f32 %v304, %v360
    %v376 = vsub.f32 %v305, %v360
    %v377 = vmul.f32 %v361, 1.442695
    %v378 = vpow.pop %v377
    %v379 = vmul.f32 %v362, 1.442695
    %v380 = vpow.pop %v379
    %v381 = vmul.f32 %v363, 1.442695
    %v382 = vpow.pop %v381
    %v383 = vmul.f32 %v364, 1.442695
    %v384 = vpow.pop %v383
    %v385 = vmul.f32 %v365, 1.442695
    %v386 = vpow.pop %v385
    %v387 = vmul.f32 %v366, 1.442695
    %v388 = vpow.pop %v387
    %v389 = vmul.f32 %v367, 1.442695
    %v390 = vpow.pop %v389
    %v391 = vmul.f32 %v368, 1.442695
    %v392 = vpow.pop %v391
    %v393 = vmul.f32 %v369, 1.442695
    %v394 = vpow.pop %v393
    %v395 = vmul.f32 %v370, 1.442695
    %v396 = vpow.pop %v395
    %v397 = vmul.f32 %v371, 1.442695
    %v398 = vpow.pop %v397
    %v399 = vmul.f32 %v372, 1.442695
    %v400 = vpow.pop %v399
    %v401 = vmul.f32 %v373, 1.442695
    %v402 = vpow.pop %v401
    %v403 = vmul.f32 %v374, 1.442695
    %v404 = vpow.pop %v403
    %v405 = vmul.f32 %v375, 1.442695
    %v406 = vpow.pop %v405
    %v407 = vmul.f32 %v376, 1.442695
    %v408 = vpow.pop %v407
    %409 = vadd.xlane.f32.xlu0 %v378
    %v410 = vpop.xlane.xlu0 %409
    %411 = vadd.xlane.f32.xlu0 %v380
    %v412 = vpop.xlane.xlu0 %411
    %413 = vadd.xlane.f32.xlu0 %v382
    %v414 = vpop.xlane.xlu0 %413
    %415 = vadd.xlane.f32.xlu0 %v384
    %v416 = vpop.xlane.xlu0 %415
    %417 = vadd.xlane.f32.xlu0 %v386
    %v418 = vpop.xlane.xlu0 %417
    %419 = vadd.xlane.f32.xlu0 %v388
    %v420 = vpop.xlane.xlu0 %419
    %421 = vadd.xlane.f32.xlu0 %v390
    %v422 = vpop.xlane.xlu0 %421
    %423 = vadd.xlane.f32.xlu0 %v392
    %v424 = vpop.xlane.xlu0 %423
    %425 = vadd.xlane.f32.xlu0 %v394
    %v426 = vpop.xlane.xlu0 %425
    %427 = vadd.xlane.f32.xlu0 %v396
    %v428 = vpop.xlane.xlu0 %427
    %429 = vadd.xlane.f32.xlu0 %v398
    %v430 = vpop.xlane.xlu0 %429
    %431 = vadd.xlane.f32.xlu0 %v400
    %v432 = vpop.xlane.xlu0 %431
    %433 = vadd.xlane.f32.xlu0 %v402
    %v434 = vpop.xlane.xlu0 %433
    %435 = vadd.xlane.f32.xlu0 %v404
    %v436 = vpop.xlane.xlu0 %435
    %437 = vadd.xlane.f32.xlu0 %v406
    %v438 = vpop.xlane.xlu0 %437
    %439 = vadd.xlane.f32.xlu0 %v408
    %v440 = vpop.xlane.xlu0 %439
    %v441 = vlog2.pop %v410
    %v442 = vmul.f32 %v441, 0.6931472
    %v443 = vlog2.pop %v412
    %v444 = vmul.f32 %v443, 0.6931472
    %v445 = vlog2.pop %v414
    %v446 = vmul.f32 %v445, 0.6931472
    %v447 = vlog2.pop %v416
    %v448 = vmul.f32 %v447, 0.6931472
    %v449 = vlog2.pop %v418
    %v450 = vmul.f32 %v449, 0.6931472
    %v451 = vlog2.pop %v420
    %v452 = vmul.f32 %v451, 0.6931472
    %v453 = vlog2.pop %v422
    %v454 = vmul.f32 %v453, 0.6931472
    %v455 = vlog2.pop %v424
    %v456 = vmul.f32 %v455, 0.6931472
    %v457 = vlog2.pop %v426
    %v458 = vmul.f32 %v457, 0.6931472
    %v459 = vlog2.pop %v428
    %v460 = vmul.f32 %v459, 0.6931472
    %v461 = vlog2.pop %v430
    %v462 = vmul.f32 %v461, 0.6931472
    %v463 = vlog2.pop %v432
    %v464 = vmul.f32 %v463, 0.6931472
    %v465 = vlog2.pop %v434
    %v466 = vmul.f32 %v465, 0.6931472
    %v467 = vlog2.pop %v436
    %v468 = vmul.f32 %v467, 0.6931472
    %v469 = vlog2.pop %v438
    %v470 = vmul.f32 %v469, 0.6931472
    %v471 = vlog2.pop %v440
    %v472 = vmul.f32 %v471, 0.6931472
    %v473 = vsub.f32 %v361, %v442
    %v474 = vsub.f32 %v362, %v444
    %v475 = vsub.f32 %v363, %v446
    %v476 = vsub.f32 %v364, %v448
    %v477 = vsub.f32 %v365, %v450
    %v478 = vsub.f32 %v366, %v452
    %v479 = vsub.f32 %v367, %v454
    %v480 = vsub.f32 %v368, %v456
    %v481 = vsub.f32 %v369, %v458
    %v482 = vsub.f32 %v370, %v460
    %v483 = vsub.f32 %v371, %v462
    %v484 = vsub.f32 %v372, %v464
    %v485 = vsub.f32 %v373, %v466
    %v486 = vsub.f32 %v374, %v468
    %v487 = vsub.f32 %v375, %v470
    %v488 = vsub.f32 %v376, %v472
    %v489 = vmul.f32 %v473, 1.442695
    %v490 = vpow.pop %v489
    %v491 = vmul.f32 %v474, 1.442695
    %v492 = vpow.pop %v491
    %v493 = vmul.f32 %v475, 1.442695
    %v494 = vpow.pop %v493
    %v495 = vmul.f32 %v476, 1.442695
    %v496 = vpow.pop %v495
    %v497 = vmul.f32 %v477, 1.442695
    %v498 = vpow.pop %v497
    %v499 = vmul.f32 %v478, 1.442695
    %v500 = vpow.pop %v499
    %v501 = vmul.f32 %v479, 1.442695
    %v502 = vpow.pop %v501
    %v503 = vmul.f32 %v480, 1.442695
    %v504 = vpow.pop %v503
    %v505 = vmul.f32 %v481, 1.442695
    %v506 = vpow.pop %v505
    %v507 = vmul.f32 %v482, 1.442695
    %v508 = vpow.pop %v507
    %v509 = vmul.f32 %v483, 1.442695
    %v510 = vpow.pop %v509
    %v511 = vmul.f32 %v484, 1.442695
    %v512 = vpow.pop %v511
    %v513 = vmul.f32 %v485, 1.442695
    %v514 = vpow.pop %v513
    %v515 = vmul.f32 %v486, 1.442695
    %v516 = vpow.pop %v515
    %v517 = vmul.f32 %v487, 1.442695
    %v518 = vpow.pop %v517
    %v519 = vmul.f32 %v488, 1.442695
    %v520 = vpow.pop %v519
    %v521 = vadd.f32 %v490, %v492
    %v522 = vadd.f32 %v521, %v494
    %v523 = vadd.f32 %v522, %v496
    %v524 = vadd.f32 %v523, %v498
    %v525 = vadd.f32 %v524, %v500
    %v526 = vadd.f32 %v525, %v502
    %v527 = vadd.f32 %v526, %v504
    %v528 = vadd.f32 %v527, %v506
    %v529 = vadd.f32 %v528, %v508
    %v530 = vadd.f32 %v529, %v510
    %v531 = vadd.f32 %v530, %v512
    %v532 = vadd.f32 %v531, %v514
    %v533 = vadd.f32 %v532, %v516
    %v534 = vadd.f32 %v533, %v518
    %v535 = vadd.f32 %v534, %v520
    %v536 = vrot.slane %v535, 4
    %v537 = vadd.f32 %v535, %v536
    %v538 = vrot.slane %v537, 2
    %v539 = vadd.f32 %v537, %v538
    %v540 = vrot.slane %v539, 1
    %v541 = vadd.f32 %v539, %v540
    %v542 = vlog2.pop %v541
    %v543 = vmul.f32 %v542, 0.6931472
    %v544 = vsub.f32 %v473, %v543
    %v545 = vsub.f32 %v474, %v543
    %v546 = vsub.f32 %v475, %v543
    %v547 = vsub.f32 %v476, %v543
    %v548 = vsub.f32 %v477, %v543
    %v549 = vsub.f32 %v478, %v543
    %v550 = vsub.f32 %v479, %v543
    %v551 = vsub.f32 %v480, %v543
    %v552 = vsub.f32 %v481, %v543
    %v553 = vsub.f32 %v482, %v543
    %v554 = vsub.f32 %v483, %v543
    %v555 = vsub.f32 %v484, %v543
    %v556 = vsub.f32 %v485, %v543
    %v557 = vsub.f32 %v486, %v543
    %v558 = vsub.f32 %v487, %v543
    %v559 = vsub.f32 %v488, %v543
    %v560 = vmul.f32 %v544, 1.442695
    %v561 = vpow.pop %v560
    %v562 = vmul.f32 %v545, 1.442695
    %v563 = vpow.pop %v562
    %v564 = vmul.f32 %v546, 1.442695
    %v565 = vpow.pop %v564
    %v566 = vmul.f32 %v547, 1.442695
    %v567 = vpow.pop %v566
    %v568 = vmul.f32 %v548, 1.442695
    %v569 = vpow.pop %v568
    %v570 = vmul.f32 %v549, 1.442695
    %v571 = vpow.pop %v570
    %v572 = vmul.f32 %v550, 1.442695
    %v573 = vpow.pop %v572
    %v574 = vmul.f32 %v551, 1.442695
    %v575 = vpow.pop %v574
    %v576 = vmul.f32 %v552, 1.442695
    %v577 = vpow.pop %v576
    %v578 = vmul.f32 %v553, 1.442695
    %v579 = vpow.pop %v578
    %v580 = vmul.f32 %v554, 1.442695
    %v581 = vpow.pop %v580
    %v582 = vmul.f32 %v555, 1.442695
    %v583 = vpow.pop %v582
    %v584 = vmul.f32 %v556, 1.442695
    %v585 = vpow.pop %v584
    %v586 = vmul.f32 %v557, 1.442695
    %v587 = vpow.pop %v586
    %v588 = vmul.f32 %v558, 1.442695
    %v589 = vpow.pop %v588
    %v590 = vmul.f32 %v559, 1.442695
    %v591 = vpow.pop %v590
    %592 = vadd.xlane.f32.xlu0 %v561
    %v593 = vpop.xlane.xlu0 %592
    %594 = vadd.xlane.f32.xlu0 %v563
    %v595 = vpop.xlane.xlu0 %594
    %596 = vadd.xlane.f32.xlu0 %v565
    %v597 = vpop.xlane.xlu0 %596
    %598 = vadd.xlane.f32.xlu0 %v567
    %v599 = vpop.xlane.xlu0 %598
    %600 = vadd.xlane.f32.xlu0 %v569
    %v601 = vpop.xlane.xlu0 %600
    %602 = vadd.xlane.f32.xlu0 %v571
    %v603 = vpop.xlane.xlu0 %602
    %604 = vadd.xlane.f32.xlu0 %v573
    %v605 = vpop.xlane.xlu0 %604
    %606 = vadd.xlane.f32.xlu0 %v575
    %v607 = vpop.xlane.xlu0 %606
    %608 = vadd.xlane.f32.xlu0 %v577
    %v609 = vpop.xlane.xlu0 %608
    %610 = vadd.xlane.f32.xlu0 %v579
    %v611 = vpop.xlane.xlu0 %610
    %612 = vadd.xlane.f32.xlu0 %v581
    %v613 = vpop.xlane.xlu0 %612
    %614 = vadd.xlane.f32.xlu0 %v583
    %v615 = vpop.xlane.xlu0 %614
    %616 = vadd.xlane.f32.xlu0 %v585
    %v617 = vpop.xlane.xlu0 %616
    %618 = vadd.xlane.f32.xlu0 %v587
    %v619 = vpop.xlane.xlu0 %618
    %620 = vadd.xlane.f32.xlu0 %v589
    %v621 = vpop.xlane.xlu0 %620
    %622 = vadd.xlane.f32.xlu0 %v591
    %v623 = vpop.xlane.xlu0 %622
    %v624 = vlog2.pop %v593
    %v625 = vmul.f32 %v624, 0.6931472
    %v626 = vlog2.pop %v595
    %v627 = vmul.f32 %v626, 0.6931472
    %v628 = vlog2.pop %v597
    %v629 = vmul.f32 %v628, 0.6931472
    %v630 = vlog2.pop %v599
    %v631 = vmul.f32 %v630, 0.6931472
    %v632 = vlog2.pop %v601
    %v633 = vmul.f32 %v632, 0.6931472
    %v634 = vlog2.pop %v603
    %v635 = vmul.f32 %v634, 0.6931472
    %v636 = vlog2.pop %v605
    %v637 = vmul.f32 %v636, 0.6931472
    %v638 = vlog2.pop %v607
    %v639 = vmul.f32 %v638, 0.6931472
    %v640 = vlog2.pop %v609
    %v641 = vmul.f32 %v640, 0.6931472
    %v642 = vlog2.pop %v611
    %v643 = vmul.f32 %v642, 0.6931472
    %v644 = vlog2.pop %v613
    %v645 = vmul.f32 %v644, 0.6931472
    %v646 = vlog2.pop %v615
    %v647 = vmul.f32 %v646, 0.6931472
    %v648 = vlog2.pop %v617
    %v649 = vmul.f32 %v648, 0.6931472
    %v650 = vlog2.pop %v619
    %v651 = vmul.f32 %v650, 0.6931472
    %v652 = vlog2.pop %v621
    %v653 = vmul.f32 %v652, 0.6931472
    %v654 = vlog2.pop %v623
    %v655 = vmul.f32 %v654, 0.6931472
    %v656 = vsub.f32 %v544, %v625
    %v657 = vsub.f32 %v545, %v627
    %v658 = vsub.f32 %v546, %v629
    %v659 = vsub.f32 %v547, %v631
    %v660 = vsub.f32 %v548, %v633
    %v661 = vsub.f32 %v549, %v635
    %v662 = vsub.f32 %v550, %v637
    %v663 = vsub.f32 %v551, %v639
    %v664 = vsub.f32 %v552, %v641
    %v665 = vsub.f32 %v553, %v643
    %v666 = vsub.f32 %v554, %v645
    %v667 = vsub.f32 %v555, %v647
    %v668 = vsub.f32 %v556, %v649
    %v669 = vsub.f32 %v557, %v651
    %v670 = vsub.f32 %v558, %v653
    %v671 = vsub.f32 %v559, %v655
    %v672 = vmul.f32 %v656, 1.442695
    %v673 = vpow.pop %v672
    %v674 = vmul.f32 %v657, 1.442695
    %v675 = vpow.pop %v674
    %v676 = vmul.f32 %v658, 1.442695
    %v677 = vpow.pop %v676
    %v678 = vmul.f32 %v659, 1.442695
    %v679 = vpow.pop %v678
    %v680 = vmul.f32 %v660, 1.442695
    %v681 = vpow.pop %v680
    %v682 = vmul.f32 %v661, 1.442695
    %v683 = vpow.pop %v682
    %v684 = vmul.f32 %v662, 1.442695
    %v685 = vpow.pop %v684
    %v686 = vmul.f32 %v663, 1.442695
    %v687 = vpow.pop %v686
    %v688 = vmul.f32 %v664, 1.442695
    %v689 = vpow.pop %v688
    %v690 = vmul.f32 %v665, 1.442695
    %v691 = vpow.pop %v690
    %v692 = vmul.f32 %v666, 1.442695
    %v693 = vpow.pop %v692
    %v694 = vmul.f32 %v667, 1.442695
    %v695 = vpow.pop %v694
    %v696 = vmul.f32 %v668, 1.442695
    %v697 = vpow.pop %v696
    %v698 = vmul.f32 %v669, 1.442695
    %v699 = vpow.pop %v698
    %v700 = vmul.f32 %v670, 1.442695
    %v701 = vpow.pop %v700
    %v702 = vmul.f32 %v671, 1.442695
    %v703 = vpow.pop %v702
    %v704 = vadd.f32 %v673, %v675
    %v705 = vadd.f32 %v704, %v677
    %v706 = vadd.f32 %v705, %v679
    %v707 = vadd.f32 %v706, %v681
    %v708 = vadd.f32 %v707, %v683
    %v709 = vadd.f32 %v708, %v685
    %v710 = vadd.f32 %v709, %v687
    %v711 = vadd.f32 %v710, %v689
    %v712 = vadd.f32 %v711, %v691
    %v713 = vadd.f32 %v712, %v693
    %v714 = vadd.f32 %v713, %v695
    %v715 = vadd.f32 %v714, %v697
    %v716 = vadd.f32 %v715, %v699
    %v717 = vadd.f32 %v716, %v701
    %v718 = vadd.f32 %v717, %v703
    %v719 = vrot.slane %v718, 4
    %v720 = vadd.f32 %v718, %v719
    %v721 = vrot.slane %v720, 2
    %v722 = vadd.f32 %v720, %v721
    %v723 = vrot.slane %v722, 1
    %v724 = vadd.f32 %v722, %v723
    %v725 = vlog2.pop %v724
    %v726 = vmul.f32 %v725, 0.6931472
    %v727 = vsub.f32 %v656, %v726
    %v728 = vsub.f32 %v657, %v726
    %v729 = vsub.f32 %v658, %v726
    %v730 = vsub.f32 %v659, %v726
    %v731 = vsub.f32 %v660, %v726
    %v732 = vsub.f32 %v661, %v726
    %v733 = vsub.f32 %v662, %v726
    %v734 = vsub.f32 %v663, %v726
    %v735 = vsub.f32 %v664, %v726
    %v736 = vsub.f32 %v665, %v726
    %v737 = vsub.f32 %v666, %v726
    %v738 = vsub.f32 %v667, %v726
    %v739 = vsub.f32 %v668, %v726
    %v740 = vsub.f32 %v669, %v726
    %v741 = vsub.f32 %v670, %v726
    %v742 = vsub.f32 %v671, %v726
    %v743 = vmul.f32 %v727, 1.442695
    %v744 = vpow.pop %v743
    %v745 = vmul.f32 %v728, 1.442695
    %v746 = vpow.pop %v745
    %v747 = vmul.f32 %v729, 1.442695
    %v748 = vpow.pop %v747
    %v749 = vmul.f32 %v730, 1.442695
    %v750 = vpow.pop %v749
    %v751 = vmul.f32 %v731, 1.442695
    %v752 = vpow.pop %v751
    %v753 = vmul.f32 %v732, 1.442695
    %v754 = vpow.pop %v753
    %v755 = vmul.f32 %v733, 1.442695
    %v756 = vpow.pop %v755
    %v757 = vmul.f32 %v734, 1.442695
    %v758 = vpow.pop %v757
    %v759 = vmul.f32 %v735, 1.442695
    %v760 = vpow.pop %v759
    %v761 = vmul.f32 %v736, 1.442695
    %v762 = vpow.pop %v761
    %v763 = vmul.f32 %v737, 1.442695
    %v764 = vpow.pop %v763
    %v765 = vmul.f32 %v738, 1.442695
    %v766 = vpow.pop %v765
    %v767 = vmul.f32 %v739, 1.442695
    %v768 = vpow.pop %v767
    %v769 = vmul.f32 %v740, 1.442695
    %v770 = vpow.pop %v769
    %v771 = vmul.f32 %v741, 1.442695
    %v772 = vpow.pop %v771
    %v773 = vmul.f32 %v742, 1.442695
    %v774 = vpow.pop %v773
    %775 = vadd.xlane.f32.xlu0 %v744
    %v776 = vpop.xlane.xlu0 %775
    %777 = vadd.xlane.f32.xlu0 %v746
    %v778 = vpop.xlane.xlu0 %777
    %779 = vadd.xlane.f32.xlu0 %v748
    %v780 = vpop.xlane.xlu0 %779
    %781 = vadd.xlane.f32.xlu0 %v750
    %v782 = vpop.xlane.xlu0 %781
    %783 = vadd.xlane.f32.xlu0 %v752
    %v784 = vpop.xlane.xlu0 %783
    %785 = vadd.xlane.f32.xlu0 %v754
    %v786 = vpop.xlane.xlu0 %785
    %787 = vadd.xlane.f32.xlu0 %v756
    %v788 = vpop.xlane.xlu0 %787
    %789 = vadd.xlane.f32.xlu0 %v758
    %v790 = vpop.xlane.xlu0 %789
    %791 = vadd.xlane.f32.xlu0 %v760
    %v792 = vpop.xlane.xlu0 %791
    %793 = vadd.xlane.f32.xlu0 %v762
    %v794 = vpop.xlane.xlu0 %793
    %795 = vadd.xlane.f32.xlu0 %v764
    %v796 = vpop.xlane.xlu0 %795
    %797 = vadd.xlane.f32.xlu0 %v766
    %v798 = vpop.xlane.xlu0 %797
    %799 = vadd.xlane.f32.xlu0 %v768
    %v800 = vpop.xlane.xlu0 %799
    %801 = vadd.xlane.f32.xlu0 %v770
    %v802 = vpop.xlane.xlu0 %801
    %803 = vadd.xlane.f32.xlu0 %v772
    %v804 = vpop.xlane.xlu0 %803
    %805 = vadd.xlane.f32.xlu0 %v774
    %v806 = vpop.xlane.xlu0 %805
    %v807 = vlog2.pop %v776
    %v808 = vmul.f32 %v807, 0.6931472
    %v809 = vlog2.pop %v778
    %v810 = vmul.f32 %v809, 0.6931472
    %v811 = vlog2.pop %v780
    %v812 = vmul.f32 %v811, 0.6931472
    %v813 = vlog2.pop %v782
    %v814 = vmul.f32 %v813, 0.6931472
    %v815 = vlog2.pop %v784
    %v816 = vmul.f32 %v815, 0.6931472
    %v817 = vlog2.pop %v786
    %v818 = vmul.f32 %v817, 0.6931472
    %v819 = vlog2.pop %v788
    %v820 = vmul.f32 %v819, 0.6931472
    %v821 = vlog2.pop %v790
    %v822 = vmul.f32 %v821, 0.6931472
    %v823 = vlog2.pop %v792
    %v824 = vmul.f32 %v823, 0.6931472
    %v825 = vlog2.pop %v794
    %v826 = vmul.f32 %v825, 0.6931472
    %v827 = vlog2.pop %v796
    %v828 = vmul.f32 %v827, 0.6931472
    %v829 = vlog2.pop %v798
    %v830 = vmul.f32 %v829, 0.6931472
    %v831 = vlog2.pop %v800
    %v832 = vmul.f32 %v831, 0.6931472
    %v833 = vlog2.pop %v802
    %v834 = vmul.f32 %v833, 0.6931472
    %v835 = vlog2.pop %v804
    %v836 = vmul.f32 %v835, 0.6931472
    %v837 = vlog2.pop %v806
    %v838 = vmul.f32 %v837, 0.6931472
    %v839 = vsub.f32 %v727, %v808
    %v840 = vsub.f32 %v728, %v810
    %v841 = vsub.f32 %v729, %v812
    %v842 = vsub.f32 %v730, %v814
    %v843 = vsub.f32 %v731, %v816
    %v844 = vsub.f32 %v732, %v818
    %v845 = vsub.f32 %v733, %v820
    %v846 = vsub.f32 %v734, %v822
    %v847 = vsub.f32 %v735, %v824
    %v848 = vsub.f32 %v736, %v826
    %v849 = vsub.f32 %v737, %v828
    %v850 = vsub.f32 %v738, %v830
    %v851 = vsub.f32 %v739, %v832
    %v852 = vsub.f32 %v740, %v834
    %v853 = vsub.f32 %v741, %v836
    %v854 = vsub.f32 %v742, %v838
    %v855 = vmul.f32 %v839, 1.442695
    %v856 = vpow.pop %v855
    %v857 = vmul.f32 %v840, 1.442695
    %v858 = vpow.pop %v857
    %v859 = vmul.f32 %v841, 1.442695
    %v860 = vpow.pop %v859
    %v861 = vmul.f32 %v842, 1.442695
    %v862 = vpow.pop %v861
    %v863 = vmul.f32 %v843, 1.442695
    %v864 = vpow.pop %v863
    %v865 = vmul.f32 %v844, 1.442695
    %v866 = vpow.pop %v865
    %v867 = vmul.f32 %v845, 1.442695
    %v868 = vpow.pop %v867
    %v869 = vmul.f32 %v846, 1.442695
    %v870 = vpow.pop %v869
    %v871 = vmul.f32 %v847, 1.442695
    %v872 = vpow.pop %v871
    %v873 = vmul.f32 %v848, 1.442695
    %v874 = vpow.pop %v873
    %v875 = vmul.f32 %v849, 1.442695
    %v876 = vpow.pop %v875
    %v877 = vmul.f32 %v850, 1.442695
    %v878 = vpow.pop %v877
    %v879 = vmul.f32 %v851, 1.442695
    %v880 = vpow.pop %v879
    %v881 = vmul.f32 %v852, 1.442695
    %v882 = vpow.pop %v881
    %v883 = vmul.f32 %v853, 1.442695
    %v884 = vpow.pop %v883
    %v885 = vmul.f32 %v854, 1.442695
    %v886 = vpow.pop %v885
    %v887 = vadd.f32 %v856, %v858
    %v888 = vadd.f32 %v887, %v860
    %v889 = vadd.f32 %v888, %v862
    %v890 = vadd.f32 %v889, %v864
    %v891 = vadd.f32 %v890, %v866
    %v892 = vadd.f32 %v891, %v868
    %v893 = vadd.f32 %v892, %v870
    %v894 = vadd.f32 %v893, %v872
    %v895 = vadd.f32 %v894, %v874
    %v896 = vadd.f32 %v895, %v876
    %v897 = vadd.f32 %v896, %v878
    %v898 = vadd.f32 %v897, %v880
    %v899 = vadd.f32 %v898, %v882
    %v900 = vadd.f32 %v899, %v884
    %v901 = vadd.f32 %v900, %v886
    %v902 = vrot.slane %v901, 4
    %v903 = vadd.f32 %v901, %v902
    %v904 = vrot.slane %v903, 2
    %v905 = vadd.f32 %v903, %v904
    %v906 = vrot.slane %v905, 1
    %v907 = vadd.f32 %v905, %v906
    %v908 = vlog2.pop %v907
    %v909 = vmul.f32 %v908, 0.6931472
    %v910 = vsub.f32 %v839, %v909
    %v911 = vsub.f32 %v840, %v909
    %v912 = vsub.f32 %v841, %v909
    %v913 = vsub.f32 %v842, %v909
    %v914 = vsub.f32 %v843, %v909
    %v915 = vsub.f32 %v844, %v909
    %v916 = vsub.f32 %v845, %v909
    %v917 = vsub.f32 %v846, %v909
    %v918 = vsub.f32 %v847, %v909
    %v919 = vsub.f32 %v848, %v909
    %v920 = vsub.f32 %v849, %v909
    %v921 = vsub.f32 %v850, %v909
    %v922 = vsub.f32 %v851, %v909
    %v923 = vsub.f32 %v852, %v909
    %v924 = vsub.f32 %v853, %v909
    %v925 = vsub.f32 %v854, %v909
    %v926 = vmul.f32 %v910, 1.442695
    %v927 = vpow.pop %v926
    %v928 = vmul.f32 %v911, 1.442695
    %v929 = vpow.pop %v928
    %v930 = vmul.f32 %v912, 1.442695
    %v931 = vpow.pop %v930
    %v932 = vmul.f32 %v913, 1.442695
    %v933 = vpow.pop %v932
    %v934 = vmul.f32 %v914, 1.442695
    %v935 = vpow.pop %v934
    %v936 = vmul.f32 %v915, 1.442695
    %v937 = vpow.pop %v936
    %v938 = vmul.f32 %v916, 1.442695
    %v939 = vpow.pop %v938
    %v940 = vmul.f32 %v917, 1.442695
    %v941 = vpow.pop %v940
    %v942 = vmul.f32 %v918, 1.442695
    %v943 = vpow.pop %v942
    %v944 = vmul.f32 %v919, 1.442695
    %v945 = vpow.pop %v944
    %v946 = vmul.f32 %v920, 1.442695
    %v947 = vpow.pop %v946
    %v948 = vmul.f32 %v921, 1.442695
    %v949 = vpow.pop %v948
    %v950 = vmul.f32 %v922, 1.442695
    %v951 = vpow.pop %v950
    %v952 = vmul.f32 %v923, 1.442695
    %v953 = vpow.pop %v952
    %v954 = vmul.f32 %v924, 1.442695
    %v955 = vpow.pop %v954
    %v956 = vmul.f32 %v925, 1.442695
    %v957 = vpow.pop %v956
    %958 = vadd.xlane.f32.xlu0 %v927
    %v959 = vpop.xlane.xlu0 %958
    %960 = vadd.xlane.f32.xlu0 %v929
    %v961 = vpop.xlane.xlu0 %960
    %962 = vadd.xlane.f32.xlu0 %v931
    %v963 = vpop.xlane.xlu0 %962
    %964 = vadd.xlane.f32.xlu0 %v933
    %v965 = vpop.xlane.xlu0 %964
    %966 = vadd.xlane.f32.xlu0 %v935
    %v967 = vpop.xlane.xlu0 %966
    %968 = vadd.xlane.f32.xlu0 %v937
    %v969 = vpop.xlane.xlu0 %968
    %970 = vadd.xlane.f32.xlu0 %v939
    %v971 = vpop.xlane.xlu0 %970
    %972 = vadd.xlane.f32.xlu0 %v941
    %v973 = vpop.xlane.xlu0 %972
    %974 = vadd.xlane.f32.xlu0 %v943
    %v975 = vpop.xlane.xlu0 %974
    %976 = vadd.xlane.f32.xlu0 %v945
    %v977 = vpop.xlane.xlu0 %976
    %978 = vadd.xlane.f32.xlu0 %v947
    %v979 = vpop.xlane.xlu0 %978
    %980 = vadd.xlane.f32.xlu0 %v949
    %v981 = vpop.xlane.xlu0 %980
    %982 = vadd.xlane.f32.xlu0 %v951
    %v983 = vpop.xlane.xlu0 %982
    %984 = vadd.xlane.f32.xlu0 %v953
    %v985 = vpop.xlane.xlu0 %984
    %986 = vadd.xlane.f32.xlu0 %v955
    %v987 = vpop.xlane.xlu0 %986
    %988 = vadd.xlane.f32.xlu0 %v957
    %v989 = vpop.xlane.xlu0 %988
    %v990 = vlog2.pop %v959
    %v991 = vmul.f32 %v990, 0.6931472
    %v992 = vlog2.pop %v961
    %v993 = vmul.f32 %v992, 0.6931472
    %v994 = vlog2.pop %v963
    %v995 = vmul.f32 %v994, 0.6931472
    %v996 = vlog2.pop %v965
    %v997 = vmul.f32 %v996, 0.6931472
    %v998 = vlog2.pop %v967
    %v999 = vmul.f32 %v998, 0.6931472
    %v1000 = vlog2.pop %v969
    %v1001 = vmul.f32 %v1000, 0.6931472
    %v1002 = vlog2.pop %v971
    %v1003 = vmul.f32 %v1002, 0.6931472
    %v1004 = vlog2.pop %v973
    %v1005 = vmul.f32 %v1004, 0.6931472
    %v1006 = vlog2.pop %v975
    %v1007 = vmul.f32 %v1006, 0.6931472
    %v1008 = vlog2.pop %v977
    %v1009 = vmul.f32 %v1008, 0.6931472
    %v1010 = vlog2.pop %v979
    %v1011 = vmul.f32 %v1010, 0.6931472
    %v1012 = vlog2.pop %v981
    %v1013 = vmul.f32 %v1012, 0.6931472
    %v1014 = vlog2.pop %v983
    %v1015 = vmul.f32 %v1014, 0.6931472
    %v1016 = vlog2.pop %v985
    %v1017 = vmul.f32 %v1016, 0.6931472
    %v1018 = vlog2.pop %v987
    %v1019 = vmul.f32 %v1018, 0.6931472
    %v1020 = vlog2.pop %v989
    %v1021 = vmul.f32 %v1020, 0.6931472
    %v1022 = vsub.f32 %v910, %v991
    %v1023 = vsub.f32 %v911, %v993
    %v1024 = vsub.f32 %v912, %v995
    %v1025 = vsub.f32 %v913, %v997
    %v1026 = vsub.f32 %v914, %v999
    %v1027 = vsub.f32 %v915, %v1001
    %v1028 = vsub.f32 %v916, %v1003
    %v1029 = vsub.f32 %v917, %v1005
    %v1030 = vsub.f32 %v918, %v1007
    %v1031 = vsub.f32 %v919, %v1009
    %v1032 = vsub.f32 %v920, %v1011
    %v1033 = vsub.f32 %v921, %v1013
    %v1034 = vsub.f32 %v922, %v1015
    %v1035 = vsub.f32 %v923, %v1017
    %v1036 = vsub.f32 %v924, %v1019
    %v1037 = vsub.f32 %v925, %v1021
    %v1038 = vmul.f32 %v1022, 1.442695
    %v1039 = vpow.pop %v1038
    %v1040 = vmul.f32 %v1023, 1.442695
    %v1041 = vpow.pop %v1040
    %v1042 = vmul.f32 %v1024, 1.442695
    %v1043 = vpow.pop %v1042
    %v1044 = vmul.f32 %v1025, 1.442695
    %v1045 = vpow.pop %v1044
    %v1046 = vmul.f32 %v1026, 1.442695
    %v1047 = vpow.pop %v1046
    %v1048 = vmul.f32 %v1027, 1.442695
    %v1049 = vpow.pop %v1048
    %v1050 = vmul.f32 %v1028, 1.442695
    %v1051 = vpow.pop %v1050
    %v1052 = vmul.f32 %v1029, 1.442695
    %v1053 = vpow.pop %v1052
    %v1054 = vmul.f32 %v1030, 1.442695
    %v1055 = vpow.pop %v1054
    %v1056 = vmul.f32 %v1031, 1.442695
    %v1057 = vpow.pop %v1056
    %v1058 = vmul.f32 %v1032, 1.442695
    %v1059 = vpow.pop %v1058
    %v1060 = vmul.f32 %v1033, 1.442695
    %v1061 = vpow.pop %v1060
    %v1062 = vmul.f32 %v1034, 1.442695
    %v1063 = vpow.pop %v1062
    %v1064 = vmul.f32 %v1035, 1.442695
    %v1065 = vpow.pop %v1064
    %v1066 = vmul.f32 %v1036, 1.442695
    %v1067 = vpow.pop %v1066
    %v1068 = vmul.f32 %v1037, 1.442695
    %v1069 = vpow.pop %v1068
    %v1070 = vadd.f32 %v1039, %v1041
    %v1071 = vadd.f32 %v1070, %v1043
    %v1072 = vadd.f32 %v1071, %v1045
    %v1073 = vadd.f32 %v1072, %v1047
    %v1074 = vadd.f32 %v1073, %v1049
    %v1075 = vadd.f32 %v1074, %v1051
    %v1076 = vadd.f32 %v1075, %v1053
    %v1077 = vadd.f32 %v1076, %v1055
    %v1078 = vadd.f32 %v1077, %v1057
    %v1079 = vadd.f32 %v1078, %v1059
    %v1080 = vadd.f32 %v1079, %v1061
    %v1081 = vadd.f32 %v1080, %v1063
    %v1082 = vadd.f32 %v1081, %v1065
    %v1083 = vadd.f32 %v1082, %v1067
    %v1084 = vadd.f32 %v1083, %v1069
    %v1085 = vrot.slane %v1084, 4
    %v1086 = vadd.f32 %v1084, %v1085
    %v1087 = vrot.slane %v1086, 2
    %v1088 = vadd.f32 %v1086, %v1087
    %v1089 = vrot.slane %v1088, 1
    %v1090 = vadd.f32 %v1088, %v1089
    %v1091 = vlog2.pop %v1090
    %v1092 = vmul.f32 %v1091, 0.6931472
    %v1093 = vsub.f32 %v1022, %v1092
    %v1094 = vsub.f32 %v1023, %v1092
    %v1095 = vsub.f32 %v1024, %v1092
    %v1096 = vsub.f32 %v1025, %v1092
    %v1097 = vsub.f32 %v1026, %v1092
    %v1098 = vsub.f32 %v1027, %v1092
    %v1099 = vsub.f32 %v1028, %v1092
    %v1100 = vsub.f32 %v1029, %v1092
    %v1101 = vsub.f32 %v1030, %v1092
    %v1102 = vsub.f32 %v1031, %v1092
    %v1103 = vsub.f32 %v1032, %v1092
    %v1104 = vsub.f32 %v1033, %v1092
    %v1105 = vsub.f32 %v1034, %v1092
    %v1106 = vsub.f32 %v1035, %v1092
    %v1107 = vsub.f32 %v1036, %v1092
    %v1108 = vsub.f32 %v1037, %v1092
    %v1109 = vmul.f32 %v1093, 1.442695
    %v1110 = vpow.pop %v1109
    %v1111 = vmul.f32 %v1094, 1.442695
    %v1112 = vpow.pop %v1111
    %v1113 = vmul.f32 %v1095, 1.442695
    %v1114 = vpow.pop %v1113
    %v1115 = vmul.f32 %v1096, 1.442695
    %v1116 = vpow.pop %v1115
    %v1117 = vmul.f32 %v1097, 1.442695
    %v1118 = vpow.pop %v1117
    %v1119 = vmul.f32 %v1098, 1.442695
    %v1120 = vpow.pop %v1119
    %v1121 = vmul.f32 %v1099, 1.442695
    %v1122 = vpow.pop %v1121
    %v1123 = vmul.f32 %v1100, 1.442695
    %v1124 = vpow.pop %v1123
    %v1125 = vmul.f32 %v1101, 1.442695
    %v1126 = vpow.pop %v1125
    %v1127 = vmul.f32 %v1102, 1.442695
    %v1128 = vpow.pop %v1127
    %v1129 = vmul.f32 %v1103, 1.442695
    %v1130 = vpow.pop %v1129
    %v1131 = vmul.f32 %v1104, 1.442695
    %v1132 = vpow.pop %v1131
    %v1133 = vmul.f32 %v1105, 1.442695
    %v1134 = vpow.pop %v1133
    %v1135 = vmul.f32 %v1106, 1.442695
    %v1136 = vpow.pop %v1135
    %v1137 = vmul.f32 %v1107, 1.442695
    %v1138 = vpow.pop %v1137
    %v1139 = vmul.f32 %v1108, 1.442695
    %v1140 = vpow.pop %v1139
    %1141 = vadd.xlane.f32.xlu0 %v1110
    %v1142 = vpop.xlane.xlu0 %1141
    %1143 = vadd.xlane.f32.xlu0 %v1112
    %v1144 = vpop.xlane.xlu0 %1143
    %1145 = vadd.xlane.f32.xlu0 %v1114
    %v1146 = vpop.xlane.xlu0 %1145
    %1147 = vadd.xlane.f32.xlu0 %v1116
    %v1148 = vpop.xlane.xlu0 %1147
    %1149 = vadd.xlane.f32.xlu0 %v1118
    %v1150 = vpop.xlane.xlu0 %1149
    %1151 = vadd.xlane.f32.xlu0 %v1120
    %v1152 = vpop.xlane.xlu0 %1151
    %1153 = vadd.xlane.f32.xlu0 %v1122
    %v1154 = vpop.xlane.xlu0 %1153
    %1155 = vadd.xlane.f32.xlu0 %v1124
    %v1156 = vpop.xlane.xlu0 %1155
    %1157 = vadd.xlane.f32.xlu0 %v1126
    %v1158 = vpop.xlane.xlu0 %1157
    %1159 = vadd.xlane.f32.xlu0 %v1128
    %v1160 = vpop.xlane.xlu0 %1159
    %1161 = vadd.xlane.f32.xlu0 %v1130
    %v1162 = vpop.xlane.xlu0 %1161
    %1163 = vadd.xlane.f32.xlu0 %v1132
    %v1164 = vpop.xlane.xlu0 %1163
    %1165 = vadd.xlane.f32.xlu0 %v1134
    %v1166 = vpop.xlane.xlu0 %1165
    %1167 = vadd.xlane.f32.xlu0 %v1136
    %v1168 = vpop.xlane.xlu0 %1167
    %1169 = vadd.xlane.f32.xlu0 %v1138
    %v1170 = vpop.xlane.xlu0 %1169
    %1171 = vadd.xlane.f32.xlu0 %v1140
    %v1172 = vpop.xlane.xlu0 %1171
    %v1173 = vlog2.pop %v1142
    %v1174 = vmul.f32 %v1173, 0.6931472
    %v1175 = vlog2.pop %v1144
    %v1176 = vmul.f32 %v1175, 0.6931472
    %v1177 = vlog2.pop %v1146
    %v1178 = vmul.f32 %v1177, 0.6931472
    %v1179 = vlog2.pop %v1148
    %v1180 = vmul.f32 %v1179, 0.6931472
    %v1181 = vlog2.pop %v1150
    %v1182 = vmul.f32 %v1181, 0.6931472
    %v1183 = vlog2.pop %v1152
    %v1184 = vmul.f32 %v1183, 0.6931472
    %v1185 = vlog2.pop %v1154
    %v1186 = vmul.f32 %v1185, 0.6931472
    %v1187 = vlog2.pop %v1156
    %v1188 = vmul.f32 %v1187, 0.6931472
    %v1189 = vlog2.pop %v1158
    %v1190 = vmul.f32 %v1189, 0.6931472
    %v1191 = vlog2.pop %v1160
    %v1192 = vmul.f32 %v1191, 0.6931472
    %v1193 = vlog2.pop %v1162
    %v1194 = vmul.f32 %v1193, 0.6931472
    %v1195 = vlog2.pop %v1164
    %v1196 = vmul.f32 %v1195, 0.6931472
    %v1197 = vlog2.pop %v1166
    %v1198 = vmul.f32 %v1197, 0.6931472
    %v1199 = vlog2.pop %v1168
    %v1200 = vmul.f32 %v1199, 0.6931472
    %v1201 = vlog2.pop %v1170
    %v1202 = vmul.f32 %v1201, 0.6931472
    %v1203 = vlog2.pop %v1172
    %v1204 = vmul.f32 %v1203, 0.6931472
    %v1205 = vsub.f32 %v1093, %v1174
    %v1206 = vsub.f32 %v1094, %v1176
    %v1207 = vsub.f32 %v1095, %v1178
    %v1208 = vsub.f32 %v1096, %v1180
    %v1209 = vsub.f32 %v1097, %v1182
    %v1210 = vsub.f32 %v1098, %v1184
    %v1211 = vsub.f32 %v1099, %v1186
    %v1212 = vsub.f32 %v1100, %v1188
    %v1213 = vsub.f32 %v1101, %v1190
    %v1214 = vsub.f32 %v1102, %v1192
    %v1215 = vsub.f32 %v1103, %v1194
    %v1216 = vsub.f32 %v1104, %v1196
    %v1217 = vsub.f32 %v1105, %v1198
    %v1218 = vsub.f32 %v1106, %v1200
    %v1219 = vsub.f32 %v1107, %v1202
    %v1220 = vsub.f32 %v1108, %v1204
    %v1221 = vmul.f32 %v1205, 1.442695
    %v1222 = vpow.pop %v1221
    %v1223 = vmul.f32 %v1206, 1.442695
    %v1224 = vpow.pop %v1223
    %v1225 = vmul.f32 %v1207, 1.442695
    %v1226 = vpow.pop %v1225
    %v1227 = vmul.f32 %v1208, 1.442695
    %v1228 = vpow.pop %v1227
    %v1229 = vmul.f32 %v1209, 1.442695
    %v1230 = vpow.pop %v1229
    %v1231 = vmul.f32 %v1210, 1.442695
    %v1232 = vpow.pop %v1231
    %v1233 = vmul.f32 %v1211, 1.442695
    %v1234 = vpow.pop %v1233
    %v1235 = vmul.f32 %v1212, 1.442695
    %v1236 = vpow.pop %v1235
    %v1237 = vmul.f32 %v1213, 1.442695
    %v1238 = vpow.pop %v1237
    %v1239 = vmul.f32 %v1214, 1.442695
    %v1240 = vpow.pop %v1239
    %v1241 = vmul.f32 %v1215, 1.442695
    %v1242 = vpow.pop %v1241
    %v1243 = vmul.f32 %v1216, 1.442695
    %v1244 = vpow.pop %v1243
    %v1245 = vmul.f32 %v1217, 1.442695
    %v1246 = vpow.pop %v1245
    %v1247 = vmul.f32 %v1218, 1.442695
    %v1248 = vpow.pop %v1247
    %v1249 = vmul.f32 %v1219, 1.442695
    %v1250 = vpow.pop %v1249
    %v1251 = vmul.f32 %v1220, 1.442695
    %v1252 = vpow.pop %v1251
    %v1253 = vadd.f32 %v1222, %v1224
    %v1254 = vadd.f32 %v1253, %v1226
    %v1255 = vadd.f32 %v1254, %v1228
    %v1256 = vadd.f32 %v1255, %v1230
    %v1257 = vadd.f32 %v1256, %v1232
    %v1258 = vadd.f32 %v1257, %v1234
    %v1259 = vadd.f32 %v1258, %v1236
    %v1260 = vadd.f32 %v1259, %v1238
    %v1261 = vadd.f32 %v1260, %v1240
    %v1262 = vadd.f32 %v1261, %v1242
    %v1263 = vadd.f32 %v1262, %v1244
    %v1264 = vadd.f32 %v1263, %v1246
    %v1265 = vadd.f32 %v1264, %v1248
    %v1266 = vadd.f32 %v1265, %v1250
    %v1267 = vadd.f32 %v1266, %v1252
    %v1268 = vrot.slane %v1267, 4
    %v1269 = vadd.f32 %v1267, %v1268
    %v1270 = vrot.slane %v1269, 2
    %v1271 = vadd.f32 %v1269, %v1270
    %v1272 = vrot.slane %v1271, 1
    %v1273 = vadd.f32 %v1271, %v1272
    %v1274 = vlog2.pop %v1273
    %v1275 = vmul.f32 %v1274, 0.6931472
    %v1276 = vsub.f32 %v1205, %v1275
    %v1277 = vsub.f32 %v1206, %v1275
    %v1278 = vsub.f32 %v1207, %v1275
    %v1279 = vsub.f32 %v1208, %v1275
    %v1280 = vsub.f32 %v1209, %v1275
    %v1281 = vsub.f32 %v1210, %v1275
    %v1282 = vsub.f32 %v1211, %v1275
    %v1283 = vsub.f32 %v1212, %v1275
    %v1284 = vsub.f32 %v1213, %v1275
    %v1285 = vsub.f32 %v1214, %v1275
    %v1286 = vsub.f32 %v1215, %v1275
    %v1287 = vsub.f32 %v1216, %v1275
    %v1288 = vsub.f32 %v1217, %v1275
    %v1289 = vsub.f32 %v1218, %v1275
    %v1290 = vsub.f32 %v1219, %v1275
    %v1291 = vsub.f32 %v1220, %v1275
    %v1292 = vmul.f32 %v1276, 1.442695
    %v1293 = vpow.pop %v1292
    %v1294 = vmul.f32 %v1277, 1.442695
    %v1295 = vpow.pop %v1294
    %v1296 = vmul.f32 %v1278, 1.442695
    %v1297 = vpow.pop %v1296
    %v1298 = vmul.f32 %v1279, 1.442695
    %v1299 = vpow.pop %v1298
    %v1300 = vmul.f32 %v1280, 1.442695
    %v1301 = vpow.pop %v1300
    %v1302 = vmul.f32 %v1281, 1.442695
    %v1303 = vpow.pop %v1302
    %v1304 = vmul.f32 %v1282, 1.442695
    %v1305 = vpow.pop %v1304
    %v1306 = vmul.f32 %v1283, 1.442695
    %v1307 = vpow.pop %v1306
    %v1308 = vmul.f32 %v1284, 1.442695
    %v1309 = vpow.pop %v1308
    %v1310 = vmul.f32 %v1285, 1.442695
    %v1311 = vpow.pop %v1310
    %v1312 = vmul.f32 %v1286, 1.442695
    %v1313 = vpow.pop %v1312
    %v1314 = vmul.f32 %v1287, 1.442695
    %v1315 = vpow.pop %v1314
    %v1316 = vmul.f32 %v1288, 1.442695
    %v1317 = vpow.pop %v1316
    %v1318 = vmul.f32 %v1289, 1.442695
    %v1319 = vpow.pop %v1318
    %v1320 = vmul.f32 %v1290, 1.442695
    %v1321 = vpow.pop %v1320
    %v1322 = vmul.f32 %v1291, 1.442695
    %v1323 = vpow.pop %v1322
    %1324 = vadd.xlane.f32.xlu0 %v1293
    %v1325 = vpop.xlane.xlu0 %1324
    %1326 = vadd.xlane.f32.xlu0 %v1295
    %v1327 = vpop.xlane.xlu0 %1326
    %1328 = vadd.xlane.f32.xlu0 %v1297
    %v1329 = vpop.xlane.xlu0 %1328
    %1330 = vadd.xlane.f32.xlu0 %v1299
    %v1331 = vpop.xlane.xlu0 %1330
    %1332 = vadd.xlane.f32.xlu0 %v1301
    %v1333 = vpop.xlane.xlu0 %1332
    %1334 = vadd.xlane.f32.xlu0 %v1303
    %v1335 = vpop.xlane.xlu0 %1334
    %1336 = vadd.xlane.f32.xlu0 %v1305
    %v1337 = vpop.xlane.xlu0 %1336
    %1338 = vadd.xlane.f32.xlu0 %v1307
    %v1339 = vpop.xlane.xlu0 %1338
    %1340 = vadd.xlane.f32.xlu0 %v1309
    %v1341 = vpop.xlane.xlu0 %1340
    %1342 = vadd.xlane.f32.xlu0 %v1311
    %v1343 = vpop.xlane.xlu0 %1342
    %1344 = vadd.xlane.f32.xlu0 %v1313
    %v1345 = vpop.xlane.xlu0 %1344
    %1346 = vadd.xlane.f32.xlu0 %v1315
    %v1347 = vpop.xlane.xlu0 %1346
    %1348 = vadd.xlane.f32.xlu0 %v1317
    %v1349 = vpop.xlane.xlu0 %1348
    %1350 = vadd.xlane.f32.xlu0 %v1319
    %v1351 = vpop.xlane.xlu0 %1350
    %1352 = vadd.xlane.f32.xlu0 %v1321
    %v1353 = vpop.xlane.xlu0 %1352
    %1354 = vadd.xlane.f32.xlu0 %v1323
    %v1355 = vpop.xlane.xlu0 %1354
    %v1356 = vlog2.pop %v1325
    %v1357 = vmul.f32 %v1356, 0.6931472
    %v1358 = vlog2.pop %v1327
    %v1359 = vmul.f32 %v1358, 0.6931472
    %v1360 = vlog2.pop %v1329
    %v1361 = vmul.f32 %v1360, 0.6931472
    %v1362 = vlog2.pop %v1331
    %v1363 = vmul.f32 %v1362, 0.6931472
    %v1364 = vlog2.pop %v1333
    %v1365 = vmul.f32 %v1364, 0.6931472
    %v1366 = vlog2.pop %v1335
    %v1367 = vmul.f32 %v1366, 0.6931472
    %v1368 = vlog2.pop %v1337
    %v1369 = vmul.f32 %v1368, 0.6931472
    %v1370 = vlog2.pop %v1339
    %v1371 = vmul.f32 %v1370, 0.6931472
    %v1372 = vlog2.pop %v1341
    %v1373 = vmul.f32 %v1372, 0.6931472
    %v1374 = vlog2.pop %v1343
    %v1375 = vmul.f32 %v1374, 0.6931472
    %v1376 = vlog2.pop %v1345
    %v1377 = vmul.f32 %v1376, 0.6931472
    %v1378 = vlog2.pop %v1347
    %v1379 = vmul.f32 %v1378, 0.6931472
    %v1380 = vlog2.pop %v1349
    %v1381 = vmul.f32 %v1380, 0.6931472
    %v1382 = vlog2.pop %v1351
    %v1383 = vmul.f32 %v1382, 0.6931472
    %v1384 = vlog2.pop %v1353
    %v1385 = vmul.f32 %v1384, 0.6931472
    %v1386 = vlog2.pop %v1355
    %v1387 = vmul.f32 %v1386, 0.6931472
    %v1388 = vsub.f32 %v1276, %v1357
    %v1389 = vsub.f32 %v1277, %v1359
    %v1390 = vsub.f32 %v1278, %v1361
    %v1391 = vsub.f32 %v1279, %v1363
    %v1392 = vsub.f32 %v1280, %v1365
    %v1393 = vsub.f32 %v1281, %v1367
    %v1394 = vsub.f32 %v1282, %v1369
    %v1395 = vsub.f32 %v1283, %v1371
    %v1396 = vsub.f32 %v1284, %v1373
    %v1397 = vsub.f32 %v1285, %v1375
    %v1398 = vsub.f32 %v1286, %v1377
    %v1399 = vsub.f32 %v1287, %v1379
    %v1400 = vsub.f32 %v1288, %v1381
    %v1401 = vsub.f32 %v1289, %v1383
    %v1402 = vsub.f32 %v1290, %v1385
    %v1403 = vsub.f32 %v1291, %v1387
    %v1404 = vmul.f32 %v1388, 1.442695
    %v1405 = vpow.pop %v1404
    %v1406 = vmul.f32 %v1389, 1.442695
    %v1407 = vpow.pop %v1406
    %v1408 = vmul.f32 %v1390, 1.442695
    %v1409 = vpow.pop %v1408
    %v1410 = vmul.f32 %v1391, 1.442695
    %v1411 = vpow.pop %v1410
    %v1412 = vmul.f32 %v1392, 1.442695
    %v1413 = vpow.pop %v1412
    %v1414 = vmul.f32 %v1393, 1.442695
    %v1415 = vpow.pop %v1414
    %v1416 = vmul.f32 %v1394, 1.442695
    %v1417 = vpow.pop %v1416
    %v1418 = vmul.f32 %v1395, 1.442695
    %v1419 = vpow.pop %v1418
    %v1420 = vmul.f32 %v1396, 1.442695
    %v1421 = vpow.pop %v1420
    %v1422 = vmul.f32 %v1397, 1.442695
    %v1423 = vpow.pop %v1422
    %v1424 = vmul.f32 %v1398, 1.442695
    %v1425 = vpow.pop %v1424
    %v1426 = vmul.f32 %v1399, 1.442695
    %v1427 = vpow.pop %v1426
    %v1428 = vmul.f32 %v1400, 1.442695
    %v1429 = vpow.pop %v1428
    %v1430 = vmul.f32 %v1401, 1.442695
    %v1431 = vpow.pop %v1430
    %v1432 = vmul.f32 %v1402, 1.442695
    %v1433 = vpow.pop %v1432
    %v1434 = vmul.f32 %v1403, 1.442695
    %v1435 = vpow.pop %v1434
    %v1436 = vadd.f32 %v1405, %v1407
    %v1437 = vadd.f32 %v1436, %v1409
    %v1438 = vadd.f32 %v1437, %v1411
    %v1439 = vadd.f32 %v1438, %v1413
    %v1440 = vadd.f32 %v1439, %v1415
    %v1441 = vadd.f32 %v1440, %v1417
    %v1442 = vadd.f32 %v1441, %v1419
    %v1443 = vadd.f32 %v1442, %v1421
    %v1444 = vadd.f32 %v1443, %v1423
    %v1445 = vadd.f32 %v1444, %v1425
    %v1446 = vadd.f32 %v1445, %v1427
    %v1447 = vadd.f32 %v1446, %v1429
    %v1448 = vadd.f32 %v1447, %v1431
    %v1449 = vadd.f32 %v1448, %v1433
    %v1450 = vadd.f32 %v1449, %v1435
    %v1451 = vrot.slane %v1450, 4
    %v1452 = vadd.f32 %v1450, %v1451
    %v1453 = vrot.slane %v1452, 2
    %v1454 = vadd.f32 %v1452, %v1453
    %v1455 = vrot.slane %v1454, 1
    %v1456 = vadd.f32 %v1454, %v1455
    %v1457 = vlog2.pop %v1456
    %v1458 = vmul.f32 %v1457, 0.6931472
    %v1459 = vsub.f32 %v1388, %v1458
    %v1460 = vsub.f32 %v1389, %v1458
    %v1461 = vsub.f32 %v1390, %v1458
    %v1462 = vsub.f32 %v1391, %v1458
    %v1463 = vsub.f32 %v1392, %v1458
    %v1464 = vsub.f32 %v1393, %v1458
    %v1465 = vsub.f32 %v1394, %v1458
    %v1466 = vsub.f32 %v1395, %v1458
    %v1467 = vsub.f32 %v1396, %v1458
    %v1468 = vsub.f32 %v1397, %v1458
    %v1469 = vsub.f32 %v1398, %v1458
    %v1470 = vsub.f32 %v1399, %v1458
    %v1471 = vsub.f32 %v1400, %v1458
    %v1472 = vsub.f32 %v1401, %v1458
    %v1473 = vsub.f32 %v1402, %v1458
    %v1474 = vsub.f32 %v1403, %v1458
    %v1475 = vmul.f32 %v1459, 1.442695
    %v1476 = vpow.pop %v1475
    %v1477 = vmul.f32 %v1460, 1.442695
    %v1478 = vpow.pop %v1477
    %v1479 = vmul.f32 %v1461, 1.442695
    %v1480 = vpow.pop %v1479
    %v1481 = vmul.f32 %v1462, 1.442695
    %v1482 = vpow.pop %v1481
    %v1483 = vmul.f32 %v1463, 1.442695
    %v1484 = vpow.pop %v1483
    %v1485 = vmul.f32 %v1464, 1.442695
    %v1486 = vpow.pop %v1485
    %v1487 = vmul.f32 %v1465, 1.442695
    %v1488 = vpow.pop %v1487
    %v1489 = vmul.f32 %v1466, 1.442695
    %v1490 = vpow.pop %v1489
    %v1491 = vmul.f32 %v1467, 1.442695
    %v1492 = vpow.pop %v1491
    %v1493 = vmul.f32 %v1468, 1.442695
    %v1494 = vpow.pop %v1493
    %v1495 = vmul.f32 %v1469, 1.442695
    %v1496 = vpow.pop %v1495
    %v1497 = vmul.f32 %v1470, 1.442695
    %v1498 = vpow.pop %v1497
    %v1499 = vmul.f32 %v1471, 1.442695
    %v1500 = vpow.pop %v1499
    %v1501 = vmul.f32 %v1472, 1.442695
    %v1502 = vpow.pop %v1501
    %v1503 = vmul.f32 %v1473, 1.442695
    %v1504 = vpow.pop %v1503
    %v1505 = vmul.f32 %v1474, 1.442695
    %v1506 = vpow.pop %v1505
    %1507 = vadd.xlane.f32.xlu0 %v1476
    %v1508 = vpop.xlane.xlu0 %1507
    %1509 = vadd.xlane.f32.xlu0 %v1478
    %v1510 = vpop.xlane.xlu0 %1509
    %1511 = vadd.xlane.f32.xlu0 %v1480
    %v1512 = vpop.xlane.xlu0 %1511
    %1513 = vadd.xlane.f32.xlu0 %v1482
    %v1514 = vpop.xlane.xlu0 %1513
    %1515 = vadd.xlane.f32.xlu0 %v1484
    %v1516 = vpop.xlane.xlu0 %1515
    %1517 = vadd.xlane.f32.xlu0 %v1486
    %v1518 = vpop.xlane.xlu0 %1517
    %1519 = vadd.xlane.f32.xlu0 %v1488
    %v1520 = vpop.xlane.xlu0 %1519
    %1521 = vadd.xlane.f32.xlu0 %v1490
    %v1522 = vpop.xlane.xlu0 %1521
    %1523 = vadd.xlane.f32.xlu0 %v1492
    %v1524 = vpop.xlane.xlu0 %1523
    %1525 = vadd.xlane.f32.xlu0 %v1494
    %v1526 = vpop.xlane.xlu0 %1525
    %1527 = vadd.xlane.f32.xlu0 %v1496
    %v1528 = vpop.xlane.xlu0 %1527
    %1529 = vadd.xlane.f32.xlu0 %v1498
    %v1530 = vpop.xlane.xlu0 %1529
    %1531 = vadd.xlane.f32.xlu0 %v1500
    %v1532 = vpop.xlane.xlu0 %1531
    %1533 = vadd.xlane.f32.xlu0 %v1502
    %v1534 = vpop.xlane.xlu0 %1533
    %1535 = vadd.xlane.f32.xlu0 %v1504
    %v1536 = vpop.xlane.xlu0 %1535
    %1537 = vadd.xlane.f32.xlu0 %v1506
    %v1538 = vpop.xlane.xlu0 %1537
    %v1539 = vlog2.pop %v1508
    %v1540 = vmul.f32 %v1539, 0.6931472
    %v1541 = vlog2.pop %v1510
    %v1542 = vmul.f32 %v1541, 0.6931472
    %v1543 = vlog2.pop %v1512
    %v1544 = vmul.f32 %v1543, 0.6931472
    %v1545 = vlog2.pop %v1514
    %v1546 = vmul.f32 %v1545, 0.6931472
    %v1547 = vlog2.pop %v1516
    %v1548 = vmul.f32 %v1547, 0.6931472
    %v1549 = vlog2.pop %v1518
    %v1550 = vmul.f32 %v1549, 0.6931472
    %v1551 = vlog2.pop %v1520
    %v1552 = vmul.f32 %v1551, 0.6931472
    %v1553 = vlog2.pop %v1522
    %v1554 = vmul.f32 %v1553, 0.6931472
    %v1555 = vlog2.pop %v1524
    %v1556 = vmul.f32 %v1555, 0.6931472
    %v1557 = vlog2.pop %v1526
    %v1558 = vmul.f32 %v1557, 0.6931472
    %v1559 = vlog2.pop %v1528
    %v1560 = vmul.f32 %v1559, 0.6931472
    %v1561 = vlog2.pop %v1530
    %v1562 = vmul.f32 %v1561, 0.6931472
    %v1563 = vlog2.pop %v1532
    %v1564 = vmul.f32 %v1563, 0.6931472
    %v1565 = vlog2.pop %v1534
    %v1566 = vmul.f32 %v1565, 0.6931472
    %v1567 = vlog2.pop %v1536
    %v1568 = vmul.f32 %v1567, 0.6931472
    %v1569 = vlog2.pop %v1538
    %v1570 = vmul.f32 %v1569, 0.6931472
    %v1571 = vsub.f32 %v1459, %v1540
    %v1572 = vsub.f32 %v1460, %v1542
    %v1573 = vsub.f32 %v1461, %v1544
    %v1574 = vsub.f32 %v1462, %v1546
    %v1575 = vsub.f32 %v1463, %v1548
    %v1576 = vsub.f32 %v1464, %v1550
    %v1577 = vsub.f32 %v1465, %v1552
    %v1578 = vsub.f32 %v1466, %v1554
    %v1579 = vsub.f32 %v1467, %v1556
    %v1580 = vsub.f32 %v1468, %v1558
    %v1581 = vsub.f32 %v1469, %v1560
    %v1582 = vsub.f32 %v1470, %v1562
    %v1583 = vsub.f32 %v1471, %v1564
    %v1584 = vsub.f32 %v1472, %v1566
    %v1585 = vsub.f32 %v1473, %v1568
    %v1586 = vsub.f32 %v1474, %v1570
    %v1587 = vmul.f32 %v1571, 1.442695
    %v1588 = vpow.pop %v1587
    %v1589 = vmul.f32 %v1572, 1.442695
    %v1590 = vpow.pop %v1589
    %v1591 = vmul.f32 %v1573, 1.442695
    %v1592 = vpow.pop %v1591
    %v1593 = vmul.f32 %v1574, 1.442695
    %v1594 = vpow.pop %v1593
    %v1595 = vmul.f32 %v1575, 1.442695
    %v1596 = vpow.pop %v1595
    %v1597 = vmul.f32 %v1576, 1.442695
    %v1598 = vpow.pop %v1597
    %v1599 = vmul.f32 %v1577, 1.442695
    %v1600 = vpow.pop %v1599
    %v1601 = vmul.f32 %v1578, 1.442695
    %v1602 = vpow.pop %v1601
    %v1603 = vmul.f32 %v1579, 1.442695
    %v1604 = vpow.pop %v1603
    %v1605 = vmul.f32 %v1580, 1.442695
    %v1606 = vpow.pop %v1605
    %v1607 = vmul.f32 %v1581, 1.442695
    %v1608 = vpow.pop %v1607
    %v1609 = vmul.f32 %v1582, 1.442695
    %v1610 = vpow.pop %v1609
    %v1611 = vmul.f32 %v1583, 1.442695
    %v1612 = vpow.pop %v1611
    %v1613 = vmul.f32 %v1584, 1.442695
    %v1614 = vpow.pop %v1613
    %v1615 = vmul.f32 %v1585, 1.442695
    %v1616 = vpow.pop %v1615
    %v1617 = vmul.f32 %v1586, 1.442695
    %v1618 = vpow.pop %v1617
    %v1619 = vadd.f32 %v1588, %v1590
    %v1620 = vadd.f32 %v1619, %v1592
    %v1621 = vadd.f32 %v1620, %v1594
    %v1622 = vadd.f32 %v1621, %v1596
    %v1623 = vadd.f32 %v1622, %v1598
    %v1624 = vadd.f32 %v1623, %v1600
    %v1625 = vadd.f32 %v1624, %v1602
    %v1626 = vadd.f32 %v1625, %v1604
    %v1627 = vadd.f32 %v1626, %v1606
    %v1628 = vadd.f32 %v1627, %v1608
    %v1629 = vadd.f32 %v1628, %v1610
    %v1630 = vadd.f32 %v1629, %v1612
    %v1631 = vadd.f32 %v1630, %v1614
    %v1632 = vadd.f32 %v1631, %v1616
    %v1633 = vadd.f32 %v1632, %v1618
    %v1634 = vrot.slane %v1633, 4
    %v1635 = vadd.f32 %v1633, %v1634
    %v1636 = vrot.slane %v1635, 2
    %v1637 = vadd.f32 %v1635, %v1636
    %v1638 = vrot.slane %v1637, 1
    %v1639 = vadd.f32 %v1637, %v1638
    %v1640 = vlog2.pop %v1639
    %v1641 = vmul.f32 %v1640, 0.6931472
    %v1642 = vsub.f32 %v1571, %v1641
    %v1643 = vsub.f32 %v1572, %v1641
    %v1644 = vsub.f32 %v1573, %v1641
    %v1645 = vsub.f32 %v1574, %v1641
    %v1646 = vsub.f32 %v1575, %v1641
    %v1647 = vsub.f32 %v1576, %v1641
    %v1648 = vsub.f32 %v1577, %v1641
    %v1649 = vsub.f32 %v1578, %v1641
    %v1650 = vsub.f32 %v1579, %v1641
    %v1651 = vsub.f32 %v1580, %v1641
    %v1652 = vsub.f32 %v1581, %v1641
    %v1653 = vsub.f32 %v1582, %v1641
    %v1654 = vsub.f32 %v1583, %v1641
    %v1655 = vsub.f32 %v1584, %v1641
    %v1656 = vsub.f32 %v1585, %v1641
    %v1657 = vsub.f32 %v1586, %v1641
    %v1658 = vmul.f32 %v1642, 1.442695
    %v1659 = vpow.pop %v1658
    %v1660 = vmul.f32 %v1643, 1.442695
    %v1661 = vpow.pop %v1660
    %v1662 = vmul.f32 %v1644, 1.442695
    %v1663 = vpow.pop %v1662
    %v1664 = vmul.f32 %v1645, 1.442695
    %v1665 = vpow.pop %v1664
    %v1666 = vmul.f32 %v1646, 1.442695
    %v1667 = vpow.pop %v1666
    %v1668 = vmul.f32 %v1647, 1.442695
    %v1669 = vpow.pop %v1668
    %v1670 = vmul.f32 %v1648, 1.442695
    %v1671 = vpow.pop %v1670
    %v1672 = vmul.f32 %v1649, 1.442695
    %v1673 = vpow.pop %v1672
    %v1674 = vmul.f32 %v1650, 1.442695
    %v1675 = vpow.pop %v1674
    %v1676 = vmul.f32 %v1651, 1.442695
    %v1677 = vpow.pop %v1676
    %v1678 = vmul.f32 %v1652, 1.442695
    %v1679 = vpow.pop %v1678
    %v1680 = vmul.f32 %v1653, 1.442695
    %v1681 = vpow.pop %v1680
    %v1682 = vmul.f32 %v1654, 1.442695
    %v1683 = vpow.pop %v1682
    %v1684 = vmul.f32 %v1655, 1.442695
    %v1685 = vpow.pop %v1684
    %v1686 = vmul.f32 %v1656, 1.442695
    %v1687 = vpow.pop %v1686
    %v1688 = vmul.f32 %v1657, 1.442695
    %v1689 = vpow.pop %v1688
    %1690 = vadd.xlane.f32.xlu0 %v1659
    %v1691 = vpop.xlane.xlu0 %1690
    %1692 = vadd.xlane.f32.xlu0 %v1661
    %v1693 = vpop.xlane.xlu0 %1692
    %1694 = vadd.xlane.f32.xlu0 %v1663
    %v1695 = vpop.xlane.xlu0 %1694
    %1696 = vadd.xlane.f32.xlu0 %v1665
    %v1697 = vpop.xlane.xlu0 %1696
    %1698 = vadd.xlane.f32.xlu0 %v1667
    %v1699 = vpop.xlane.xlu0 %1698
    %1700 = vadd.xlane.f32.xlu0 %v1669
    %v1701 = vpop.xlane.xlu0 %1700
    %1702 = vadd.xlane.f32.xlu0 %v1671
    %v1703 = vpop.xlane.xlu0 %1702
    %1704 = vadd.xlane.f32.xlu0 %v1673
    %v1705 = vpop.xlane.xlu0 %1704
    %1706 = vadd.xlane.f32.xlu0 %v1675
    %v1707 = vpop.xlane.xlu0 %1706
    %1708 = vadd.xlane.f32.xlu0 %v1677
    %v1709 = vpop.xlane.xlu0 %1708
    %1710 = vadd.xlane.f32.xlu0 %v1679
    %v1711 = vpop.xlane.xlu0 %1710
    %1712 = vadd.xlane.f32.xlu0 %v1681
    %v1713 = vpop.xlane.xlu0 %1712
    %1714 = vadd.xlane.f32.xlu0 %v1683
    %v1715 = vpop.xlane.xlu0 %1714
    %1716 = vadd.xlane.f32.xlu0 %v1685
    %v1717 = vpop.xlane.xlu0 %1716
    %1718 = vadd.xlane.f32.xlu0 %v1687
    %v1719 = vpop.xlane.xlu0 %1718
    %1720 = vadd.xlane.f32.xlu0 %v1689
    %v1721 = vpop.xlane.xlu0 %1720
    %v1722 = vlog2.pop %v1691
    %v1723 = vmul.f32 %v1722, 0.6931472
    %v1724 = vlog2.pop %v1693
    %v1725 = vmul.f32 %v1724, 0.6931472
    %v1726 = vlog2.pop %v1695
    %v1727 = vmul.f32 %v1726, 0.6931472
    %v1728 = vlog2.pop %v1697
    %v1729 = vmul.f32 %v1728, 0.6931472
    %v1730 = vlog2.pop %v1699
    %v1731 = vmul.f32 %v1730, 0.6931472
    %v1732 = vlog2.pop %v1701
    %v1733 = vmul.f32 %v1732, 0.6931472
    %v1734 = vlog2.pop %v1703
    %v1735 = vmul.f32 %v1734, 0.6931472
    %v1736 = vlog2.pop %v1705
    %v1737 = vmul.f32 %v1736, 0.6931472
    %v1738 = vlog2.pop %v1707
    %v1739 = vmul.f32 %v1738, 0.6931472
    %v1740 = vlog2.pop %v1709
    %v1741 = vmul.f32 %v1740, 0.6931472
    %v1742 = vlog2.pop %v1711
    %v1743 = vmul.f32 %v1742, 0.6931472
    %v1744 = vlog2.pop %v1713
    %v1745 = vmul.f32 %v1744, 0.6931472
    %v1746 = vlog2.pop %v1715
    %v1747 = vmul.f32 %v1746, 0.6931472
    %v1748 = vlog2.pop %v1717
    %v1749 = vmul.f32 %v1748, 0.6931472
    %v1750 = vlog2.pop %v1719
    %v1751 = vmul.f32 %v1750, 0.6931472
    %v1752 = vlog2.pop %v1721
    %v1753 = vmul.f32 %v1752, 0.6931472
    %v1754 = vsub.f32 %v1642, %v1723
    %v1755 = vsub.f32 %v1643, %v1725
    %v1756 = vsub.f32 %v1644, %v1727
    %v1757 = vsub.f32 %v1645, %v1729
    %v1758 = vsub.f32 %v1646, %v1731
    %v1759 = vsub.f32 %v1647, %v1733
    %v1760 = vsub.f32 %v1648, %v1735
    %v1761 = vsub.f32 %v1649, %v1737
    %v1762 = vsub.f32 %v1650, %v1739
    %v1763 = vsub.f32 %v1651, %v1741
    %v1764 = vsub.f32 %v1652, %v1743
    %v1765 = vsub.f32 %v1653, %v1745
    %v1766 = vsub.f32 %v1654, %v1747
    %v1767 = vsub.f32 %v1655, %v1749
    %v1768 = vsub.f32 %v1656, %v1751
    %v1769 = vsub.f32 %v1657, %v1753
    %v1770 = vmul.f32 %v1754, 1.442695
    %v1771 = vpow.pop %v1770
    %v1772 = vmul.f32 %v1755, 1.442695
    %v1773 = vpow.pop %v1772
    %v1774 = vmul.f32 %v1756, 1.442695
    %v1775 = vpow.pop %v1774
    %v1776 = vmul.f32 %v1757, 1.442695
    %v1777 = vpow.pop %v1776
    %v1778 = vmul.f32 %v1758, 1.442695
    %v1779 = vpow.pop %v1778
    %v1780 = vmul.f32 %v1759, 1.442695
    %v1781 = vpow.pop %v1780
    %v1782 = vmul.f32 %v1760, 1.442695
    %v1783 = vpow.pop %v1782
    %v1784 = vmul.f32 %v1761, 1.442695
    %v1785 = vpow.pop %v1784
    %v1786 = vmul.f32 %v1762, 1.442695
    %v1787 = vpow.pop %v1786
    %v1788 = vmul.f32 %v1763, 1.442695
    %v1789 = vpow.pop %v1788
    %v1790 = vmul.f32 %v1764, 1.442695
    %v1791 = vpow.pop %v1790
    %v1792 = vmul.f32 %v1765, 1.442695
    %v1793 = vpow.pop %v1792
    %v1794 = vmul.f32 %v1766, 1.442695
    %v1795 = vpow.pop %v1794
    %v1796 = vmul.f32 %v1767, 1.442695
    %v1797 = vpow.pop %v1796
    %v1798 = vmul.f32 %v1768, 1.442695
    %v1799 = vpow.pop %v1798
    %v1800 = vmul.f32 %v1769, 1.442695
    %v1801 = vpow.pop %v1800
    %v1802 = vadd.f32 %v1771, %v1773
    %v1803 = vadd.f32 %v1802, %v1775
    %v1804 = vadd.f32 %v1803, %v1777
    %v1805 = vadd.f32 %v1804, %v1779
    %v1806 = vadd.f32 %v1805, %v1781
    %v1807 = vadd.f32 %v1806, %v1783
    %v1808 = vadd.f32 %v1807, %v1785
    %v1809 = vadd.f32 %v1808, %v1787
    %v1810 = vadd.f32 %v1809, %v1789
    %v1811 = vadd.f32 %v1810, %v1791
    %v1812 = vadd.f32 %v1811, %v1793
    %v1813 = vadd.f32 %v1812, %v1795
    %v1814 = vadd.f32 %v1813, %v1797
    %v1815 = vadd.f32 %v1814, %v1799
    %v1816 = vadd.f32 %v1815, %v1801
    %v1817 = vrot.slane %v1816, 4
    %v1818 = vadd.f32 %v1816, %v1817
    %v1819 = vrot.slane %v1818, 2
    %v1820 = vadd.f32 %v1818, %v1819
    %v1821 = vrot.slane %v1820, 1
    %v1822 = vadd.f32 %v1820, %v1821
    %v1823 = vlog2.pop %v1822
    %v1824 = vmul.f32 %v1823, 0.6931472
    %v1825 = vsub.f32 %v1754, %v1824
    %v1826 = vsub.f32 %v1755, %v1824
    %v1827 = vsub.f32 %v1756, %v1824
    %v1828 = vsub.f32 %v1757, %v1824
    %v1829 = vsub.f32 %v1758, %v1824
    %v1830 = vsub.f32 %v1759, %v1824
    %v1831 = vsub.f32 %v1760, %v1824
    %v1832 = vsub.f32 %v1761, %v1824
    %v1833 = vsub.f32 %v1762, %v1824
    %v1834 = vsub.f32 %v1763, %v1824
    %v1835 = vsub.f32 %v1764, %v1824
    %v1836 = vsub.f32 %v1765, %v1824
    %v1837 = vsub.f32 %v1766, %v1824
    %v1838 = vsub.f32 %v1767, %v1824
    %v1839 = vsub.f32 %v1768, %v1824
    %v1840 = vsub.f32 %v1769, %v1824
    %v1841 = vmul.f32 %v1825, 1.442695
    %v1842 = vpow.pop %v1841
    %v1843 = vmul.f32 %v1826, 1.442695
    %v1844 = vpow.pop %v1843
    %v1845 = vmul.f32 %v1827, 1.442695
    %v1846 = vpow.pop %v1845
    %v1847 = vmul.f32 %v1828, 1.442695
    %v1848 = vpow.pop %v1847
    %v1849 = vmul.f32 %v1829, 1.442695
    %v1850 = vpow.pop %v1849
    %v1851 = vmul.f32 %v1830, 1.442695
    %v1852 = vpow.pop %v1851
    %v1853 = vmul.f32 %v1831, 1.442695
    %v1854 = vpow.pop %v1853
    %v1855 = vmul.f32 %v1832, 1.442695
    %v1856 = vpow.pop %v1855
    %v1857 = vmul.f32 %v1833, 1.442695
    %v1858 = vpow.pop %v1857
    %v1859 = vmul.f32 %v1834, 1.442695
    %v1860 = vpow.pop %v1859
    %v1861 = vmul.f32 %v1835, 1.442695
    %v1862 = vpow.pop %v1861
    %v1863 = vmul.f32 %v1836, 1.442695
    %v1864 = vpow.pop %v1863
    %v1865 = vmul.f32 %v1837, 1.442695
    %v1866 = vpow.pop %v1865
    %v1867 = vmul.f32 %v1838, 1.442695
    %v1868 = vpow.pop %v1867
    %v1869 = vmul.f32 %v1839, 1.442695
    %v1870 = vpow.pop %v1869
    %v1871 = vmul.f32 %v1840, 1.442695
    %v1872 = vpow.pop %v1871
    %1873 = vadd.xlane.f32.xlu0 %v1842
    %v1874 = vpop.xlane.xlu0 %1873
    %1875 = vadd.xlane.f32.xlu0 %v1844
    %v1876 = vpop.xlane.xlu0 %1875
    %1877 = vadd.xlane.f32.xlu0 %v1846
    %v1878 = vpop.xlane.xlu0 %1877
    %1879 = vadd.xlane.f32.xlu0 %v1848
    %v1880 = vpop.xlane.xlu0 %1879
    %1881 = vadd.xlane.f32.xlu0 %v1850
    %v1882 = vpop.xlane.xlu0 %1881
    %1883 = vadd.xlane.f32.xlu0 %v1852
    %v1884 = vpop.xlane.xlu0 %1883
    %1885 = vadd.xlane.f32.xlu0 %v1854
    %v1886 = vpop.xlane.xlu0 %1885
    %1887 = vadd.xlane.f32.xlu0 %v1856
    %v1888 = vpop.xlane.xlu0 %1887
    %1889 = vadd.xlane.f32.xlu0 %v1858
    %v1890 = vpop.xlane.xlu0 %1889
    %1891 = vadd.xlane.f32.xlu0 %v1860
    %v1892 = vpop.xlane.xlu0 %1891
    %1893 = vadd.xlane.f32.xlu0 %v1862
    %v1894 = vpop.xlane.xlu0 %1893
    %1895 = vadd.xlane.f32.xlu0 %v1864
    %v1896 = vpop.xlane.xlu0 %1895
    %1897 = vadd.xlane.f32.xlu0 %v1866
    %v1898 = vpop.xlane.xlu0 %1897
    %1899 = vadd.xlane.f32.xlu0 %v1868
    %v1900 = vpop.xlane.xlu0 %1899
    %1901 = vadd.xlane.f32.xlu0 %v1870
    %v1902 = vpop.xlane.xlu0 %1901
    %1903 = vadd.xlane.f32.xlu0 %v1872
    %v1904 = vpop.xlane.xlu0 %1903
    %v1905 = vlog2.pop %v1874
    %v1906 = vmul.f32 %v1905, 0.6931472
    %v1907 = vlog2.pop %v1876
    %v1908 = vmul.f32 %v1907, 0.6931472
    %v1909 = vlog2.pop %v1878
    %v1910 = vmul.f32 %v1909, 0.6931472
    %v1911 = vlog2.pop %v1880
    %v1912 = vmul.f32 %v1911, 0.6931472
    %v1913 = vlog2.pop %v1882
    %v1914 = vmul.f32 %v1913, 0.6931472
    %v1915 = vlog2.pop %v1884
    %v1916 = vmul.f32 %v1915, 0.6931472
    %v1917 = vlog2.pop %v1886
    %v1918 = vmul.f32 %v1917, 0.6931472
    %v1919 = vlog2.pop %v1888
    %v1920 = vmul.f32 %v1919, 0.6931472
    %v1921 = vlog2.pop %v1890
    %v1922 = vmul.f32 %v1921, 0.6931472
    %v1923 = vlog2.pop %v1892
    %v1924 = vmul.f32 %v1923, 0.6931472
    %v1925 = vlog2.pop %v1894
    %v1926 = vmul.f32 %v1925, 0.6931472
    %v1927 = vlog2.pop %v1896
    %v1928 = vmul.f32 %v1927, 0.6931472
    %v1929 = vlog2.pop %v1898
    %v1930 = vmul.f32 %v1929, 0.6931472
    %v1931 = vlog2.pop %v1900
    %v1932 = vmul.f32 %v1931, 0.6931472
    %v1933 = vlog2.pop %v1902
    %v1934 = vmul.f32 %v1933, 0.6931472
    %v1935 = vlog2.pop %v1904
    %v1936 = vmul.f32 %v1935, 0.6931472
    %v1937 = vsub.f32 %v1825, %v1906
    %v1938 = vsub.f32 %v1826, %v1908
    %v1939 = vsub.f32 %v1827, %v1910
    %v1940 = vsub.f32 %v1828, %v1912
    %v1941 = vsub.f32 %v1829, %v1914
    %v1942 = vsub.f32 %v1830, %v1916
    %v1943 = vsub.f32 %v1831, %v1918
    %v1944 = vsub.f32 %v1832, %v1920
    %v1945 = vsub.f32 %v1833, %v1922
    %v1946 = vsub.f32 %v1834, %v1924
    %v1947 = vsub.f32 %v1835, %v1926
    %v1948 = vsub.f32 %v1836, %v1928
    %v1949 = vsub.f32 %v1837, %v1930
    %v1950 = vsub.f32 %v1838, %v1932
    %v1951 = vsub.f32 %v1839, %v1934
    %v1952 = vsub.f32 %v1840, %v1936
    %v1953 = vmul.f32 %v1937, 1.442695
    %v1954 = vpow.pop %v1953
    %v1955 = vmul.f32 %v1938, 1.442695
    %v1956 = vpow.pop %v1955
    %v1957 = vmul.f32 %v1939, 1.442695
    %v1958 = vpow.pop %v1957
    %v1959 = vmul.f32 %v1940, 1.442695
    %v1960 = vpow.pop %v1959
    %v1961 = vmul.f32 %v1941, 1.442695
    %v1962 = vpow.pop %v1961
    %v1963 = vmul.f32 %v1942, 1.442695
    %v1964 = vpow.pop %v1963
    %v1965 = vmul.f32 %v1943, 1.442695
    %v1966 = vpow.pop %v1965
    %v1967 = vmul.f32 %v1944, 1.442695
    %v1968 = vpow.pop %v1967
    %v1969 = vmul.f32 %v1945, 1.442695
    %v1970 = vpow.pop %v1969
    %v1971 = vmul.f32 %v1946, 1.442695
    %v1972 = vpow.pop %v1971
    %v1973 = vmul.f32 %v1947, 1.442695
    %v1974 = vpow.pop %v1973
    %v1975 = vmul.f32 %v1948, 1.442695
    %v1976 = vpow.pop %v1975
    %v1977 = vmul.f32 %v1949, 1.442695
    %v1978 = vpow.pop %v1977
    %v1979 = vmul.f32 %v1950, 1.442695
    %v1980 = vpow.pop %v1979
    %v1981 = vmul.f32 %v1951, 1.442695
    %v1982 = vpow.pop %v1981
    %v1983 = vmul.f32 %v1952, 1.442695
    %v1984 = vpow.pop %v1983
    %v1985 = vadd.f32 %v1954, %v1956
    %v1986 = vadd.f32 %v1985, %v1958
    %v1987 = vadd.f32 %v1986, %v1960
    %v1988 = vadd.f32 %v1987, %v1962
    %v1989 = vadd.f32 %v1988, %v1964
    %v1990 = vadd.f32 %v1989, %v1966
    %v1991 = vadd.f32 %v1990, %v1968
    %v1992 = vadd.f32 %v1991, %v1970
    %v1993 = vadd.f32 %v1992, %v1972
    %v1994 = vadd.f32 %v1993, %v1974
    %v1995 = vadd.f32 %v1994, %v1976
    %v1996 = vadd.f32 %v1995, %v1978
    %v1997 = vadd.f32 %v1996, %v1980
    %v1998 = vadd.f32 %v1997, %v1982
    %v1999 = vadd.f32 %v1998, %v1984
    %v2000 = vrot.slane %v1999, 4
    %v2001 = vadd.f32 %v1999, %v2000
    %v2002 = vrot.slane %v2001, 2
    %v2003 = vadd.f32 %v2001, %v2002
    %v2004 = vrot.slane %v2003, 1
    %v2005 = vadd.f32 %v2003, %v2004
    %v2006 = vlog2.pop %v2005
    %v2007 = vmul.f32 %v2006, 0.6931472
    %v2008 = vsub.f32 %v1937, %v2007
    %v2009 = vsub.f32 %v1938, %v2007
    %v2010 = vsub.f32 %v1939, %v2007
    %v2011 = vsub.f32 %v1940, %v2007
    %v2012 = vsub.f32 %v1941, %v2007
    %v2013 = vsub.f32 %v1942, %v2007
    %v2014 = vsub.f32 %v1943, %v2007
    %v2015 = vsub.f32 %v1944, %v2007
    %v2016 = vsub.f32 %v1945, %v2007
    %v2017 = vsub.f32 %v1946, %v2007
    %v2018 = vsub.f32 %v1947, %v2007
    %v2019 = vsub.f32 %v1948, %v2007
    %v2020 = vsub.f32 %v1949, %v2007
    %v2021 = vsub.f32 %v1950, %v2007
    %v2022 = vsub.f32 %v1951, %v2007
    %v2023 = vsub.f32 %v1952, %v2007
    %v2024 = vmul.f32 %v2008, 1.442695
    %v2025 = vpow.pop %v2024
    %v2026 = vmul.f32 %v2009, 1.442695
    %v2027 = vpow.pop %v2026
    %v2028 = vmul.f32 %v2010, 1.442695
    %v2029 = vpow.pop %v2028
    %v2030 = vmul.f32 %v2011, 1.442695
    %v2031 = vpow.pop %v2030
    %v2032 = vmul.f32 %v2012, 1.442695
    %v2033 = vpow.pop %v2032
    %v2034 = vmul.f32 %v2013, 1.442695
    %v2035 = vpow.pop %v2034
    %v2036 = vmul.f32 %v2014, 1.442695
    %v2037 = vpow.pop %v2036
    %v2038 = vmul.f32 %v2015, 1.442695
    %v2039 = vpow.pop %v2038
    %v2040 = vmul.f32 %v2016, 1.442695
    %v2041 = vpow.pop %v2040
    %v2042 = vmul.f32 %v2017, 1.442695
    %v2043 = vpow.pop %v2042
    %v2044 = vmul.f32 %v2018, 1.442695
    %v2045 = vpow.pop %v2044
    %v2046 = vmul.f32 %v2019, 1.442695
    %v2047 = vpow.pop %v2046
    %v2048 = vmul.f32 %v2020, 1.442695
    %v2049 = vpow.pop %v2048
    %v2050 = vmul.f32 %v2021, 1.442695
    %v2051 = vpow.pop %v2050
    %v2052 = vmul.f32 %v2022, 1.442695
    %v2053 = vpow.pop %v2052
    %v2054 = vmul.f32 %v2023, 1.442695
    %v2055 = vpow.pop %v2054
    %2056 = vadd.xlane.f32.xlu0 %v2025
    %v2057 = vpop.xlane.xlu0 %2056
    %2058 = vadd.xlane.f32.xlu0 %v2027
    %v2059 = vpop.xlane.xlu0 %2058
    %2060 = vadd.xlane.f32.xlu0 %v2029
    %v2061 = vpop.xlane.xlu0 %2060
    %2062 = vadd.xlane.f32.xlu0 %v2031
    %v2063 = vpop.xlane.xlu0 %2062
    %2064 = vadd.xlane.f32.xlu0 %v2033
    %v2065 = vpop.xlane.xlu0 %2064
    %2066 = vadd.xlane.f32.xlu0 %v2035
    %v2067 = vpop.xlane.xlu0 %2066
    %2068 = vadd.xlane.f32.xlu0 %v2037
    %v2069 = vpop.xlane.xlu0 %2068
    %2070 = vadd.xlane.f32.xlu0 %v2039
    %v2071 = vpop.xlane.xlu0 %2070
    %2072 = vadd.xlane.f32.xlu0 %v2041
    %v2073 = vpop.xlane.xlu0 %2072
    %2074 = vadd.xlane.f32.xlu0 %v2043
    %v2075 = vpop.xlane.xlu0 %2074
    %2076 = vadd.xlane.f32.xlu0 %v2045
    %v2077 = vpop.xlane.xlu0 %2076
    %2078 = vadd.xlane.f32.xlu0 %v2047
    %v2079 = vpop.xlane.xlu0 %2078
    %2080 = vadd.xlane.f32.xlu0 %v2049
    %v2081 = vpop.xlane.xlu0 %2080
    %2082 = vadd.xlane.f32.xlu0 %v2051
    %v2083 = vpop.xlane.xlu0 %2082
    %2084 = vadd.xlane.f32.xlu0 %v2053
    %v2085 = vpop.xlane.xlu0 %2084
    %2086 = vadd.xlane.f32.xlu0 %v2055
    %v2087 = vpop.xlane.xlu0 %2086
    %v2088 = vlog2.pop %v2057
    %v2089 = vmul.f32 %v2088, 0.6931472
    %v2090 = vlog2.pop %v2059
    %v2091 = vmul.f32 %v2090, 0.6931472
    %v2092 = vlog2.pop %v2061
    %v2093 = vmul.f32 %v2092, 0.6931472
    %v2094 = vlog2.pop %v2063
    %v2095 = vmul.f32 %v2094, 0.6931472
    %v2096 = vlog2.pop %v2065
    %v2097 = vmul.f32 %v2096, 0.6931472
    %v2098 = vlog2.pop %v2067
    %v2099 = vmul.f32 %v2098, 0.6931472
    %v2100 = vlog2.pop %v2069
    %v2101 = vmul.f32 %v2100, 0.6931472
    %v2102 = vlog2.pop %v2071
    %v2103 = vmul.f32 %v2102, 0.6931472
    %v2104 = vlog2.pop %v2073
    %v2105 = vmul.f32 %v2104, 0.6931472
    %v2106 = vlog2.pop %v2075
    %v2107 = vmul.f32 %v2106, 0.6931472
    %v2108 = vlog2.pop %v2077
    %v2109 = vmul.f32 %v2108, 0.6931472
    %v2110 = vlog2.pop %v2079
    %v2111 = vmul.f32 %v2110, 0.6931472
    %v2112 = vlog2.pop %v2081
    %v2113 = vmul.f32 %v2112, 0.6931472
    %v2114 = vlog2.pop %v2083
    %v2115 = vmul.f32 %v2114, 0.6931472
    %v2116 = vlog2.pop %v2085
    %v2117 = vmul.f32 %v2116, 0.6931472
    %v2118 = vlog2.pop %v2087
    %v2119 = vmul.f32 %v2118, 0.6931472
    %v2120 = vsub.f32 %v2008, %v2089
    %v2121 = vsub.f32 %v2009, %v2091
    %v2122 = vsub.f32 %v2010, %v2093
    %v2123 = vsub.f32 %v2011, %v2095
    %v2124 = vsub.f32 %v2012, %v2097
    %v2125 = vsub.f32 %v2013, %v2099
    %v2126 = vsub.f32 %v2014, %v2101
    %v2127 = vsub.f32 %v2015, %v2103
    %v2128 = vsub.f32 %v2016, %v2105
    %v2129 = vsub.f32 %v2017, %v2107
    %v2130 = vsub.f32 %v2018, %v2109
    %v2131 = vsub.f32 %v2019, %v2111
    %v2132 = vsub.f32 %v2020, %v2113
    %v2133 = vsub.f32 %v2021, %v2115
    %v2134 = vsub.f32 %v2022, %v2117
    %v2135 = vsub.f32 %v2023, %v2119
    %v2136 = vmul.f32 %v2120, 1.442695
    %v2137 = vpow.pop %v2136
    %v2138 = vmul.f32 %v2121, 1.442695
    %v2139 = vpow.pop %v2138
    %v2140 = vmul.f32 %v2122, 1.442695
    %v2141 = vpow.pop %v2140
    %v2142 = vmul.f32 %v2123, 1.442695
    %v2143 = vpow.pop %v2142
    %v2144 = vmul.f32 %v2124, 1.442695
    %v2145 = vpow.pop %v2144
    %v2146 = vmul.f32 %v2125, 1.442695
    %v2147 = vpow.pop %v2146
    %v2148 = vmul.f32 %v2126, 1.442695
    %v2149 = vpow.pop %v2148
    %v2150 = vmul.f32 %v2127, 1.442695
    %v2151 = vpow.pop %v2150
    %v2152 = vmul.f32 %v2128, 1.442695
    %v2153 = vpow.pop %v2152
    %v2154 = vmul.f32 %v2129, 1.442695
    %v2155 = vpow.pop %v2154
    %v2156 = vmul.f32 %v2130, 1.442695
    %v2157 = vpow.pop %v2156
    %v2158 = vmul.f32 %v2131, 1.442695
    %v2159 = vpow.pop %v2158
    %v2160 = vmul.f32 %v2132, 1.442695
    %v2161 = vpow.pop %v2160
    %v2162 = vmul.f32 %v2133, 1.442695
    %v2163 = vpow.pop %v2162
    %v2164 = vmul.f32 %v2134, 1.442695
    %v2165 = vpow.pop %v2164
    %v2166 = vmul.f32 %v2135, 1.442695
    %v2167 = vpow.pop %v2166
    %v2168 = vadd.f32 %v2137, %v2139
    %v2169 = vadd.f32 %v2168, %v2141
    %v2170 = vadd.f32 %v2169, %v2143
    %v2171 = vadd.f32 %v2170, %v2145
    %v2172 = vadd.f32 %v2171, %v2147
    %v2173 = vadd.f32 %v2172, %v2149
    %v2174 = vadd.f32 %v2173, %v2151
    %v2175 = vadd.f32 %v2174, %v2153
    %v2176 = vadd.f32 %v2175, %v2155
    %v2177 = vadd.f32 %v2176, %v2157
    %v2178 = vadd.f32 %v2177, %v2159
    %v2179 = vadd.f32 %v2178, %v2161
    %v2180 = vadd.f32 %v2179, %v2163
    %v2181 = vadd.f32 %v2180, %v2165
    %v2182 = vadd.f32 %v2181, %v2167
    %v2183 = vrot.slane %v2182, 4
    %v2184 = vadd.f32 %v2182, %v2183
    %v2185 = vrot.slane %v2184, 2
    %v2186 = vadd.f32 %v2184, %v2185
    %v2187 = vrot.slane %v2186, 1
    %v2188 = vadd.f32 %v2186, %v2187
    %v2189 = vlog2.pop %v2188
    %v2190 = vmul.f32 %v2189, 0.6931472
    %v2191 = vsub.f32 %v2120, %v2190
    %v2192 = vsub.f32 %v2121, %v2190
    %v2193 = vsub.f32 %v2122, %v2190
    %v2194 = vsub.f32 %v2123, %v2190
    %v2195 = vsub.f32 %v2124, %v2190
    %v2196 = vsub.f32 %v2125, %v2190
    %v2197 = vsub.f32 %v2126, %v2190
    %v2198 = vsub.f32 %v2127, %v2190
    %v2199 = vsub.f32 %v2128, %v2190
    %v2200 = vsub.f32 %v2129, %v2190
    %v2201 = vsub.f32 %v2130, %v2190
    %v2202 = vsub.f32 %v2131, %v2190
    %v2203 = vsub.f32 %v2132, %v2190
    %v2204 = vsub.f32 %v2133, %v2190
    %v2205 = vsub.f32 %v2134, %v2190
    %v2206 = vsub.f32 %v2135, %v2190
    %v2207 = vmul.f32 %v2191, 1.442695
    %v2208 = vpow.pop %v2207
    %v2209 = vmul.f32 %v2192, 1.442695
    %v2210 = vpow.pop %v2209
    %v2211 = vmul.f32 %v2193, 1.442695
    %v2212 = vpow.pop %v2211
    %v2213 = vmul.f32 %v2194, 1.442695
    %v2214 = vpow.pop %v2213
    %v2215 = vmul.f32 %v2195, 1.442695
    %v2216 = vpow.pop %v2215
    %v2217 = vmul.f32 %v2196, 1.442695
    %v2218 = vpow.pop %v2217
    %v2219 = vmul.f32 %v2197, 1.442695
    %v2220 = vpow.pop %v2219
    %v2221 = vmul.f32 %v2198, 1.442695
    %v2222 = vpow.pop %v2221
    %v2223 = vmul.f32 %v2199, 1.442695
    %v2224 = vpow.pop %v2223
    %v2225 = vmul.f32 %v2200, 1.442695
    %v2226 = vpow.pop %v2225
    %v2227 = vmul.f32 %v2201, 1.442695
    %v2228 = vpow.pop %v2227
    %v2229 = vmul.f32 %v2202, 1.442695
    %v2230 = vpow.pop %v2229
    %v2231 = vmul.f32 %v2203, 1.442695
    %v2232 = vpow.pop %v2231
    %v2233 = vmul.f32 %v2204, 1.442695
    %v2234 = vpow.pop %v2233
    %v2235 = vmul.f32 %v2205, 1.442695
    %v2236 = vpow.pop %v2235
    %v2237 = vmul.f32 %v2206, 1.442695
    %v2238 = vpow.pop %v2237
    %2239 = vadd.xlane.f32.xlu0 %v2208
    %v2240 = vpop.xlane.xlu0 %2239
    %2241 = vadd.xlane.f32.xlu0 %v2210
    %v2242 = vpop.xlane.xlu0 %2241
    %2243 = vadd.xlane.f32.xlu0 %v2212
    %v2244 = vpop.xlane.xlu0 %2243
    %2245 = vadd.xlane.f32.xlu0 %v2214
    %v2246 = vpop.xlane.xlu0 %2245
    %2247 = vadd.xlane.f32.xlu0 %v2216
    %v2248 = vpop.xlane.xlu0 %2247
    %2249 = vadd.xlane.f32.xlu0 %v2218
    %v2250 = vpop.xlane.xlu0 %2249
    %2251 = vadd.xlane.f32.xlu0 %v2220
    %v2252 = vpop.xlane.xlu0 %2251
    %2253 = vadd.xlane.f32.xlu0 %v2222
    %v2254 = vpop.xlane.xlu0 %2253
    %2255 = vadd.xlane.f32.xlu0 %v2224
    %v2256 = vpop.xlane.xlu0 %2255
    %2257 = vadd.xlane.f32.xlu0 %v2226
    %v2258 = vpop.xlane.xlu0 %2257
    %2259 = vadd.xlane.f32.xlu0 %v2228
    %v2260 = vpop.xlane.xlu0 %2259
    %2261 = vadd.xlane.f32.xlu0 %v2230
    %v2262 = vpop.xlane.xlu0 %2261
    %2263 = vadd.xlane.f32.xlu0 %v2232
    %v2264 = vpop.xlane.xlu0 %2263
    %2265 = vadd.xlane.f32.xlu0 %v2234
    %v2266 = vpop.xlane.xlu0 %2265
    %2267 = vadd.xlane.f32.xlu0 %v2236
    %v2268 = vpop.xlane.xlu0 %2267
    %2269 = vadd.xlane.f32.xlu0 %v2238
    %v2270 = vpop.xlane.xlu0 %2269
    %v2271 = vlog2.pop %v2240
    %v2272 = vmul.f32 %v2271, 0.6931472
    %v2273 = vlog2.pop %v2242
    %v2274 = vmul.f32 %v2273, 0.6931472
    %v2275 = vlog2.pop %v2244
    %v2276 = vmul.f32 %v2275, 0.6931472
    %v2277 = vlog2.pop %v2246
    %v2278 = vmul.f32 %v2277, 0.6931472
    %v2279 = vlog2.pop %v2248
    %v2280 = vmul.f32 %v2279, 0.6931472
    %v2281 = vlog2.pop %v2250
    %v2282 = vmul.f32 %v2281, 0.6931472
    %v2283 = vlog2.pop %v2252
    %v2284 = vmul.f32 %v2283, 0.6931472
    %v2285 = vlog2.pop %v2254
    %v2286 = vmul.f32 %v2285, 0.6931472
    %v2287 = vlog2.pop %v2256
    %v2288 = vmul.f32 %v2287, 0.6931472
    %v2289 = vlog2.pop %v2258
    %v2290 = vmul.f32 %v2289, 0.6931472
    %v2291 = vlog2.pop %v2260
    %v2292 = vmul.f32 %v2291, 0.6931472
    %v2293 = vlog2.pop %v2262
    %v2294 = vmul.f32 %v2293, 0.6931472
    %v2295 = vlog2.pop %v2264
    %v2296 = vmul.f32 %v2295, 0.6931472
    %v2297 = vlog2.pop %v2266
    %v2298 = vmul.f32 %v2297, 0.6931472
    %v2299 = vlog2.pop %v2268
    %v2300 = vmul.f32 %v2299, 0.6931472
    %v2301 = vlog2.pop %v2270
    %v2302 = vmul.f32 %v2301, 0.6931472
    %v2303 = vsub.f32 %v2191, %v2272
    %v2304 = vsub.f32 %v2192, %v2274
    %v2305 = vsub.f32 %v2193, %v2276
    %v2306 = vsub.f32 %v2194, %v2278
    %v2307 = vsub.f32 %v2195, %v2280
    %v2308 = vsub.f32 %v2196, %v2282
    %v2309 = vsub.f32 %v2197, %v2284
    %v2310 = vsub.f32 %v2198, %v2286
    %v2311 = vsub.f32 %v2199, %v2288
    %v2312 = vsub.f32 %v2200, %v2290
    %v2313 = vsub.f32 %v2201, %v2292
    %v2314 = vsub.f32 %v2202, %v2294
    %v2315 = vsub.f32 %v2203, %v2296
    %v2316 = vsub.f32 %v2204, %v2298
    %v2317 = vsub.f32 %v2205, %v2300
    %v2318 = vsub.f32 %v2206, %v2302
    %v2319 = vmul.f32 %v2303, 1.442695
    %v2320 = vpow.pop %v2319
    %v2321 = vmul.f32 %v2304, 1.442695
    %v2322 = vpow.pop %v2321
    %v2323 = vmul.f32 %v2305, 1.442695
    %v2324 = vpow.pop %v2323
    %v2325 = vmul.f32 %v2306, 1.442695
    %v2326 = vpow.pop %v2325
    %v2327 = vmul.f32 %v2307, 1.442695
    %v2328 = vpow.pop %v2327
    %v2329 = vmul.f32 %v2308, 1.442695
    %v2330 = vpow.pop %v2329
    %v2331 = vmul.f32 %v2309, 1.442695
    %v2332 = vpow.pop %v2331
    %v2333 = vmul.f32 %v2310, 1.442695
    %v2334 = vpow.pop %v2333
    %v2335 = vmul.f32 %v2311, 1.442695
    %v2336 = vpow.pop %v2335
    %v2337 = vmul.f32 %v2312, 1.442695
    %v2338 = vpow.pop %v2337
    %v2339 = vmul.f32 %v2313, 1.442695
    %v2340 = vpow.pop %v2339
    %v2341 = vmul.f32 %v2314, 1.442695
    %v2342 = vpow.pop %v2341
    %v2343 = vmul.f32 %v2315, 1.442695
    %v2344 = vpow.pop %v2343
    %v2345 = vmul.f32 %v2316, 1.442695
    %v2346 = vpow.pop %v2345
    %v2347 = vmul.f32 %v2317, 1.442695
    %v2348 = vpow.pop %v2347
    %v2349 = vmul.f32 %v2318, 1.442695
    %v2350 = vpow.pop %v2349
    %v2351 = vadd.f32 %v2320, %v2322
    %v2352 = vadd.f32 %v2351, %v2324
    %v2353 = vadd.f32 %v2352, %v2326
    %v2354 = vadd.f32 %v2353, %v2328
    %v2355 = vadd.f32 %v2354, %v2330
    %v2356 = vadd.f32 %v2355, %v2332
    %v2357 = vadd.f32 %v2356, %v2334
    %v2358 = vadd.f32 %v2357, %v2336
    %v2359 = vadd.f32 %v2358, %v2338
    %v2360 = vadd.f32 %v2359, %v2340
    %v2361 = vadd.f32 %v2360, %v2342
    %v2362 = vadd.f32 %v2361, %v2344
    %v2363 = vadd.f32 %v2362, %v2346
    %v2364 = vadd.f32 %v2363, %v2348
    %v2365 = vadd.f32 %v2364, %v2350
    %v2366 = vrot.slane %v2365, 4
    %v2367 = vadd.f32 %v2365, %v2366
    %v2368 = vrot.slane %v2367, 2
    %v2369 = vadd.f32 %v2367, %v2368
    %v2370 = vrot.slane %v2369, 1
    %v2371 = vadd.f32 %v2369, %v2370
    %v2372 = vlog2.pop %v2371
    %v2373 = vmul.f32 %v2372, 0.6931472
    %v2374 = vsub.f32 %v2303, %v2373
    %v2375 = vsub.f32 %v2304, %v2373
    %v2376 = vsub.f32 %v2305, %v2373
    %v2377 = vsub.f32 %v2306, %v2373
    %v2378 = vsub.f32 %v2307, %v2373
    %v2379 = vsub.f32 %v2308, %v2373
    %v2380 = vsub.f32 %v2309, %v2373
    %v2381 = vsub.f32 %v2310, %v2373
    %v2382 = vsub.f32 %v2311, %v2373
    %v2383 = vsub.f32 %v2312, %v2373
    %v2384 = vsub.f32 %v2313, %v2373
    %v2385 = vsub.f32 %v2314, %v2373
    %v2386 = vsub.f32 %v2315, %v2373
    %v2387 = vsub.f32 %v2316, %v2373
    %v2388 = vsub.f32 %v2317, %v2373
    %v2389 = vsub.f32 %v2318, %v2373
    %v2390 = vmul.f32 %v2374, 1.442695
    %v2391 = vpow.pop %v2390
    %v2392 = vmul.f32 %v2375, 1.442695
    %v2393 = vpow.pop %v2392
    %v2394 = vmul.f32 %v2376, 1.442695
    %v2395 = vpow.pop %v2394
    %v2396 = vmul.f32 %v2377, 1.442695
    %v2397 = vpow.pop %v2396
    %v2398 = vmul.f32 %v2378, 1.442695
    %v2399 = vpow.pop %v2398
    %v2400 = vmul.f32 %v2379, 1.442695
    %v2401 = vpow.pop %v2400
    %v2402 = vmul.f32 %v2380, 1.442695
    %v2403 = vpow.pop %v2402
    %v2404 = vmul.f32 %v2381, 1.442695
    %v2405 = vpow.pop %v2404
    %v2406 = vmul.f32 %v2382, 1.442695
    %v2407 = vpow.pop %v2406
    %v2408 = vmul.f32 %v2383, 1.442695
    %v2409 = vpow.pop %v2408
    %v2410 = vmul.f32 %v2384, 1.442695
    %v2411 = vpow.pop %v2410
    %v2412 = vmul.f32 %v2385, 1.442695
    %v2413 = vpow.pop %v2412
    %v2414 = vmul.f32 %v2386, 1.442695
    %v2415 = vpow.pop %v2414
    %v2416 = vmul.f32 %v2387, 1.442695
    %v2417 = vpow.pop %v2416
    %v2418 = vmul.f32 %v2388, 1.442695
    %v2419 = vpow.pop %v2418
    %v2420 = vmul.f32 %v2389, 1.442695
    %v2421 = vpow.pop %v2420
    %2422 = vadd.xlane.f32.xlu0 %v2391
    %v2423 = vpop.xlane.xlu0 %2422
    %2424 = vadd.xlane.f32.xlu0 %v2393
    %v2425 = vpop.xlane.xlu0 %2424
    %2426 = vadd.xlane.f32.xlu0 %v2395
    %v2427 = vpop.xlane.xlu0 %2426
    %2428 = vadd.xlane.f32.xlu0 %v2397
    %v2429 = vpop.xlane.xlu0 %2428
    %2430 = vadd.xlane.f32.xlu0 %v2399
    %v2431 = vpop.xlane.xlu0 %2430
    %2432 = vadd.xlane.f32.xlu0 %v2401
    %v2433 = vpop.xlane.xlu0 %2432
    %2434 = vadd.xlane.f32.xlu0 %v2403
    %v2435 = vpop.xlane.xlu0 %2434
    %2436 = vadd.xlane.f32.xlu0 %v2405
    %v2437 = vpop.xlane.xlu0 %2436
    %2438 = vadd.xlane.f32.xlu0 %v2407
    %v2439 = vpop.xlane.xlu0 %2438
    %2440 = vadd.xlane.f32.xlu0 %v2409
    %v2441 = vpop.xlane.xlu0 %2440
    %2442 = vadd.xlane.f32.xlu0 %v2411
    %v2443 = vpop.xlane.xlu0 %2442
    %2444 = vadd.xlane.f32.xlu0 %v2413
    %v2445 = vpop.xlane.xlu0 %2444
    %2446 = vadd.xlane.f32.xlu0 %v2415
    %v2447 = vpop.xlane.xlu0 %2446
    %2448 = vadd.xlane.f32.xlu0 %v2417
    %v2449 = vpop.xlane.xlu0 %2448
    %2450 = vadd.xlane.f32.xlu0 %v2419
    %v2451 = vpop.xlane.xlu0 %2450
    %2452 = vadd.xlane.f32.xlu0 %v2421
    %v2453 = vpop.xlane.xlu0 %2452
    %v2454 = vlog2.pop %v2423
    %v2455 = vmul.f32 %v2454, 0.6931472
    %v2456 = vlog2.pop %v2425
    %v2457 = vmul.f32 %v2456, 0.6931472
    %v2458 = vlog2.pop %v2427
    %v2459 = vmul.f32 %v2458, 0.6931472
    %v2460 = vlog2.pop %v2429
    %v2461 = vmul.f32 %v2460, 0.6931472
    %v2462 = vlog2.pop %v2431
    %v2463 = vmul.f32 %v2462, 0.6931472
    %v2464 = vlog2.pop %v2433
    %v2465 = vmul.f32 %v2464, 0.6931472
    %v2466 = vlog2.pop %v2435
    %v2467 = vmul.f32 %v2466, 0.6931472
    %v2468 = vlog2.pop %v2437
    %v2469 = vmul.f32 %v2468, 0.6931472
    %v2470 = vlog2.pop %v2439
    %v2471 = vmul.f32 %v2470, 0.6931472
    %v2472 = vlog2.pop %v2441
    %v2473 = vmul.f32 %v2472, 0.6931472
    %v2474 = vlog2.pop %v2443
    %v2475 = vmul.f32 %v2474, 0.6931472
    %v2476 = vlog2.pop %v2445
    %v2477 = vmul.f32 %v2476, 0.6931472
    %v2478 = vlog2.pop %v2447
    %v2479 = vmul.f32 %v2478, 0.6931472
    %v2480 = vlog2.pop %v2449
    %v2481 = vmul.f32 %v2480, 0.6931472
    %v2482 = vlog2.pop %v2451
    %v2483 = vmul.f32 %v2482, 0.6931472
    %v2484 = vlog2.pop %v2453
    %v2485 = vmul.f32 %v2484, 0.6931472
    %v2486 = vsub.f32 %v2374, %v2455
    %v2487 = vsub.f32 %v2375, %v2457
    %v2488 = vsub.f32 %v2376, %v2459
    %v2489 = vsub.f32 %v2377, %v2461
    %v2490 = vsub.f32 %v2378, %v2463
    %v2491 = vsub.f32 %v2379, %v2465
    %v2492 = vsub.f32 %v2380, %v2467
    %v2493 = vsub.f32 %v2381, %v2469
    %v2494 = vsub.f32 %v2382, %v2471
    %v2495 = vsub.f32 %v2383, %v2473
    %v2496 = vsub.f32 %v2384, %v2475
    %v2497 = vsub.f32 %v2385, %v2477
    %v2498 = vsub.f32 %v2386, %v2479
    %v2499 = vsub.f32 %v2387, %v2481
    %v2500 = vsub.f32 %v2388, %v2483
    %v2501 = vsub.f32 %v2389, %v2485
    %v2502 = vmul.f32 %v2486, 1.442695
    %v2503 = vpow.pop %v2502
    %v2504 = vmul.f32 %v2487, 1.442695
    %v2505 = vpow.pop %v2504
    %v2506 = vmul.f32 %v2488, 1.442695
    %v2507 = vpow.pop %v2506
    %v2508 = vmul.f32 %v2489, 1.442695
    %v2509 = vpow.pop %v2508
    %v2510 = vmul.f32 %v2490, 1.442695
    %v2511 = vpow.pop %v2510
    %v2512 = vmul.f32 %v2491, 1.442695
    %v2513 = vpow.pop %v2512
    %v2514 = vmul.f32 %v2492, 1.442695
    %v2515 = vpow.pop %v2514
    %v2516 = vmul.f32 %v2493, 1.442695
    %v2517 = vpow.pop %v2516
    %v2518 = vmul.f32 %v2494, 1.442695
    %v2519 = vpow.pop %v2518
    %v2520 = vmul.f32 %v2495, 1.442695
    %v2521 = vpow.pop %v2520
    %v2522 = vmul.f32 %v2496, 1.442695
    %v2523 = vpow.pop %v2522
    %v2524 = vmul.f32 %v2497, 1.442695
    %v2525 = vpow.pop %v2524
    %v2526 = vmul.f32 %v2498, 1.442695
    %v2527 = vpow.pop %v2526
    %v2528 = vmul.f32 %v2499, 1.442695
    %v2529 = vpow.pop %v2528
    %v2530 = vmul.f32 %v2500, 1.442695
    %v2531 = vpow.pop %v2530
    %v2532 = vmul.f32 %v2501, 1.442695
    %v2533 = vpow.pop %v2532
    %v2534 = vadd.f32 %v2503, %v2505
    %v2535 = vadd.f32 %v2534, %v2507
    %v2536 = vadd.f32 %v2535, %v2509
    %v2537 = vadd.f32 %v2536, %v2511
    %v2538 = vadd.f32 %v2537, %v2513
    %v2539 = vadd.f32 %v2538, %v2515
    %v2540 = vadd.f32 %v2539, %v2517
    %v2541 = vadd.f32 %v2540, %v2519
    %v2542 = vadd.f32 %v2541, %v2521
    %v2543 = vadd.f32 %v2542, %v2523
    %v2544 = vadd.f32 %v2543, %v2525
    %v2545 = vadd.f32 %v2544, %v2527
    %v2546 = vadd.f32 %v2545, %v2529
    %v2547 = vadd.f32 %v2546, %v2531
    %v2548 = vadd.f32 %v2547, %v2533
    %v2549 = vrot.slane %v2548, 4
    %v2550 = vadd.f32 %v2548, %v2549
    %v2551 = vrot.slane %v2550, 2
    %v2552 = vadd.f32 %v2550, %v2551
    %v2553 = vrot.slane %v2552, 1
    %v2554 = vadd.f32 %v2552, %v2553
    %v2555 = vlog2.pop %v2554
    %v2556 = vmul.f32 %v2555, 0.6931472
    %v2557 = vsub.f32 %v2486, %v2556
    %v2558 = vsub.f32 %v2487, %v2556
    %v2559 = vsub.f32 %v2488, %v2556
    %v2560 = vsub.f32 %v2489, %v2556
    %v2561 = vsub.f32 %v2490, %v2556
    %v2562 = vsub.f32 %v2491, %v2556
    %v2563 = vsub.f32 %v2492, %v2556
    %v2564 = vsub.f32 %v2493, %v2556
    %v2565 = vsub.f32 %v2494, %v2556
    %v2566 = vsub.f32 %v2495, %v2556
    %v2567 = vsub.f32 %v2496, %v2556
    %v2568 = vsub.f32 %v2497, %v2556
    %v2569 = vsub.f32 %v2498, %v2556
    %v2570 = vsub.f32 %v2499, %v2556
    %v2571 = vsub.f32 %v2500, %v2556
    %v2572 = vsub.f32 %v2501, %v2556
    %v2573 = vmul.f32 %v2557, 1.442695
    %v2574 = vpow.pop %v2573
    %v2575 = vmul.f32 %v2558, 1.442695
    %v2576 = vpow.pop %v2575
    %v2577 = vmul.f32 %v2559, 1.442695
    %v2578 = vpow.pop %v2577
    %v2579 = vmul.f32 %v2560, 1.442695
    %v2580 = vpow.pop %v2579
    %v2581 = vmul.f32 %v2561, 1.442695
    %v2582 = vpow.pop %v2581
    %v2583 = vmul.f32 %v2562, 1.442695
    %v2584 = vpow.pop %v2583
    %v2585 = vmul.f32 %v2563, 1.442695
    %v2586 = vpow.pop %v2585
    %v2587 = vmul.f32 %v2564, 1.442695
    %v2588 = vpow.pop %v2587
    %v2589 = vmul.f32 %v2565, 1.442695
    %v2590 = vpow.pop %v2589
    %v2591 = vmul.f32 %v2566, 1.442695
    %v2592 = vpow.pop %v2591
    %v2593 = vmul.f32 %v2567, 1.442695
    %v2594 = vpow.pop %v2593
    %v2595 = vmul.f32 %v2568, 1.442695
    %v2596 = vpow.pop %v2595
    %v2597 = vmul.f32 %v2569, 1.442695
    %v2598 = vpow.pop %v2597
    %v2599 = vmul.f32 %v2570, 1.442695
    %v2600 = vpow.pop %v2599
    %v2601 = vmul.f32 %v2571, 1.442695
    %v2602 = vpow.pop %v2601
    %v2603 = vmul.f32 %v2572, 1.442695
    %v2604 = vpow.pop %v2603
    %2605 = vadd.xlane.f32.xlu0 %v2574
    %v2606 = vpop.xlane.xlu0 %2605
    %2607 = vadd.xlane.f32.xlu0 %v2576
    %v2608 = vpop.xlane.xlu0 %2607
    %2609 = vadd.xlane.f32.xlu0 %v2578
    %v2610 = vpop.xlane.xlu0 %2609
    %2611 = vadd.xlane.f32.xlu0 %v2580
    %v2612 = vpop.xlane.xlu0 %2611
    %2613 = vadd.xlane.f32.xlu0 %v2582
    %v2614 = vpop.xlane.xlu0 %2613
    %2615 = vadd.xlane.f32.xlu0 %v2584
    %v2616 = vpop.xlane.xlu0 %2615
    %2617 = vadd.xlane.f32.xlu0 %v2586
    %v2618 = vpop.xlane.xlu0 %2617
    %2619 = vadd.xlane.f32.xlu0 %v2588
    %v2620 = vpop.xlane.xlu0 %2619
    %2621 = vadd.xlane.f32.xlu0 %v2590
    %v2622 = vpop.xlane.xlu0 %2621
    %2623 = vadd.xlane.f32.xlu0 %v2592
    %v2624 = vpop.xlane.xlu0 %2623
    %2625 = vadd.xlane.f32.xlu0 %v2594
    %v2626 = vpop.xlane.xlu0 %2625
    %2627 = vadd.xlane.f32.xlu0 %v2596
    %v2628 = vpop.xlane.xlu0 %2627
    %2629 = vadd.xlane.f32.xlu0 %v2598
    %v2630 = vpop.xlane.xlu0 %2629
    %2631 = vadd.xlane.f32.xlu0 %v2600
    %v2632 = vpop.xlane.xlu0 %2631
    %2633 = vadd.xlane.f32.xlu0 %v2602
    %v2634 = vpop.xlane.xlu0 %2633
    %2635 = vadd.xlane.f32.xlu0 %v2604
    %v2636 = vpop.xlane.xlu0 %2635
    %v2637 = vlog2.pop %v2606
    %v2638 = vmul.f32 %v2637, 0.6931472
    %v2639 = vlog2.pop %v2608
    %v2640 = vmul.f32 %v2639, 0.6931472
    %v2641 = vlog2.pop %v2610
    %v2642 = vmul.f32 %v2641, 0.6931472
    %v2643 = vlog2.pop %v2612
    %v2644 = vmul.f32 %v2643, 0.6931472
    %v2645 = vlog2.pop %v2614
    %v2646 = vmul.f32 %v2645, 0.6931472
    %v2647 = vlog2.pop %v2616
    %v2648 = vmul.f32 %v2647, 0.6931472
    %v2649 = vlog2.pop %v2618
    %v2650 = vmul.f32 %v2649, 0.6931472
    %v2651 = vlog2.pop %v2620
    %v2652 = vmul.f32 %v2651, 0.6931472
    %v2653 = vlog2.pop %v2622
    %v2654 = vmul.f32 %v2653, 0.6931472
    %v2655 = vlog2.pop %v2624
    %v2656 = vmul.f32 %v2655, 0.6931472
    %v2657 = vlog2.pop %v2626
    %v2658 = vmul.f32 %v2657, 0.6931472
    %v2659 = vlog2.pop %v2628
    %v2660 = vmul.f32 %v2659, 0.6931472
    %v2661 = vlog2.pop %v2630
    %v2662 = vmul.f32 %v2661, 0.6931472
    %v2663 = vlog2.pop %v2632
    %v2664 = vmul.f32 %v2663, 0.6931472
    %v2665 = vlog2.pop %v2634
    %v2666 = vmul.f32 %v2665, 0.6931472
    %v2667 = vlog2.pop %v2636
    %v2668 = vmul.f32 %v2667, 0.6931472
    %v2669 = vsub.f32 %v2557, %v2638
    %v2670 = vsub.f32 %v2558, %v2640
    %v2671 = vsub.f32 %v2559, %v2642
    %v2672 = vsub.f32 %v2560, %v2644
    %v2673 = vsub.f32 %v2561, %v2646
    %v2674 = vsub.f32 %v2562, %v2648
    %v2675 = vsub.f32 %v2563, %v2650
    %v2676 = vsub.f32 %v2564, %v2652
    %v2677 = vsub.f32 %v2565, %v2654
    %v2678 = vsub.f32 %v2566, %v2656
    %v2679 = vsub.f32 %v2567, %v2658
    %v2680 = vsub.f32 %v2568, %v2660
    %v2681 = vsub.f32 %v2569, %v2662
    %v2682 = vsub.f32 %v2570, %v2664
    %v2683 = vsub.f32 %v2571, %v2666
    %v2684 = vsub.f32 %v2572, %v2668
    %v2685 = vmul.f32 %v2669, 1.442695
    %v2686 = vpow.pop %v2685
    %v2687 = vmul.f32 %v2670, 1.442695
    %v2688 = vpow.pop %v2687
    %v2689 = vmul.f32 %v2671, 1.442695
    %v2690 = vpow.pop %v2689
    %v2691 = vmul.f32 %v2672, 1.442695
    %v2692 = vpow.pop %v2691
    %v2693 = vmul.f32 %v2673, 1.442695
    %v2694 = vpow.pop %v2693
    %v2695 = vmul.f32 %v2674, 1.442695
    %v2696 = vpow.pop %v2695
    %v2697 = vmul.f32 %v2675, 1.442695
    %v2698 = vpow.pop %v2697
    %v2699 = vmul.f32 %v2676, 1.442695
    %v2700 = vpow.pop %v2699
    %v2701 = vmul.f32 %v2677, 1.442695
    %v2702 = vpow.pop %v2701
    %v2703 = vmul.f32 %v2678, 1.442695
    %v2704 = vpow.pop %v2703
    %v2705 = vmul.f32 %v2679, 1.442695
    %v2706 = vpow.pop %v2705
    %v2707 = vmul.f32 %v2680, 1.442695
    %v2708 = vpow.pop %v2707
    %v2709 = vmul.f32 %v2681, 1.442695
    %v2710 = vpow.pop %v2709
    %v2711 = vmul.f32 %v2682, 1.442695
    %v2712 = vpow.pop %v2711
    %v2713 = vmul.f32 %v2683, 1.442695
    %v2714 = vpow.pop %v2713
    %v2715 = vmul.f32 %v2684, 1.442695
    %v2716 = vpow.pop %v2715
    %v2717 = vadd.f32 %v2686, %v2688
    %v2718 = vadd.f32 %v2717, %v2690
    %v2719 = vadd.f32 %v2718, %v2692
    %v2720 = vadd.f32 %v2719, %v2694
    %v2721 = vadd.f32 %v2720, %v2696
    %v2722 = vadd.f32 %v2721, %v2698
    %v2723 = vadd.f32 %v2722, %v2700
    %v2724 = vadd.f32 %v2723, %v2702
    %v2725 = vadd.f32 %v2724, %v2704
    %v2726 = vadd.f32 %v2725, %v2706
    %v2727 = vadd.f32 %v2726, %v2708
    %v2728 = vadd.f32 %v2727, %v2710
    %v2729 = vadd.f32 %v2728, %v2712
    %v2730 = vadd.f32 %v2729, %v2714
    %v2731 = vadd.f32 %v2730, %v2716
    %v2732 = vrot.slane %v2731, 4
    %v2733 = vadd.f32 %v2731, %v2732
    %v2734 = vrot.slane %v2733, 2
    %v2735 = vadd.f32 %v2733, %v2734
    %v2736 = vrot.slane %v2735, 1
    %v2737 = vadd.f32 %v2735, %v2736
    %v2738 = vlog2.pop %v2737
    %v2739 = vmul.f32 %v2738, 0.6931472
    %v2740 = vsub.f32 %v2669, %v2739
    %v2741 = vsub.f32 %v2670, %v2739
    %v2742 = vsub.f32 %v2671, %v2739
    %v2743 = vsub.f32 %v2672, %v2739
    %v2744 = vsub.f32 %v2673, %v2739
    %v2745 = vsub.f32 %v2674, %v2739
    %v2746 = vsub.f32 %v2675, %v2739
    %v2747 = vsub.f32 %v2676, %v2739
    %v2748 = vsub.f32 %v2677, %v2739
    %v2749 = vsub.f32 %v2678, %v2739
    %v2750 = vsub.f32 %v2679, %v2739
    %v2751 = vsub.f32 %v2680, %v2739
    %v2752 = vsub.f32 %v2681, %v2739
    %v2753 = vsub.f32 %v2682, %v2739
    %v2754 = vsub.f32 %v2683, %v2739
    %v2755 = vsub.f32 %v2684, %v2739
    %v2756 = vmul.f32 %v2740, 1.442695
    %v2757 = vpow.pop %v2756
    %v2758 = vmul.f32 %v2741, 1.442695
    %v2759 = vpow.pop %v2758
    %v2760 = vmul.f32 %v2742, 1.442695
    %v2761 = vpow.pop %v2760
    %v2762 = vmul.f32 %v2743, 1.442695
    %v2763 = vpow.pop %v2762
    %v2764 = vmul.f32 %v2744, 1.442695
    %v2765 = vpow.pop %v2764
    %v2766 = vmul.f32 %v2745, 1.442695
    %v2767 = vpow.pop %v2766
    %v2768 = vmul.f32 %v2746, 1.442695
    %v2769 = vpow.pop %v2768
    %v2770 = vmul.f32 %v2747, 1.442695
    %v2771 = vpow.pop %v2770
    %v2772 = vmul.f32 %v2748, 1.442695
    %v2773 = vpow.pop %v2772
    %v2774 = vmul.f32 %v2749, 1.442695
    %v2775 = vpow.pop %v2774
    %v2776 = vmul.f32 %v2750, 1.442695
    %v2777 = vpow.pop %v2776
    %v2778 = vmul.f32 %v2751, 1.442695
    %v2779 = vpow.pop %v2778
    %v2780 = vmul.f32 %v2752, 1.442695
    %v2781 = vpow.pop %v2780
    %v2782 = vmul.f32 %v2753, 1.442695
    %v2783 = vpow.pop %v2782
    %v2784 = vmul.f32 %v2754, 1.442695
    %v2785 = vpow.pop %v2784
    %v2786 = vmul.f32 %v2755, 1.442695
    %v2787 = vpow.pop %v2786
    %2788 = vadd.xlane.f32.xlu0 %v2757
    %v2789 = vpop.xlane.xlu0 %2788
    %2790 = vadd.xlane.f32.xlu0 %v2759
    %v2791 = vpop.xlane.xlu0 %2790
    %2792 = vadd.xlane.f32.xlu0 %v2761
    %v2793 = vpop.xlane.xlu0 %2792
    %2794 = vadd.xlane.f32.xlu0 %v2763
    %v2795 = vpop.xlane.xlu0 %2794
    %2796 = vadd.xlane.f32.xlu0 %v2765
    %v2797 = vpop.xlane.xlu0 %2796
    %2798 = vadd.xlane.f32.xlu0 %v2767
    %v2799 = vpop.xlane.xlu0 %2798
    %2800 = vadd.xlane.f32.xlu0 %v2769
    %v2801 = vpop.xlane.xlu0 %2800
    %2802 = vadd.xlane.f32.xlu0 %v2771
    %v2803 = vpop.xlane.xlu0 %2802
    %2804 = vadd.xlane.f32.xlu0 %v2773
    %v2805 = vpop.xlane.xlu0 %2804
    %2806 = vadd.xlane.f32.xlu0 %v2775
    %v2807 = vpop.xlane.xlu0 %2806
    %2808 = vadd.xlane.f32.xlu0 %v2777
    %v2809 = vpop.xlane.xlu0 %2808
    %2810 = vadd.xlane.f32.xlu0 %v2779
    %v2811 = vpop.xlane.xlu0 %2810
    %2812 = vadd.xlane.f32.xlu0 %v2781
    %v2813 = vpop.xlane.xlu0 %2812
    %2814 = vadd.xlane.f32.xlu0 %v2783
    %v2815 = vpop.xlane.xlu0 %2814
    %2816 = vadd.xlane.f32.xlu0 %v2785
    %v2817 = vpop.xlane.xlu0 %2816
    %2818 = vadd.xlane.f32.xlu0 %v2787
    %v2819 = vpop.xlane.xlu0 %2818
    %v2820 = vlog2.pop %v2789
    %v2821 = vmul.f32 %v2820, 0.6931472
    %v2822 = vlog2.pop %v2791
    %v2823 = vmul.f32 %v2822, 0.6931472
    %v2824 = vlog2.pop %v2793
    %v2825 = vmul.f32 %v2824, 0.6931472
    %v2826 = vlog2.pop %v2795
    %v2827 = vmul.f32 %v2826, 0.6931472
    %v2828 = vlog2.pop %v2797
    %v2829 = vmul.f32 %v2828, 0.6931472
    %v2830 = vlog2.pop %v2799
    %v2831 = vmul.f32 %v2830, 0.6931472
    %v2832 = vlog2.pop %v2801
    %v2833 = vmul.f32 %v2832, 0.6931472
    %v2834 = vlog2.pop %v2803
    %v2835 = vmul.f32 %v2834, 0.6931472
    %v2836 = vlog2.pop %v2805
    %v2837 = vmul.f32 %v2836, 0.6931472
    %v2838 = vlog2.pop %v2807
    %v2839 = vmul.f32 %v2838, 0.6931472
    %v2840 = vlog2.pop %v2809
    %v2841 = vmul.f32 %v2840, 0.6931472
    %v2842 = vlog2.pop %v2811
    %v2843 = vmul.f32 %v2842, 0.6931472
    %v2844 = vlog2.pop %v2813
    %v2845 = vmul.f32 %v2844, 0.6931472
    %v2846 = vlog2.pop %v2815
    %v2847 = vmul.f32 %v2846, 0.6931472
    %v2848 = vlog2.pop %v2817
    %v2849 = vmul.f32 %v2848, 0.6931472
    %v2850 = vlog2.pop %v2819
    %v2851 = vmul.f32 %v2850, 0.6931472
    %v2852 = vsub.f32 %v2740, %v2821
    %v2853 = vsub.f32 %v2741, %v2823
    %v2854 = vsub.f32 %v2742, %v2825
    %v2855 = vsub.f32 %v2743, %v2827
    %v2856 = vsub.f32 %v2744, %v2829
    %v2857 = vsub.f32 %v2745, %v2831
    %v2858 = vsub.f32 %v2746, %v2833
    %v2859 = vsub.f32 %v2747, %v2835
    %v2860 = vsub.f32 %v2748, %v2837
    %v2861 = vsub.f32 %v2749, %v2839
    %v2862 = vsub.f32 %v2750, %v2841
    %v2863 = vsub.f32 %v2751, %v2843
    %v2864 = vsub.f32 %v2752, %v2845
    %v2865 = vsub.f32 %v2753, %v2847
    %v2866 = vsub.f32 %v2754, %v2849
    %v2867 = vsub.f32 %v2755, %v2851
    %v2868 = vmul.f32 %v2852, 1.442695
    %v2869 = vpow.pop %v2868
    %v2870 = vmul.f32 %v2853, 1.442695
    %v2871 = vpow.pop %v2870
    %v2872 = vmul.f32 %v2854, 1.442695
    %v2873 = vpow.pop %v2872
    %v2874 = vmul.f32 %v2855, 1.442695
    %v2875 = vpow.pop %v2874
    %v2876 = vmul.f32 %v2856, 1.442695
    %v2877 = vpow.pop %v2876
    %v2878 = vmul.f32 %v2857, 1.442695
    %v2879 = vpow.pop %v2878
    %v2880 = vmul.f32 %v2858, 1.442695
    %v2881 = vpow.pop %v2880
    %v2882 = vmul.f32 %v2859, 1.442695
    %v2883 = vpow.pop %v2882
    %v2884 = vmul.f32 %v2860, 1.442695
    %v2885 = vpow.pop %v2884
    %v2886 = vmul.f32 %v2861, 1.442695
    %v2887 = vpow.pop %v2886
    %v2888 = vmul.f32 %v2862, 1.442695
    %v2889 = vpow.pop %v2888
    %v2890 = vmul.f32 %v2863, 1.442695
    %v2891 = vpow.pop %v2890
    %v2892 = vmul.f32 %v2864, 1.442695
    %v2893 = vpow.pop %v2892
    %v2894 = vmul.f32 %v2865, 1.442695
    %v2895 = vpow.pop %v2894
    %v2896 = vmul.f32 %v2866, 1.442695
    %v2897 = vpow.pop %v2896
    %v2898 = vmul.f32 %v2867, 1.442695
    %v2899 = vpow.pop %v2898
    %v2900 = vadd.f32 %v2869, %v2871
    %v2901 = vadd.f32 %v2900, %v2873
    %v2902 = vadd.f32 %v2901, %v2875
    %v2903 = vadd.f32 %v2902, %v2877
    %v2904 = vadd.f32 %v2903, %v2879
    %v2905 = vadd.f32 %v2904, %v2881
    %v2906 = vadd.f32 %v2905, %v2883
    %v2907 = vadd.f32 %v2906, %v2885
    %v2908 = vadd.f32 %v2907, %v2887
    %v2909 = vadd.f32 %v2908, %v2889
    %v2910 = vadd.f32 %v2909, %v2891
    %v2911 = vadd.f32 %v2910, %v2893
    %v2912 = vadd.f32 %v2911, %v2895
    %v2913 = vadd.f32 %v2912, %v2897
    %v2914 = vadd.f32 %v2913, %v2899
    %v2915 = vrot.slane %v2914, 4
    %v2916 = vadd.f32 %v2914, %v2915
    %v2917 = vrot.slane %v2916, 2
    %v2918 = vadd.f32 %v2916, %v2917
    %v2919 = vrot.slane %v2918, 1
    %v2920 = vadd.f32 %v2918, %v2919
    %v2921 = vlog2.pop %v2920
    %v2922 = vmul.f32 %v2921, 0.6931472
    %v2923 = vsub.f32 %v2852, %v2922
    %v2924 = vsub.f32 %v2853, %v2922
    %v2925 = vsub.f32 %v2854, %v2922
    %v2926 = vsub.f32 %v2855, %v2922
    %v2927 = vsub.f32 %v2856, %v2922
    %v2928 = vsub.f32 %v2857, %v2922
    %v2929 = vsub.f32 %v2858, %v2922
    %v2930 = vsub.f32 %v2859, %v2922
    %v2931 = vsub.f32 %v2860, %v2922
    %v2932 = vsub.f32 %v2861, %v2922
    %v2933 = vsub.f32 %v2862, %v2922
    %v2934 = vsub.f32 %v2863, %v2922
    %v2935 = vsub.f32 %v2864, %v2922
    %v2936 = vsub.f32 %v2865, %v2922
    %v2937 = vsub.f32 %v2866, %v2922
    %v2938 = vsub.f32 %v2867, %v2922
    %v2939 = vmul.f32 %v2923, 1.442695
    %v2940 = vpow.pop %v2939
    %v2941 = vmul.f32 %v2924, 1.442695
    %v2942 = vpow.pop %v2941
    %v2943 = vmul.f32 %v2925, 1.442695
    %v2944 = vpow.pop %v2943
    %v2945 = vmul.f32 %v2926, 1.442695
    %v2946 = vpow.pop %v2945
    %v2947 = vmul.f32 %v2927, 1.442695
    %v2948 = vpow.pop %v2947
    %v2949 = vmul.f32 %v2928, 1.442695
    %v2950 = vpow.pop %v2949
    %v2951 = vmul.f32 %v2929, 1.442695
    %v2952 = vpow.pop %v2951
    %v2953 = vmul.f32 %v2930, 1.442695
    %v2954 = vpow.pop %v2953
    %v2955 = vmul.f32 %v2931, 1.442695
    %v2956 = vpow.pop %v2955
    %v2957 = vmul.f32 %v2932, 1.442695
    %v2958 = vpow.pop %v2957
    %v2959 = vmul.f32 %v2933, 1.442695
    %v2960 = vpow.pop %v2959
    %v2961 = vmul.f32 %v2934, 1.442695
    %v2962 = vpow.pop %v2961
    %v2963 = vmul.f32 %v2935, 1.442695
    %v2964 = vpow.pop %v2963
    %v2965 = vmul.f32 %v2936, 1.442695
    %v2966 = vpow.pop %v2965
    %v2967 = vmul.f32 %v2937, 1.442695
    %v2968 = vpow.pop %v2967
    %v2969 = vmul.f32 %v2938, 1.442695
    %v2970 = vpow.pop %v2969
    %2971 = vadd.xlane.f32.xlu0 %v2940
    %v2972 = vpop.xlane.xlu0 %2971
    %2973 = vadd.xlane.f32.xlu0 %v2942
    %v2974 = vpop.xlane.xlu0 %2973
    %2975 = vadd.xlane.f32.xlu0 %v2944
    %v2976 = vpop.xlane.xlu0 %2975
    %2977 = vadd.xlane.f32.xlu0 %v2946
    %v2978 = vpop.xlane.xlu0 %2977
    %2979 = vadd.xlane.f32.xlu0 %v2948
    %v2980 = vpop.xlane.xlu0 %2979
    %2981 = vadd.xlane.f32.xlu0 %v2950
    %v2982 = vpop.xlane.xlu0 %2981
    %2983 = vadd.xlane.f32.xlu0 %v2952
    %v2984 = vpop.xlane.xlu0 %2983
    %2985 = vadd.xlane.f32.xlu0 %v2954
    %v2986 = vpop.xlane.xlu0 %2985
    %2987 = vadd.xlane.f32.xlu0 %v2956
    %v2988 = vpop.xlane.xlu0 %2987
    %2989 = vadd.xlane.f32.xlu0 %v2958
    %v2990 = vpop.xlane.xlu0 %2989
    %2991 = vadd.xlane.f32.xlu0 %v2960
    %v2992 = vpop.xlane.xlu0 %2991
    %2993 = vadd.xlane.f32.xlu0 %v2962
    %v2994 = vpop.xlane.xlu0 %2993
    %2995 = vadd.xlane.f32.xlu0 %v2964
    %v2996 = vpop.xlane.xlu0 %2995
    %2997 = vadd.xlane.f32.xlu0 %v2966
    %v2998 = vpop.xlane.xlu0 %2997
    %2999 = vadd.xlane.f32.xlu0 %v2968
    %v3000 = vpop.xlane.xlu0 %2999
    %3001 = vadd.xlane.f32.xlu0 %v2970
    %v3002 = vpop.xlane.xlu0 %3001
    %v3003 = vlog2.pop %v2972
    %v3004 = vmul.f32 %v3003, 0.6931472
    %v3005 = vlog2.pop %v2974
    %v3006 = vmul.f32 %v3005, 0.6931472
    %v3007 = vlog2.pop %v2976
    %v3008 = vmul.f32 %v3007, 0.6931472
    %v3009 = vlog2.pop %v2978
    %v3010 = vmul.f32 %v3009, 0.6931472
    %v3011 = vlog2.pop %v2980
    %v3012 = vmul.f32 %v3011, 0.6931472
    %v3013 = vlog2.pop %v2982
    %v3014 = vmul.f32 %v3013, 0.6931472
    %v3015 = vlog2.pop %v2984
    %v3016 = vmul.f32 %v3015, 0.6931472
    %v3017 = vlog2.pop %v2986
    %v3018 = vmul.f32 %v3017, 0.6931472
    %v3019 = vlog2.pop %v2988
    %v3020 = vmul.f32 %v3019, 0.6931472
    %v3021 = vlog2.pop %v2990
    %v3022 = vmul.f32 %v3021, 0.6931472
    %v3023 = vlog2.pop %v2992
    %v3024 = vmul.f32 %v3023, 0.6931472
    %v3025 = vlog2.pop %v2994
    %v3026 = vmul.f32 %v3025, 0.6931472
    %v3027 = vlog2.pop %v2996
    %v3028 = vmul.f32 %v3027, 0.6931472
    %v3029 = vlog2.pop %v2998
    %v3030 = vmul.f32 %v3029, 0.6931472
    %v3031 = vlog2.pop %v3000
    %v3032 = vmul.f32 %v3031, 0.6931472
    %v3033 = vlog2.pop %v3002
    %v3034 = vmul.f32 %v3033, 0.6931472
    %v3035 = vsub.f32 %v2923, %v3004
    %v3036 = vsub.f32 %v2924, %v3006
    %v3037 = vsub.f32 %v2925, %v3008
    %v3038 = vsub.f32 %v2926, %v3010
    %v3039 = vsub.f32 %v2927, %v3012
    %v3040 = vsub.f32 %v2928, %v3014
    %v3041 = vsub.f32 %v2929, %v3016
    %v3042 = vsub.f32 %v2930, %v3018
    %v3043 = vsub.f32 %v2931, %v3020
    %v3044 = vsub.f32 %v2932, %v3022
    %v3045 = vsub.f32 %v2933, %v3024
    %v3046 = vsub.f32 %v2934, %v3026
    %v3047 = vsub.f32 %v2935, %v3028
    %v3048 = vsub.f32 %v2936, %v3030
    %v3049 = vsub.f32 %v2937, %v3032
    %v3050 = vsub.f32 %v2938, %v3034
    %v3051 = vmul.f32 %v3035, 1.442695
    %v3052 = vpow.pop %v3051
    %v3053 = vmul.f32 %v3036, 1.442695
    %v3054 = vpow.pop %v3053
    %v3055 = vmul.f32 %v3037, 1.442695
    %v3056 = vpow.pop %v3055
    %v3057 = vmul.f32 %v3038, 1.442695
    %v3058 = vpow.pop %v3057
    %v3059 = vmul.f32 %v3039, 1.442695
    %v3060 = vpow.pop %v3059
    %v3061 = vmul.f32 %v3040, 1.442695
    %v3062 = vpow.pop %v3061
    %v3063 = vmul.f32 %v3041, 1.442695
    %v3064 = vpow.pop %v3063
    %v3065 = vmul.f32 %v3042, 1.442695
    %v3066 = vpow.pop %v3065
    %v3067 = vmul.f32 %v3043, 1.442695
    %v3068 = vpow.pop %v3067
    %v3069 = vmul.f32 %v3044, 1.442695
    %v3070 = vpow.pop %v3069
    %v3071 = vmul.f32 %v3045, 1.442695
    %v3072 = vpow.pop %v3071
    %v3073 = vmul.f32 %v3046, 1.442695
    %v3074 = vpow.pop %v3073
    %v3075 = vmul.f32 %v3047, 1.442695
    %v3076 = vpow.pop %v3075
    %v3077 = vmul.f32 %v3048, 1.442695
    %v3078 = vpow.pop %v3077
    %v3079 = vmul.f32 %v3049, 1.442695
    %v3080 = vpow.pop %v3079
    %v3081 = vmul.f32 %v3050, 1.442695
    %v3082 = vpow.pop %v3081
    %v3083 = vadd.f32 %v3052, %v3054
    %v3084 = vadd.f32 %v3083, %v3056
    %v3085 = vadd.f32 %v3084, %v3058
    %v3086 = vadd.f32 %v3085, %v3060
    %v3087 = vadd.f32 %v3086, %v3062
    %v3088 = vadd.f32 %v3087, %v3064
    %v3089 = vadd.f32 %v3088, %v3066
    %v3090 = vadd.f32 %v3089, %v3068
    %v3091 = vadd.f32 %v3090, %v3070
    %v3092 = vadd.f32 %v3091, %v3072
    %v3093 = vadd.f32 %v3092, %v3074
    %v3094 = vadd.f32 %v3093, %v3076
    %v3095 = vadd.f32 %v3094, %v3078
    %v3096 = vadd.f32 %v3095, %v3080
    %v3097 = vadd.f32 %v3096, %v3082
    %v3098 = vrot.slane %v3097, 4
    %v3099 = vadd.f32 %v3097, %v3098
    %v3100 = vrot.slane %v3099, 2
    %v3101 = vadd.f32 %v3099, %v3100
    %v3102 = vrot.slane %v3101, 1
    %v3103 = vadd.f32 %v3101, %v3102
    %v3104 = vlog2.pop %v3103
    %v3105 = vmul.f32 %v3104, 0.6931472
    %v3106 = vsub.f32 %v3035, %v3105
    %v3107 = vsub.f32 %v3036, %v3105
    %v3108 = vsub.f32 %v3037, %v3105
    %v3109 = vsub.f32 %v3038, %v3105
    %v3110 = vsub.f32 %v3039, %v3105
    %v3111 = vsub.f32 %v3040, %v3105
    %v3112 = vsub.f32 %v3041, %v3105
    %v3113 = vsub.f32 %v3042, %v3105
    %v3114 = vsub.f32 %v3043, %v3105
    %v3115 = vsub.f32 %v3044, %v3105
    %v3116 = vsub.f32 %v3045, %v3105
    %v3117 = vsub.f32 %v3046, %v3105
    %v3118 = vsub.f32 %v3047, %v3105
    %v3119 = vsub.f32 %v3048, %v3105
    %v3120 = vsub.f32 %v3049, %v3105
    %v3121 = vsub.f32 %v3050, %v3105
    %v3122 = vmul.f32 %v3106, 1.442695
    %v3123 = vpow.pop %v3122
    %v3124 = vmul.f32 %v3107, 1.442695
    %v3125 = vpow.pop %v3124
    %v3126 = vmul.f32 %v3108, 1.442695
    %v3127 = vpow.pop %v3126
    %v3128 = vmul.f32 %v3109, 1.442695
    %v3129 = vpow.pop %v3128
    %v3130 = vmul.f32 %v3110, 1.442695
    %v3131 = vpow.pop %v3130
    %v3132 = vmul.f32 %v3111, 1.442695
    %v3133 = vpow.pop %v3132
    %v3134 = vmul.f32 %v3112, 1.442695
    %v3135 = vpow.pop %v3134
    %v3136 = vmul.f32 %v3113, 1.442695
    %v3137 = vpow.pop %v3136
    %v3138 = vmul.f32 %v3114, 1.442695
    %v3139 = vpow.pop %v3138
    %v3140 = vmul.f32 %v3115, 1.442695
    %v3141 = vpow.pop %v3140
    %v3142 = vmul.f32 %v3116, 1.442695
    %v3143 = vpow.pop %v3142
    %v3144 = vmul.f32 %v3117, 1.442695
    %v3145 = vpow.pop %v3144
    %v3146 = vmul.f32 %v3118, 1.442695
    %v3147 = vpow.pop %v3146
    %v3148 = vmul.f32 %v3119, 1.442695
    %v3149 = vpow.pop %v3148
    %v3150 = vmul.f32 %v3120, 1.442695
    %v3151 = vpow.pop %v3150
    %v3152 = vmul.f32 %v3121, 1.442695
    %v3153 = vpow.pop %v3152
    %3154 = vadd.xlane.f32.xlu0 %v3123
    %v3155 = vpop.xlane.xlu0 %3154
    %3156 = vadd.xlane.f32.xlu0 %v3125
    %v3157 = vpop.xlane.xlu0 %3156
    %3158 = vadd.xlane.f32.xlu0 %v3127
    %v3159 = vpop.xlane.xlu0 %3158
    %3160 = vadd.xlane.f32.xlu0 %v3129
    %v3161 = vpop.xlane.xlu0 %3160
    %3162 = vadd.xlane.f32.xlu0 %v3131
    %v3163 = vpop.xlane.xlu0 %3162
    %3164 = vadd.xlane.f32.xlu0 %v3133
    %v3165 = vpop.xlane.xlu0 %3164
    %3166 = vadd.xlane.f32.xlu0 %v3135
    %v3167 = vpop.xlane.xlu0 %3166
    %3168 = vadd.xlane.f32.xlu0 %v3137
    %v3169 = vpop.xlane.xlu0 %3168
    %3170 = vadd.xlane.f32.xlu0 %v3139
    %v3171 = vpop.xlane.xlu0 %3170
    %3172 = vadd.xlane.f32.xlu0 %v3141
    %v3173 = vpop.xlane.xlu0 %3172
    %3174 = vadd.xlane.f32.xlu0 %v3143
    %v3175 = vpop.xlane.xlu0 %3174
    %3176 = vadd.xlane.f32.xlu0 %v3145
    %v3177 = vpop.xlane.xlu0 %3176
    %3178 = vadd.xlane.f32.xlu0 %v3147
    %v3179 = vpop.xlane.xlu0 %3178
    %3180 = vadd.xlane.f32.xlu0 %v3149
    %v3181 = vpop.xlane.xlu0 %3180
    %3182 = vadd.xlane.f32.xlu0 %v3151
    %v3183 = vpop.xlane.xlu0 %3182
    %3184 = vadd.xlane.f32.xlu0 %v3153
    %v3185 = vpop.xlane.xlu0 %3184
    %v3186 = vlog2.pop %v3155
    %v3187 = vmul.f32 %v3186, 0.6931472
    %v3188 = vlog2.pop %v3157
    %v3189 = vmul.f32 %v3188, 0.6931472
    %v3190 = vlog2.pop %v3159
    %v3191 = vmul.f32 %v3190, 0.6931472
    %v3192 = vlog2.pop %v3161
    %v3193 = vmul.f32 %v3192, 0.6931472
    %v3194 = vlog2.pop %v3163
    %v3195 = vmul.f32 %v3194, 0.6931472
    %v3196 = vlog2.pop %v3165
    %v3197 = vmul.f32 %v3196, 0.6931472
    %v3198 = vlog2.pop %v3167
    %v3199 = vmul.f32 %v3198, 0.6931472
    %v3200 = vlog2.pop %v3169
    %v3201 = vmul.f32 %v3200, 0.6931472
    %v3202 = vlog2.pop %v3171
    %v3203 = vmul.f32 %v3202, 0.6931472
    %v3204 = vlog2.pop %v3173
    %v3205 = vmul.f32 %v3204, 0.6931472
    %v3206 = vlog2.pop %v3175
    %v3207 = vmul.f32 %v3206, 0.6931472
    %v3208 = vlog2.pop %v3177
    %v3209 = vmul.f32 %v3208, 0.6931472
    %v3210 = vlog2.pop %v3179
    %v3211 = vmul.f32 %v3210, 0.6931472
    %v3212 = vlog2.pop %v3181
    %v3213 = vmul.f32 %v3212, 0.6931472
    %v3214 = vlog2.pop %v3183
    %v3215 = vmul.f32 %v3214, 0.6931472
    %v3216 = vlog2.pop %v3185
    %v3217 = vmul.f32 %v3216, 0.6931472
    %v3218 = vsub.f32 %v3106, %v3187
    %v3219 = vsub.f32 %v3107, %v3189
    %v3220 = vsub.f32 %v3108, %v3191
    %v3221 = vsub.f32 %v3109, %v3193
    %v3222 = vsub.f32 %v3110, %v3195
    %v3223 = vsub.f32 %v3111, %v3197
    %v3224 = vsub.f32 %v3112, %v3199
    %v3225 = vsub.f32 %v3113, %v3201
    %v3226 = vsub.f32 %v3114, %v3203
    %v3227 = vsub.f32 %v3115, %v3205
    %v3228 = vsub.f32 %v3116, %v3207
    %v3229 = vsub.f32 %v3117, %v3209
    %v3230 = vsub.f32 %v3118, %v3211
    %v3231 = vsub.f32 %v3119, %v3213
    %v3232 = vsub.f32 %v3120, %v3215
    %v3233 = vsub.f32 %v3121, %v3217
    %v3234 = vmul.f32 %v3218, 1.442695
    %v3235 = vpow.pop %v3234
    %v3236 = vmul.f32 %v3219, 1.442695
    %v3237 = vpow.pop %v3236
    %v3238 = vmul.f32 %v3220, 1.442695
    %v3239 = vpow.pop %v3238
    %v3240 = vmul.f32 %v3221, 1.442695
    %v3241 = vpow.pop %v3240
    %v3242 = vmul.f32 %v3222, 1.442695
    %v3243 = vpow.pop %v3242
    %v3244 = vmul.f32 %v3223, 1.442695
    %v3245 = vpow.pop %v3244
    %v3246 = vmul.f32 %v3224, 1.442695
    %v3247 = vpow.pop %v3246
    %v3248 = vmul.f32 %v3225, 1.442695
    %v3249 = vpow.pop %v3248
    %v3250 = vmul.f32 %v3226, 1.442695
    %v3251 = vpow.pop %v3250
    %v3252 = vmul.f32 %v3227, 1.442695
    %v3253 = vpow.pop %v3252
    %v3254 = vmul.f32 %v3228, 1.442695
    %v3255 = vpow.pop %v3254
    %v3256 = vmul.f32 %v3229, 1.442695
    %v3257 = vpow.pop %v3256
    %v3258 = vmul.f32 %v3230, 1.442695
    %v3259 = vpow.pop %v3258
    %v3260 = vmul.f32 %v3231, 1.442695
    %v3261 = vpow.pop %v3260
    %v3262 = vmul.f32 %v3232, 1.442695
    %v3263 = vpow.pop %v3262
    %v3264 = vmul.f32 %v3233, 1.442695
    %v3265 = vpow.pop %v3264
    %v3266 = vadd.f32 %v3235, %v3237
    %v3267 = vadd.f32 %v3266, %v3239
    %v3268 = vadd.f32 %v3267, %v3241
    %v3269 = vadd.f32 %v3268, %v3243
    %v3270 = vadd.f32 %v3269, %v3245
    %v3271 = vadd.f32 %v3270, %v3247
    %v3272 = vadd.f32 %v3271, %v3249
    %v3273 = vadd.f32 %v3272, %v3251
    %v3274 = vadd.f32 %v3273, %v3253
    %v3275 = vadd.f32 %v3274, %v3255
    %v3276 = vadd.f32 %v3275, %v3257
    %v3277 = vadd.f32 %v3276, %v3259
    %v3278 = vadd.f32 %v3277, %v3261
    %v3279 = vadd.f32 %v3278, %v3263
    %v3280 = vadd.f32 %v3279, %v3265
    %v3281 = vrot.slane %v3280, 4
    %v3282 = vadd.f32 %v3280, %v3281
    %v3283 = vrot.slane %v3282, 2
    %v3284 = vadd.f32 %v3282, %v3283
    %v3285 = vrot.slane %v3284, 1
    %v3286 = vadd.f32 %v3284, %v3285
    %v3287 = vlog2.pop %v3286
    %v3288 = vmul.f32 %v3287, 0.6931472
    %v3289 = vsub.f32 %v3218, %v3288
    %v3290 = vsub.f32 %v3219, %v3288
    %v3291 = vsub.f32 %v3220, %v3288
    %v3292 = vsub.f32 %v3221, %v3288
    %v3293 = vsub.f32 %v3222, %v3288
    %v3294 = vsub.f32 %v3223, %v3288
    %v3295 = vsub.f32 %v3224, %v3288
    %v3296 = vsub.f32 %v3225, %v3288
    %v3297 = vsub.f32 %v3226, %v3288
    %v3298 = vsub.f32 %v3227, %v3288
    %v3299 = vsub.f32 %v3228, %v3288
    %v3300 = vsub.f32 %v3229, %v3288
    %v3301 = vsub.f32 %v3230, %v3288
    %v3302 = vsub.f32 %v3231, %v3288
    %v3303 = vsub.f32 %v3232, %v3288
    %v3304 = vsub.f32 %v3233, %v3288
    %v3305 = vmul.f32 %v3289, 1.442695
    %v3306 = vpow.pop %v3305
    %v3307 = vmul.f32 %v3290, 1.442695
    %v3308 = vpow.pop %v3307
    %v3309 = vmul.f32 %v3291, 1.442695
    %v3310 = vpow.pop %v3309
    %v3311 = vmul.f32 %v3292, 1.442695
    %v3312 = vpow.pop %v3311
    %v3313 = vmul.f32 %v3293, 1.442695
    %v3314 = vpow.pop %v3313
    %v3315 = vmul.f32 %v3294, 1.442695
    %v3316 = vpow.pop %v3315
    %v3317 = vmul.f32 %v3295, 1.442695
    %v3318 = vpow.pop %v3317
    %v3319 = vmul.f32 %v3296, 1.442695
    %v3320 = vpow.pop %v3319
    %v3321 = vmul.f32 %v3297, 1.442695
    %v3322 = vpow.pop %v3321
    %v3323 = vmul.f32 %v3298, 1.442695
    %v3324 = vpow.pop %v3323
    %v3325 = vmul.f32 %v3299, 1.442695
    %v3326 = vpow.pop %v3325
    %v3327 = vmul.f32 %v3300, 1.442695
    %v3328 = vpow.pop %v3327
    %v3329 = vmul.f32 %v3301, 1.442695
    %v3330 = vpow.pop %v3329
    %v3331 = vmul.f32 %v3302, 1.442695
    %v3332 = vpow.pop %v3331
    %v3333 = vmul.f32 %v3303, 1.442695
    %v3334 = vpow.pop %v3333
    %v3335 = vmul.f32 %v3304, 1.442695
    %v3336 = vpow.pop %v3335
    %3337 = vadd.xlane.f32.xlu0 %v3306
    %v3338 = vpop.xlane.xlu0 %3337
    %3339 = vadd.xlane.f32.xlu0 %v3308
    %v3340 = vpop.xlane.xlu0 %3339
    %3341 = vadd.xlane.f32.xlu0 %v3310
    %v3342 = vpop.xlane.xlu0 %3341
    %3343 = vadd.xlane.f32.xlu0 %v3312
    %v3344 = vpop.xlane.xlu0 %3343
    %3345 = vadd.xlane.f32.xlu0 %v3314
    %v3346 = vpop.xlane.xlu0 %3345
    %3347 = vadd.xlane.f32.xlu0 %v3316
    %v3348 = vpop.xlane.xlu0 %3347
    %3349 = vadd.xlane.f32.xlu0 %v3318
    %v3350 = vpop.xlane.xlu0 %3349
    %3351 = vadd.xlane.f32.xlu0 %v3320
    %v3352 = vpop.xlane.xlu0 %3351
    %3353 = vadd.xlane.f32.xlu0 %v3322
    %v3354 = vpop.xlane.xlu0 %3353
    %3355 = vadd.xlane.f32.xlu0 %v3324
    %v3356 = vpop.xlane.xlu0 %3355
    %3357 = vadd.xlane.f32.xlu0 %v3326
    %v3358 = vpop.xlane.xlu0 %3357
    %3359 = vadd.xlane.f32.xlu0 %v3328
    %v3360 = vpop.xlane.xlu0 %3359
    %3361 = vadd.xlane.f32.xlu0 %v3330
    %v3362 = vpop.xlane.xlu0 %3361
    %3363 = vadd.xlane.f32.xlu0 %v3332
    %v3364 = vpop.xlane.xlu0 %3363
    %3365 = vadd.xlane.f32.xlu0 %v3334
    %v3366 = vpop.xlane.xlu0 %3365
    %3367 = vadd.xlane.f32.xlu0 %v3336
    %v3368 = vpop.xlane.xlu0 %3367
    %v3369 = vlog2.pop %v3338
    %v3370 = vmul.f32 %v3369, 0.6931472
    %v3371 = vlog2.pop %v3340
    %v3372 = vmul.f32 %v3371, 0.6931472
    %v3373 = vlog2.pop %v3342
    %v3374 = vmul.f32 %v3373, 0.6931472
    %v3375 = vlog2.pop %v3344
    %v3376 = vmul.f32 %v3375, 0.6931472
    %v3377 = vlog2.pop %v3346
    %v3378 = vmul.f32 %v3377, 0.6931472
    %v3379 = vlog2.pop %v3348
    %v3380 = vmul.f32 %v3379, 0.6931472
    %v3381 = vlog2.pop %v3350
    %v3382 = vmul.f32 %v3381, 0.6931472
    %v3383 = vlog2.pop %v3352
    %v3384 = vmul.f32 %v3383, 0.6931472
    %v3385 = vlog2.pop %v3354
    %v3386 = vmul.f32 %v3385, 0.6931472
    %v3387 = vlog2.pop %v3356
    %v3388 = vmul.f32 %v3387, 0.6931472
    %v3389 = vlog2.pop %v3358
    %v3390 = vmul.f32 %v3389, 0.6931472
    %v3391 = vlog2.pop %v3360
    %v3392 = vmul.f32 %v3391, 0.6931472
    %v3393 = vlog2.pop %v3362
    %v3394 = vmul.f32 %v3393, 0.6931472
    %v3395 = vlog2.pop %v3364
    %v3396 = vmul.f32 %v3395, 0.6931472
    %v3397 = vlog2.pop %v3366
    %v3398 = vmul.f32 %v3397, 0.6931472
    %v3399 = vlog2.pop %v3368
    %v3400 = vmul.f32 %v3399, 0.6931472
    %v3401 = vsub.f32 %v3289, %v3370
    %v3402 = vsub.f32 %v3290, %v3372
    %v3403 = vsub.f32 %v3291, %v3374
    %v3404 = vsub.f32 %v3292, %v3376
    %v3405 = vsub.f32 %v3293, %v3378
    %v3406 = vsub.f32 %v3294, %v3380
    %v3407 = vsub.f32 %v3295, %v3382
    %v3408 = vsub.f32 %v3296, %v3384
    %v3409 = vsub.f32 %v3297, %v3386
    %v3410 = vsub.f32 %v3298, %v3388
    %v3411 = vsub.f32 %v3299, %v3390
    %v3412 = vsub.f32 %v3300, %v3392
    %v3413 = vsub.f32 %v3301, %v3394
    %v3414 = vsub.f32 %v3302, %v3396
    %v3415 = vsub.f32 %v3303, %v3398
    %v3416 = vsub.f32 %v3304, %v3400
    %v3417 = vmul.f32 %v3401, 1.442695
    %v3418 = vpow.pop %v3417
    %v3419 = vmul.f32 %v3402, 1.442695
    %v3420 = vpow.pop %v3419
    %v3421 = vmul.f32 %v3403, 1.442695
    %v3422 = vpow.pop %v3421
    %v3423 = vmul.f32 %v3404, 1.442695
    %v3424 = vpow.pop %v3423
    %v3425 = vmul.f32 %v3405, 1.442695
    %v3426 = vpow.pop %v3425
    %v3427 = vmul.f32 %v3406, 1.442695
    %v3428 = vpow.pop %v3427
    %v3429 = vmul.f32 %v3407, 1.442695
    %v3430 = vpow.pop %v3429
    %v3431 = vmul.f32 %v3408, 1.442695
    %v3432 = vpow.pop %v3431
    %v3433 = vmul.f32 %v3409, 1.442695
    %v3434 = vpow.pop %v3433
    %v3435 = vmul.f32 %v3410, 1.442695
    %v3436 = vpow.pop %v3435
    %v3437 = vmul.f32 %v3411, 1.442695
    %v3438 = vpow.pop %v3437
    %v3439 = vmul.f32 %v3412, 1.442695
    %v3440 = vpow.pop %v3439
    %v3441 = vmul.f32 %v3413, 1.442695
    %v3442 = vpow.pop %v3441
    %v3443 = vmul.f32 %v3414, 1.442695
    %v3444 = vpow.pop %v3443
    %v3445 = vmul.f32 %v3415, 1.442695
    %v3446 = vpow.pop %v3445
    %v3447 = vmul.f32 %v3416, 1.442695
    %v3448 = vpow.pop %v3447
    %v3449 = vadd.f32 %v3418, %v3420
    %v3450 = vadd.f32 %v3449, %v3422
    %v3451 = vadd.f32 %v3450, %v3424
    %v3452 = vadd.f32 %v3451, %v3426
    %v3453 = vadd.f32 %v3452, %v3428
    %v3454 = vadd.f32 %v3453, %v3430
    %v3455 = vadd.f32 %v3454, %v3432
    %v3456 = vadd.f32 %v3455, %v3434
    %v3457 = vadd.f32 %v3456, %v3436
    %v3458 = vadd.f32 %v3457, %v3438
    %v3459 = vadd.f32 %v3458, %v3440
    %v3460 = vadd.f32 %v3459, %v3442
    %v3461 = vadd.f32 %v3460, %v3444
    %v3462 = vadd.f32 %v3461, %v3446
    %v3463 = vadd.f32 %v3462, %v3448
    %v3464 = vrot.slane %v3463, 4
    %v3465 = vadd.f32 %v3463, %v3464
    %v3466 = vrot.slane %v3465, 2
    %v3467 = vadd.f32 %v3465, %v3466
    %v3468 = vrot.slane %v3467, 1
    %v3469 = vadd.f32 %v3467, %v3468
    %v3470 = vlog2.pop %v3469
    %v3471 = vmul.f32 %v3470, 0.6931472
    %v3472 = vsub.f32 %v3401, %v3471
    %v3473 = vsub.f32 %v3402, %v3471
    %v3474 = vsub.f32 %v3403, %v3471
    %v3475 = vsub.f32 %v3404, %v3471
    %v3476 = vsub.f32 %v3405, %v3471
    %v3477 = vsub.f32 %v3406, %v3471
    %v3478 = vsub.f32 %v3407, %v3471
    %v3479 = vsub.f32 %v3408, %v3471
    %v3480 = vsub.f32 %v3409, %v3471
    %v3481 = vsub.f32 %v3410, %v3471
    %v3482 = vsub.f32 %v3411, %v3471
    %v3483 = vsub.f32 %v3412, %v3471
    %v3484 = vsub.f32 %v3413, %v3471
    %v3485 = vsub.f32 %v3414, %v3471
    %v3486 = vsub.f32 %v3415, %v3471
    %v3487 = vsub.f32 %v3416, %v3471
    %v3488 = vmul.f32 %v3472, 1.442695
    %v3489 = vpow.pop %v3488
    %v3490 = vmul.f32 %v3473, 1.442695
    %v3491 = vpow.pop %v3490
    %v3492 = vmul.f32 %v3474, 1.442695
    %v3493 = vpow.pop %v3492
    %v3494 = vmul.f32 %v3475, 1.442695
    %v3495 = vpow.pop %v3494
    %v3496 = vmul.f32 %v3476, 1.442695
    %v3497 = vpow.pop %v3496
    %v3498 = vmul.f32 %v3477, 1.442695
    %v3499 = vpow.pop %v3498
    %v3500 = vmul.f32 %v3478, 1.442695
    %v3501 = vpow.pop %v3500
    %v3502 = vmul.f32 %v3479, 1.442695
    %v3503 = vpow.pop %v3502
    %v3504 = vmul.f32 %v3480, 1.442695
    %v3505 = vpow.pop %v3504
    %v3506 = vmul.f32 %v3481, 1.442695
    %v3507 = vpow.pop %v3506
    %v3508 = vmul.f32 %v3482, 1.442695
    %v3509 = vpow.pop %v3508
    %v3510 = vmul.f32 %v3483, 1.442695
    %v3511 = vpow.pop %v3510
    %v3512 = vmul.f32 %v3484, 1.442695
    %v3513 = vpow.pop %v3512
    %v3514 = vmul.f32 %v3485, 1.442695
    %v3515 = vpow.pop %v3514
    %v3516 = vmul.f32 %v3486, 1.442695
    %v3517 = vpow.pop %v3516
    %v3518 = vmul.f32 %v3487, 1.442695
    %v3519 = vpow.pop %v3518
    %3520 = vadd.xlane.f32.xlu0 %v3489
    %v3521 = vpop.xlane.xlu0 %3520
    %3522 = vadd.xlane.f32.xlu0 %v3491
    %v3523 = vpop.xlane.xlu0 %3522
    %3524 = vadd.xlane.f32.xlu0 %v3493
    %v3525 = vpop.xlane.xlu0 %3524
    %3526 = vadd.xlane.f32.xlu0 %v3495
    %v3527 = vpop.xlane.xlu0 %3526
    %3528 = vadd.xlane.f32.xlu0 %v3497
    %v3529 = vpop.xlane.xlu0 %3528
    %3530 = vadd.xlane.f32.xlu0 %v3499
    %v3531 = vpop.xlane.xlu0 %3530
    %3532 = vadd.xlane.f32.xlu0 %v3501
    %v3533 = vpop.xlane.xlu0 %3532
    %3534 = vadd.xlane.f32.xlu0 %v3503
    %v3535 = vpop.xlane.xlu0 %3534
    %3536 = vadd.xlane.f32.xlu0 %v3505
    %v3537 = vpop.xlane.xlu0 %3536
    %3538 = vadd.xlane.f32.xlu0 %v3507
    %v3539 = vpop.xlane.xlu0 %3538
    %3540 = vadd.xlane.f32.xlu0 %v3509
    %v3541 = vpop.xlane.xlu0 %3540
    %3542 = vadd.xlane.f32.xlu0 %v3511
    %v3543 = vpop.xlane.xlu0 %3542
    %3544 = vadd.xlane.f32.xlu0 %v3513
    %v3545 = vpop.xlane.xlu0 %3544
    %3546 = vadd.xlane.f32.xlu0 %v3515
    %v3547 = vpop.xlane.xlu0 %3546
    %3548 = vadd.xlane.f32.xlu0 %v3517
    %v3549 = vpop.xlane.xlu0 %3548
    %3550 = vadd.xlane.f32.xlu0 %v3519
    %v3551 = vpop.xlane.xlu0 %3550
    %v3552 = vlog2.pop %v3521
    %v3553 = vmul.f32 %v3552, 0.6931472
    %v3554 = vlog2.pop %v3523
    %v3555 = vmul.f32 %v3554, 0.6931472
    %v3556 = vlog2.pop %v3525
    %v3557 = vmul.f32 %v3556, 0.6931472
    %v3558 = vlog2.pop %v3527
    %v3559 = vmul.f32 %v3558, 0.6931472
    %v3560 = vlog2.pop %v3529
    %v3561 = vmul.f32 %v3560, 0.6931472
    %v3562 = vlog2.pop %v3531
    %v3563 = vmul.f32 %v3562, 0.6931472
    %v3564 = vlog2.pop %v3533
    %v3565 = vmul.f32 %v3564, 0.6931472
    %v3566 = vlog2.pop %v3535
    %v3567 = vmul.f32 %v3566, 0.6931472
    %v3568 = vlog2.pop %v3537
    %v3569 = vmul.f32 %v3568, 0.6931472
    %v3570 = vlog2.pop %v3539
    %v3571 = vmul.f32 %v3570, 0.6931472
    %v3572 = vlog2.pop %v3541
    %v3573 = vmul.f32 %v3572, 0.6931472
    %v3574 = vlog2.pop %v3543
    %v3575 = vmul.f32 %v3574, 0.6931472
    %v3576 = vlog2.pop %v3545
    %v3577 = vmul.f32 %v3576, 0.6931472
    %v3578 = vlog2.pop %v3547
    %v3579 = vmul.f32 %v3578, 0.6931472
    %v3580 = vlog2.pop %v3549
    %v3581 = vmul.f32 %v3580, 0.6931472
    %v3582 = vlog2.pop %v3551
    %v3583 = vmul.f32 %v3582, 0.6931472
    %v3584 = vsub.f32 %v3472, %v3553
    %v3585 = vsub.f32 %v3473, %v3555
    %v3586 = vsub.f32 %v3474, %v3557
    %v3587 = vsub.f32 %v3475, %v3559
    %v3588 = vsub.f32 %v3476, %v3561
    %v3589 = vsub.f32 %v3477, %v3563
    %v3590 = vsub.f32 %v3478, %v3565
    %v3591 = vsub.f32 %v3479, %v3567
    %v3592 = vsub.f32 %v3480, %v3569
    %v3593 = vsub.f32 %v3481, %v3571
    %v3594 = vsub.f32 %v3482, %v3573
    %v3595 = vsub.f32 %v3483, %v3575
    %v3596 = vsub.f32 %v3484, %v3577
    %v3597 = vsub.f32 %v3485, %v3579
    %v3598 = vsub.f32 %v3486, %v3581
    %v3599 = vsub.f32 %v3487, %v3583
    %v3600 = vmul.f32 %v3584, 1.442695
    %v3601 = vpow.pop %v3600
    %v3602 = vmul.f32 %v3585, 1.442695
    %v3603 = vpow.pop %v3602
    %v3604 = vmul.f32 %v3586, 1.442695
    %v3605 = vpow.pop %v3604
    %v3606 = vmul.f32 %v3587, 1.442695
    %v3607 = vpow.pop %v3606
    %v3608 = vmul.f32 %v3588, 1.442695
    %v3609 = vpow.pop %v3608
    %v3610 = vmul.f32 %v3589, 1.442695
    %v3611 = vpow.pop %v3610
    %v3612 = vmul.f32 %v3590, 1.442695
    %v3613 = vpow.pop %v3612
    %v3614 = vmul.f32 %v3591, 1.442695
    %v3615 = vpow.pop %v3614
    %v3616 = vmul.f32 %v3592, 1.442695
    %v3617 = vpow.pop %v3616
    %v3618 = vmul.f32 %v3593, 1.442695
    %v3619 = vpow.pop %v3618
    %v3620 = vmul.f32 %v3594, 1.442695
    %v3621 = vpow.pop %v3620
    %v3622 = vmul.f32 %v3595, 1.442695
    %v3623 = vpow.pop %v3622
    %v3624 = vmul.f32 %v3596, 1.442695
    %v3625 = vpow.pop %v3624
    %v3626 = vmul.f32 %v3597, 1.442695
    %v3627 = vpow.pop %v3626
    %v3628 = vmul.f32 %v3598, 1.442695
    %v3629 = vpow.pop %v3628
    %v3630 = vmul.f32 %v3599, 1.442695
    %v3631 = vpow.pop %v3630
    %v3632 = vadd.f32 %v3601, %v3603
    %v3633 = vadd.f32 %v3632, %v3605
    %v3634 = vadd.f32 %v3633, %v3607
    %v3635 = vadd.f32 %v3634, %v3609
    %v3636 = vadd.f32 %v3635, %v3611
    %v3637 = vadd.f32 %v3636, %v3613
    %v3638 = vadd.f32 %v3637, %v3615
    %v3639 = vadd.f32 %v3638, %v3617
    %v3640 = vadd.f32 %v3639, %v3619
    %v3641 = vadd.f32 %v3640, %v3621
    %v3642 = vadd.f32 %v3641, %v3623
    %v3643 = vadd.f32 %v3642, %v3625
    %v3644 = vadd.f32 %v3643, %v3627
    %v3645 = vadd.f32 %v3644, %v3629
    %v3646 = vadd.f32 %v3645, %v3631
    %v3647 = vrot.slane %v3646, 4
    %v3648 = vadd.f32 %v3646, %v3647
    %v3649 = vrot.slane %v3648, 2
    %v3650 = vadd.f32 %v3648, %v3649
    %v3651 = vrot.slane %v3650, 1
    %v3652 = vadd.f32 %v3650, %v3651
    %v3653 = vlog2.pop %v3652
    %v3654 = vmul.f32 %v3653, 0.6931472
    %v3655 = vsub.f32 %v3584, %v3654
    %v3656 = vsub.f32 %v3585, %v3654
    %v3657 = vsub.f32 %v3586, %v3654
    %v3658 = vsub.f32 %v3587, %v3654
    %v3659 = vsub.f32 %v3588, %v3654
    %v3660 = vsub.f32 %v3589, %v3654
    %v3661 = vsub.f32 %v3590, %v3654
    %v3662 = vsub.f32 %v3591, %v3654
    %v3663 = vsub.f32 %v3592, %v3654
    %v3664 = vsub.f32 %v3593, %v3654
    %v3665 = vsub.f32 %v3594, %v3654
    %v3666 = vsub.f32 %v3595, %v3654
    %v3667 = vsub.f32 %v3596, %v3654
    %v3668 = vsub.f32 %v3597, %v3654
    %v3669 = vsub.f32 %v3598, %v3654
    %v3670 = vsub.f32 %v3599, %v3654
    %v3671 = vmul.f32 %v3655, 1.442695
    %v3672 = vpow.pop %v3671
    %v3673 = vmul.f32 %v3656, 1.442695
    %v3674 = vpow.pop %v3673
    %v3675 = vmul.f32 %v3657, 1.442695
    %v3676 = vpow.pop %v3675
    %v3677 = vmul.f32 %v3658, 1.442695
    %v3678 = vpow.pop %v3677
    %v3679 = vmul.f32 %v3659, 1.442695
    %v3680 = vpow.pop %v3679
    %v3681 = vmul.f32 %v3660, 1.442695
    %v3682 = vpow.pop %v3681
    %v3683 = vmul.f32 %v3661, 1.442695
    %v3684 = vpow.pop %v3683
    %v3685 = vmul.f32 %v3662, 1.442695
    %v3686 = vpow.pop %v3685
    %v3687 = vmul.f32 %v3663, 1.442695
    %v3688 = vpow.pop %v3687
    %v3689 = vmul.f32 %v3664, 1.442695
    %v3690 = vpow.pop %v3689
    %v3691 = vmul.f32 %v3665, 1.442695
    %v3692 = vpow.pop %v3691
    %v3693 = vmul.f32 %v3666, 1.442695
    %v3694 = vpow.pop %v3693
    %v3695 = vmul.f32 %v3667, 1.442695
    %v3696 = vpow.pop %v3695
    %v3697 = vmul.f32 %v3668, 1.442695
    %v3698 = vpow.pop %v3697
    %v3699 = vmul.f32 %v3669, 1.442695
    %v3700 = vpow.pop %v3699
    %v3701 = vmul.f32 %v3670, 1.442695
    %v3702 = vpow.pop %v3701
    %3703 = vadd.xlane.f32.xlu0 %v3672
    %v3704 = vpop.xlane.xlu0 %3703
    %3705 = vadd.xlane.f32.xlu0 %v3674
    %v3706 = vpop.xlane.xlu0 %3705
    %3707 = vadd.xlane.f32.xlu0 %v3676
    %v3708 = vpop.xlane.xlu0 %3707
    %3709 = vadd.xlane.f32.xlu0 %v3678
    %v3710 = vpop.xlane.xlu0 %3709
    %3711 = vadd.xlane.f32.xlu0 %v3680
    %v3712 = vpop.xlane.xlu0 %3711
    %3713 = vadd.xlane.f32.xlu0 %v3682
    %v3714 = vpop.xlane.xlu0 %3713
    %3715 = vadd.xlane.f32.xlu0 %v3684
    %v3716 = vpop.xlane.xlu0 %3715
    %3717 = vadd.xlane.f32.xlu0 %v3686
    %v3718 = vpop.xlane.xlu0 %3717
    %3719 = vadd.xlane.f32.xlu0 %v3688
    %v3720 = vpop.xlane.xlu0 %3719
    %3721 = vadd.xlane.f32.xlu0 %v3690
    %v3722 = vpop.xlane.xlu0 %3721
    %3723 = vadd.xlane.f32.xlu0 %v3692
    %v3724 = vpop.xlane.xlu0 %3723
    %3725 = vadd.xlane.f32.xlu0 %v3694
    %v3726 = vpop.xlane.xlu0 %3725
    %3727 = vadd.xlane.f32.xlu0 %v3696
    %v3728 = vpop.xlane.xlu0 %3727
    %3729 = vadd.xlane.f32.xlu0 %v3698
    %v3730 = vpop.xlane.xlu0 %3729
    %3731 = vadd.xlane.f32.xlu0 %v3700
    %v3732 = vpop.xlane.xlu0 %3731
    %3733 = vadd.xlane.f32.xlu0 %v3702
    %v3734 = vpop.xlane.xlu0 %3733
    %v3735 = vrcp.pop %v3704
    %v3736 = vrcp.pop %v3706
    %v3737 = vrcp.pop %v3708
    %v3738 = vrcp.pop %v3710
    %v3739 = vrcp.pop %v3712
    %v3740 = vrcp.pop %v3714
    %v3741 = vrcp.pop %v3716
    %v3742 = vrcp.pop %v3718
    %v3743 = vrcp.pop %v3720
    %v3744 = vrcp.pop %v3722
    %v3745 = vrcp.pop %v3724
    %v3746 = vrcp.pop %v3726
    %v3747 = vrcp.pop %v3728
    %v3748 = vrcp.pop %v3730
    %v3749 = vrcp.pop %v3732
    %v3750 = vrcp.pop %v3734
    %v3751 = vmul.f32 %v3672, %v3735
    %v3752 = vmul.f32 %v3674, %v3736
    %v3753 = vmul.f32 %v3676, %v3737
    %v3754 = vmul.f32 %v3678, %v3738
    %v3755 = vmul.f32 %v3680, %v3739
    %v3756 = vmul.f32 %v3682, %v3740
    %v3757 = vmul.f32 %v3684, %v3741
    %v3758 = vmul.f32 %v3686, %v3742
    %v3759 = vmul.f32 %v3688, %v3743
    %v3760 = vmul.f32 %v3690, %v3744
    %v3761 = vmul.f32 %v3692, %v3745
    %v3762 = vmul.f32 %v3694, %v3746
    %v3763 = vmul.f32 %v3696, %v3747
    %v3764 = vmul.f32 %v3698, %v3748
    %v3765 = vmul.f32 %v3700, %v3749
    %v3766 = vmul.f32 %v3702, %v3750
    %3767 = vst [vmem:[#allocation8] sm:$0xff] %v3751
    %3768 = vst [vmem:[#allocation8 + $0x8] sm:$0xff] %v3752
    %3769 = vst [vmem:[#allocation8 + $0x10] sm:$0xff] %v3753
    %3770 = vst [vmem:[#allocation8 + $0x18] sm:$0xff] %v3754
    %3771 = vst [vmem:[#allocation8 + $0x20] sm:$0xff] %v3755
    %3772 = vst [vmem:[#allocation8 + $0x28] sm:$0xff] %v3756
    %3773 = vst [vmem:[#allocation8 + $0x30] sm:$0xff] %v3757
    %3774 = vst [vmem:[#allocation8 + $0x38] sm:$0xff] %v3758
    %3775 = vst [vmem:[#allocation8 + $0x40] sm:$0xff] %v3759
    %3776 = vst [vmem:[#allocation8 + $0x48] sm:$0xff] %v3760
    %3777 = vst [vmem:[#allocation8 + $0x50] sm:$0xff] %v3761
    %3778 = vst [vmem:[#allocation8 + $0x58] sm:$0xff] %v3762
    %3779 = vst [vmem:[#allocation8 + $0x60] sm:$0xff] %v3763
    %3780 = vst [vmem:[#allocation8 + $0x68] sm:$0xff] %v3764
    %3781 = vst [vmem:[#allocation8 + $0x70] sm:$0xff] %v3765
    %3782 = vst [vmem:[#allocation8 + $0x78] sm:$0xff] %v3766
    %3783 = vxpose.xlu0.b32.start [1/16] %v3751, 128
    %3784 = vxpose.xlu0.b32.cont [2/16] %v3752, 128
    %3785 = vxpose.xlu0.b32.cont [3/16] %v3753, 128
    %3786 = vxpose.xlu0.b32.cont [4/16] %v3754, 128
    %3787 = vxpose.xlu0.b32.cont [5/16] %v3755, 128
    %3788 = vxpose.xlu0.b32.cont [6/16] %v3756, 128
    %3789 = vxpose.xlu0.b32.cont [7/16] %v3757, 128
    %3790 = vxpose.xlu0.b32.cont [8/16] %v3758, 128
    %3791 = vxpose.xlu0.b32.cont [9/16] %v3759, 128
    %3792 = vxpose.xlu0.b32.cont [10/16] %v3760, 128
    %3793 = vxpose.xlu0.b32.cont [11/16] %v3761, 128
    %3794 = vxpose.xlu0.b32.cont [12/16] %v3762, 128
    %3795 = vxpose.xlu0.b32.cont [13/16] %v3763, 128
    %3796 = vxpose.xlu0.b32.cont [14/16] %v3764, 128
    %3797 = vxpose.xlu0.b32.cont [15/16] %v3765, 128
    %3798 = vxpose.xlu0.b32.end [16/16] %v3766, 128
    %v3799 = vpop.trf.xlu0
    %v3800 = vpop.trf.xlu0
    %v3801 = vpop.trf.xlu0
    %v3802 = vpop.trf.xlu0
    %v3803 = vpop.trf.xlu0
    %v3804 = vpop.trf.xlu0
    %v3805 = vpop.trf.xlu0
    %v3806 = vpop.trf.xlu0
    %v3807 = vpop.trf.xlu0
    %v3808 = vpop.trf.xlu0
    %v3809 = vpop.trf.xlu0
    %v3810 = vpop.trf.xlu0
    %v3811 = vpop.trf.xlu0
    %v3812 = vpop.trf.xlu0
    %v3813 = vpop.trf.xlu0
    %v3814 = vpop.trf.xlu0
    %v3815 = vld [vmem:[%s5] sm:$0xf]
    %v3816 = vpack.c.bf16 %v3815, %v3815
    %v3817 = vld [vmem:[#allocation5] sm:$0xff]
    %v3818 = vld [vmem:[#allocation5 + $0x8] sm:$0xff]
    %v3819 = vpack.c.bf16 %v3818, %v3817
    %v3820 = vld [vmem:[#allocation7] sm:$0xff]
    %v3821 = vld [vmem:[#allocation7 + $0x8] sm:$0xff]
    %v3822 = vld [vmem:[#allocation7 + $0x10] sm:$0xff]
    %v3823 = vld [vmem:[#allocation7 + $0x18] sm:$0xff]
    %v3824 = vld [vmem:[#allocation7 + $0x20] sm:$0xff]
    %v3825 = vld [vmem:[#allocation7 + $0x28] sm:$0xff]
    %v3826 = vld [vmem:[#allocation7 + $0x30] sm:$0xff]
    %v3827 = vld [vmem:[#allocation7 + $0x38] sm:$0xff]
    %v3828 = vld [vmem:[#allocation7 + $0x40] sm:$0xff]
    %v3829 = vld [vmem:[#allocation7 + $0x48] sm:$0xff]
    %v3830 = vld [vmem:[#allocation7 + $0x50] sm:$0xff]
    %v3831 = vld [vmem:[#allocation7 + $0x58] sm:$0xff]
    %v3832 = vld [vmem:[#allocation7 + $0x60] sm:$0xff]
    %v3833 = vld [vmem:[#allocation7 + $0x68] sm:$0xff]
    %v3834 = vld [vmem:[#allocation7 + $0x70] sm:$0xff]
    %v3835 = vld [vmem:[#allocation7 + $0x78] sm:$0xff]
    %v3836 = vpack.c.bf16 %v3821, %v3820
    %v3837 = vpack.c.bf16 %v3823, %v3822
    %v3838 = vpack.c.bf16 %v3825, %v3824
    %v3839 = vpack.c.bf16 %v3827, %v3826
    %v3840 = vpack.c.bf16 %v3829, %v3828
    %v3841 = vpack.c.bf16 %v3831, %v3830
    %v3842 = vpack.c.bf16 %v3833, %v3832
    %v3843 = vpack.c.bf16 %v3835, %v3834
    %v3844 = vld [vmem:[%s2] sm:$0x1]
    %v3845 = vld [vmem:[%s4] sm:$0x1]
    %v3846 = vpack.c.bf16 %v3752, %v3751
    %v3847 = vpack.c.bf16 %v3754, %v3753
    %v3848 = vpack.c.bf16 %v3756, %v3755
    %v3849 = vpack.c.bf16 %v3758, %v3757
    %v3850 = vpack.c.bf16 %v3760, %v3759
    %v3851 = vpack.c.bf16 %v3762, %v3761
    %v3852 = vpack.c.bf16 %v3764, %v3763
    %v3853 = vpack.c.bf16 %v3766, %v3765
    %v3854 = vpack.c.bf16 %v3800, %v3799
    %v3855 = vpack.c.bf16 %v3802, %v3801
    %v3856 = vpack.c.bf16 %v3804, %v3803
    %v3857 = vpack.c.bf16 %v3806, %v3805
    %v3858 = vpack.c.bf16 %v3808, %v3807
    %v3859 = vpack.c.bf16 %v3810, %v3809
    %v3860 = vpack.c.bf16 %v3812, %v3811
    %v3861 = vpack.c.bf16 %v3814, %v3813
    %v3863 = vlaneseq
    %v3864 = vshrl.u32 %v3863, 7
    %v3865 = vsub.s32 0, %v3864
    %v3866 = vrot.slane %v3844, %v3865
    %vm3868 = vcmask 130048
    %v3870 = vsel %vm3868, %v3816, 0
    %3872 = vmatprep.subr.bf16.mxu0 0
    %3873 = vmatpush1.bf16.msra.mxu0 0
    %3874 = vmatprep.subr.bf16.mxu0 0
    %3875 = vmatpush1.bf16.msra.mxu0 0
    %3876 = vmatprep.subr.bf16.mxu0 0
    %3877 = vmatpush1.bf16.msra.mxu0 0
    %3878 = vmatprep.subr.bf16.mxu0 0
    %3879 = vmatpush1.bf16.msra.mxu0 0
    %3880 = vmatprep.subr.bf16.mxu0 0
    %3881 = vmatpush1.bf16.msra.mxu0 0
    %3882 = vmatprep.subr.bf16.mxu0 0
    %3883 = vmatpush1.bf16.msra.mxu0 0
    %3884 = vmatprep.subr.bf16.mxu0 0
    %3885 = vmatpush1.bf16.msra.mxu0 0
    %3886 = vmatprep.subr.bf16.mxu0 0
    %3887 = vmatpush1.bf16.msra.mxu0 %v3819
    %3888 = vmatprep.subr.bf16.mxu0 0
    %3889 = vmatpush2.bf16.msra.mxu0 0
    %3890 = vmatprep.subr.bf16.mxu0 0
    %3891 = vmatpush2.bf16.msra.mxu0 0
    %3892 = vmatprep.subr.bf16.mxu0 0
    %3893 = vmatpush2.bf16.msra.mxu0 0
    %3894 = vmatprep.subr.bf16.mxu0 0
    %3895 = vmatpush2.bf16.msra.mxu0 0
    %3896 = vmatprep.subr.bf16.mxu0 0
    %3897 = vmatpush2.bf16.msra.mxu0 0
    %3898 = vmatprep.subr.bf16.mxu0 0
    %3899 = vmatpush2.bf16.msra.mxu0 0
    %3900 = vmatprep.subr.bf16.mxu0 0
    %3901 = vmatpush2.bf16.msra.mxu0 0
    %3902 = vmatprep.subr.bf16.mxu0 0
    %3903 = vmatpush2.bf16.msra.mxu0 0
    %3904 = vmatprep.mubr.bf16.mxu0 0
    %3905 = vmatmul.mubr.bf16.gmra.mxu0 %v3870
    %v3906 = vpop.f32.mrf.mxu0
    %v3907 = vadd.f32 %v3866, %v3906
    %v3908 = vpop.f32.mrf.mxu0
    %v3909 = vpop.f32.mrf.mxu0
    %v3910 = vpop.f32.mrf.mxu0
    %3911 = vdwg.mxu0
    %v3912 = vpack.c.bf16 %v3907, %v3907
    %3913 = vmatprep.subr.bf16.mxu0 0
    %3914 = vmatpush1.bf16.msra.mxu0 %v3861
    %3915 = vmatprep.subr.bf16.mxu0 0
    %3916 = vmatpush1.bf16.msra.mxu0 %v3860
    %3917 = vmatprep.subr.bf16.mxu0 0
    %3918 = vmatpush1.bf16.msra.mxu0 %v3859
    %3919 = vmatprep.subr.bf16.mxu0 0
    %3920 = vmatpush1.bf16.msra.mxu0 %v3858
    %3921 = vmatprep.subr.bf16.mxu0 0
    %3922 = vmatpush1.bf16.msra.mxu0 %v3857
    %3923 = vmatprep.subr.bf16.mxu0 0
    %3924 = vmatpush1.bf16.msra.mxu0 %v3856
    %3925 = vmatprep.subr.bf16.mxu0 0
    %3926 = vmatpush1.bf16.msra.mxu0 %v3855
    %3927 = vmatprep.subr.bf16.mxu0 0
    %3928 = vmatpush1.bf16.msra.mxu0 %v3854
    %3929 = vmatprep.subr.bf16.mxu0 0
    %3930 = vmatpush2.bf16.msra.mxu0 0
    %3931 = vmatprep.subr.bf16.mxu0 0
    %3932 = vmatpush2.bf16.msra.mxu0 0
    %3933 = vmatprep.subr.bf16.mxu0 0
    %3934 = vmatpush2.bf16.msra.mxu0 0
    %3935 = vmatprep.subr.bf16.mxu0 0
    %3936 = vmatpush2.bf16.msra.mxu0 0
    %3937 = vmatprep.subr.bf16.mxu0 0
    %3938 = vmatpush2.bf16.msra.mxu0 0
    %3939 = vmatprep.subr.bf16.mxu0 0
    %3940 = vmatpush2.bf16.msra.mxu0 0
    %3941 = vmatprep.subr.bf16.mxu0 0
    %3942 = vmatpush2.bf16.msra.mxu0 0
    %3943 = vmatprep.subr.bf16.mxu0 0
    %3944 = vmatpush2.bf16.msra.mxu0 0
    %3945 = vmatprep.mubr.bf16.mxu0 0
    %3946 = vmatmul.mubr.bf16.gmra.mxu0 %v3912
    %v3947 = vpop.f32.mrf.mxu0
    %v3948 = vadd.f32 0.0, %v3947
    %v3949 = vpop.f32.mrf.mxu0
    %v3950 = vpop.f32.mrf.mxu0
    %v3951 = vpop.f32.mrf.mxu0
    %3952 = vdwg.mxu0
    %v3953 = vmax.f32 %v3948, 0.0
    %v3954 = vpack.c.bf16 %v3953, %v3953
    %3955 = vmatprep.subr.bf16.mxu0 0
    %3956 = vmatpush1.bf16.msra.mxu0 %v3853
    %3957 = vmatprep.subr.bf16.mxu0 0
    %3958 = vmatpush1.bf16.msra.mxu0 %v3852
    %3959 = vmatprep.subr.bf16.mxu0 0
    %3960 = vmatpush1.bf16.msra.mxu0 %v3851
    %3961 = vmatprep.subr.bf16.mxu0 0
    %3962 = vmatpush1.bf16.msra.mxu0 %v3850
    %3963 = vmatprep.subr.bf16.mxu0 0
    %3964 = vmatpush1.bf16.msra.mxu0 %v3849
    %3965 = vmatprep.subr.bf16.mxu0 0
    %3966 = vmatpush1.bf16.msra.mxu0 %v3848
    %3967 = vmatprep.subr.bf16.mxu0 0
    %3968 = vmatpush1.bf16.msra.mxu0 %v3847
    %3969 = vmatprep.subr.bf16.mxu0 0
    %3970 = vmatpush1.bf16.msra.mxu0 %v3846
    %3971 = vmatprep.subr.bf16.mxu0 0
    %3972 = vmatpush2.bf16.msra.mxu0 0
    %3973 = vmatprep.subr.bf16.mxu0 0
    %3974 = vmatpush2.bf16.msra.mxu0 0
    %3975 = vmatprep.subr.bf16.mxu0 0
    %3976 = vmatpush2.bf16.msra.mxu0 0
    %3977 = vmatprep.subr.bf16.mxu0 0
    %3978 = vmatpush2.bf16.msra.mxu0 0
    %3979 = vmatprep.subr.bf16.mxu0 0
    %3980 = vmatpush2.bf16.msra.mxu0 0
    %3981 = vmatprep.subr.bf16.mxu0 0
    %3982 = vmatpush2.bf16.msra.mxu0 0
    %3983 = vmatprep.subr.bf16.mxu0 0
    %3984 = vmatpush2.bf16.msra.mxu0 0
    %3985 = vmatprep.subr.bf16.mxu0 0
    %3986 = vmatpush2.bf16.msra.mxu0 0
    %3987 = vmatprep.mubr.bf16.mxu0 0
    %3988 = vmatmul.mubr.bf16.gmra.mxu0 %v3954
    %v3989 = vpop.f32.mrf.mxu0
    %v3990 = vadd.f32 0.0, %v3989
    %v3991 = vpop.f32.mrf.mxu0
    %v3992 = vpop.f32.mrf.mxu0
    %v3993 = vpop.f32.mrf.mxu0
    %3994 = vdwg.mxu0
    %v3995 = vpack.c.bf16 %v3990, %v3990
    %v3997 = vlaneseq
    %v3998 = vshrl.u32 %v3997, 7
    %v3999 = vsub.s32 0, %v3998
    %v4000 = vrot.slane %v3845, %v3999
    %4002 = vmatprep.subr.bf16.mxu0 0
    %4003 = vmatpush1.bf16.msra.mxu0 %v3843
    %4004 = vmatprep.subr.bf16.mxu0 0
    %4005 = vmatpush1.bf16.msra.mxu0 %v3842
    %4006 = vmatprep.subr.bf16.mxu0 0
    %4007 = vmatpush1.bf16.msra.mxu0 %v3841
    %4008 = vmatprep.subr.bf16.mxu0 0
    %4009 = vmatpush1.bf16.msra.mxu0 %v3840
    %4010 = vmatprep.subr.bf16.mxu0 0
    %4011 = vmatpush1.bf16.msra.mxu0 %v3839
    %4012 = vmatprep.subr.bf16.mxu0 0
    %4013 = vmatpush1.bf16.msra.mxu0 %v3838
    %4014 = vmatprep.subr.bf16.mxu0 0
    %4015 = vmatpush1.bf16.msra.mxu0 %v3837
    %4016 = vmatprep.subr.bf16.mxu0 0
    %4017 = vmatpush1.bf16.msra.mxu0 %v3836
    %4018 = vmatprep.subr.bf16.mxu0 0
    %4019 = vmatpush2.bf16.msra.mxu0 0
    %4020 = vmatprep.subr.bf16.mxu0 0
    %4021 = vmatpush2.bf16.msra.mxu0 0
    %4022 = vmatprep.subr.bf16.mxu0 0
    %4023 = vmatpush2.bf16.msra.mxu0 0
    %4024 = vmatprep.subr.bf16.mxu0 0
    %4025 = vmatpush2.bf16.msra.mxu0 0
    %4026 = vmatprep.subr.bf16.mxu0 0
    %4027 = vmatpush2.bf16.msra.mxu0 0
    %4028 = vmatprep.subr.bf16.mxu0 0
    %4029 = vmatpush2.bf16.msra.mxu0 0
    %4030 = vmatprep.subr.bf16.mxu0 0
    %4031 = vmatpush2.bf16.msra.mxu0 0
    %4032 = vmatprep.subr.bf16.mxu0 0
    %4033 = vmatpush2.bf16.msra.mxu0 0
    %4034 = vmatprep.mubr.bf16.mxu0 0
    %4035 = vmatmul.mubr.bf16.gmra.mxu0 %v3995
    %v4036 = vpop.f32.mrf.mxu0
    %v4037 = vadd.f32 %v4000, %v4036
    %v4038 = vpop.f32.mrf.mxu0
    %v4039 = vpop.f32.mrf.mxu0
    %v4040 = vpop.f32.mrf.mxu0
    %4041 = vdwg.mxu0
    %4042 = vst [vmem:[#allocation9] sm:$0xf] %v4037
    // Predicated region
    $region38: #{tpu_custom_call.1} parent=1 // pred_check
      _
    $region39: #{tpu_custom_call.1} parent=1 // pred_check_branch
      %4044 = sbr.rel (0) target = $region41
    $region40: #{tpu_custom_call.1} parent=1 // pred_region
      %s4046 = ssub.s32 2048, 2048
      %4047 = vsyncadd [#allocation4], %s4046
      %s4048 = sshll.u32 [#allocation8], 4
      %s4049 = int_to_ptr.vmem [resolvable:$true] %s4048
      %4054 = dma.vmem_to_hbm [thread:$0]  %s4049, 2048, %s6, [#allocation4], 128, 128, 8
    $region41: #{tpu_custom_call.1} parent=1 // pred_fallthru
      _
    // Predicated region
    $region42: #{tpu_custom_call.1} parent=1 // pred_check
      _
    $region43: #{tpu_custom_call.1} parent=1 // pred_check_branch
      %4056 = sbr.rel (0) target = $region45
    $region44: #{tpu_custom_call.1} parent=1 // pred_region
      %s4058 = ssub.s32 64, 64
      %4059 = vsyncadd [#allocation10], %s4058
      %s4061 = sshll.u32 [#allocation9], 4
      %s4062 = int_to_ptr.vmem [resolvable:$true] %s4061
      %4064 = dma.vmem_to_hbm [thread:$0]  %s4062, 64, %s7, [#allocation10]
    $region45: #{tpu_custom_call.1} parent=1 // pred_fallthru
      _
    // Predicated region
    $region46: #{tpu_custom_call.1} parent=1 // pred_check
      _
    $region47: #{tpu_custom_call.1} parent=1 // pred_check_branch
      %4066 = sbr.rel (0) target = $region49
    $region48: #{tpu_custom_call.1} parent=1 // pred_region
      %4067 = dma.done [#allocation4], 2048
    $region49: #{tpu_custom_call.1} parent=1 // pred_fallthru
      _
    // Predicated region
    $region50: #{tpu_custom_call.1} parent=1 // pred_check
      _
    $region51: #{tpu_custom_call.1} parent=1 // pred_check_branch
      %4069 = sbr.rel (0) target = $region53
    $region52: #{tpu_custom_call.1} parent=1 // pred_region
      %4070 = dma.done [#allocation10], 64
    $region53: #{tpu_custom_call.1} parent=1 // pred_fallthru
      _
    %4071 = vsyncpa [#allocation3], 1
    %4072 = vsyncpa [#allocation6], 1
    %4073 = vsyncpa [#allocation4], 1
    %4074 = vsyncpa [#allocation10], 1

</llo_original>
